<compile_context>
chip_gen: v7x
topology: tpu7x:2x2x1
jax: 0.10.0
libtpu: 0.0.40
codegen_flags: <defaults>
</compile_context>

<pallas_src>
import functools
import math

import jax
import jax.numpy as jnp
from jax.experimental import pallas as pl
from jax.experimental.pallas import tpu as pltpu

_LN_EPS = 1e-5

PARAM_KEYS = (
    "wq", "bq", "wk", "bk", "wv", "bv",   # attention in-projections, stored (in, out)
    "wo", "bo",                           # attention out-projection
    "g2", "be2",                          # lnorm2 affine
    "w1", "b1", "w2", "b2",               # MLP
)
N_PARAMS = len(PARAM_KEYS)

# Only the matmul weight matrices are stored in bf16; biases / LayerNorm affine
# stay f32 (they are added to f32 accumulators).
_BF16_KEYS = frozenset({"wq", "wk", "wv", "wo", "w1", "w2"})


def _gelu_tanh(x):
    # tanh-approximate GELU (same formula as jax.nn.gelu(approximate=True)).
    # TODO(synk): PyTorch nn.GELU() defaults to the exact erf form; the tanh
    # approximation (max abs err ~1e-3) is used because it lowers cleanly on TPU.
    c = math.sqrt(2.0 / math.pi)
    return 0.5 * x * (1.0 + jnp.tanh(c * (x + 0.044715 * (x * x * x))))


def _layernorm(x, gamma, beta):
    mean = jnp.mean(x, axis=-1, keepdims=True)
    cen = x - mean
    var = jnp.mean(cen * cen, axis=-1, keepdims=True)
    return cen * jax.lax.rsqrt(var + _LN_EPS) * gamma + beta


def _attention(x, q, p, *, n_heads, batch, kv_len, q_len):
    """One PerceiverAttention layer on batch-flattened rows.

    x: (batch*kv_len, E) f32 key/value rows.  q: (batch*q_len, E) f32 queries.
    p: weights in bf16, biases / LN affine in f32.  Returns (batch*q_len, E) f32.
    """
    bf16, f32 = jnp.bfloat16, jnp.float32
    E = q.shape[-1]
    D = E // n_heads
    scale = 1.0 / math.sqrt(D)

    # NOTE: the PyTorch forward computes lnorm1(x) but immediately discards the
    # result (and never uses lnormq), so attention runs on the raw x / q.

    xb, qb = x.astype(bf16), q.astype(bf16)
    # Full-width projections (one MXU op each, bias added once, scale folded
    # once into the projected q — mathematically identical to scaling scores).
    qp = (jnp.dot(qb, p["wq"], preferred_element_type=f32) + p["bq"]) * scale
    kp = jnp.dot(xb, p["wk"], preferred_element_type=f32) + p["bk"]
    vp = jnp.dot(xb, p["wv"], preferred_element_type=f32) + p["bv"]

    # Gather (batch, head) groups into leading-batch operands so score and
    # context contractions are single batched dot_generals instead of a
    # per-head loop of tiny matmuls + a lane concat per head.
    def split(t, rows):
        return jnp.stack(
            [t[b * rows:(b + 1) * rows, h * D:(h + 1) * D]
             for b in range(batch) for h in range(n_heads)], axis=0)

    qh = split(qp, q_len).astype(bf16)    # (batch*H, q_len, D)
    kh = split(kp, kv_len).astype(bf16)   # (batch*H, kv_len, D)
    vh = split(vp, kv_len).astype(bf16)   # (batch*H, kv_len, D)

    s = jnp.einsum("gld,gsd->gls", qh, kh, preferred_element_type=f32)
    s = s - jnp.max(s, axis=-1, keepdims=True)
    e = jnp.exp(s)
    # Deferred softmax normalisation: unnormalised P@V, then one EUP reciprocal
    # and a narrow (g, q_len, D) multiply instead of a wide (g, q_len, S) divide.
    ctx = jnp.einsum("gls,gsd->gld", e.astype(bf16), vh, preferred_element_type=f32)
    inv = pl.reciprocal(jnp.sum(e, axis=-1, keepdims=True), approx=True)
    ctx = ctx * inv                                           # (batch*H, q_len, D)

    # Re-assemble (batch*q_len, E): heads along lanes, batches along rows.
    per_batch = []
    for b in range(batch):
        heads = [ctx[b * n_heads + h] for h in range(n_heads)]
        per_batch.append(heads[0] if n_heads == 1 else jnp.concatenate(heads, axis=-1))
    attn = per_batch[0] if batch == 1 else jnp.concatenate(per_batch, axis=0)

    attn = jnp.dot(attn.astype(bf16), p["wo"], preferred_element_type=f32) + p["bo"]
    resid = attn + q

    h1 = _layernorm(resid, p["g2"], p["be2"])
    h1 = jnp.dot(h1.astype(bf16), p["w1"], preferred_element_type=f32) + p["b1"]
    h1 = _gelu_tanh(h1)
    h2 = jnp.dot(h1.astype(bf16), p["w2"], preferred_element_type=f32) + p["b2"]
    # TODO(synk): dropout is identity here (p=0.0 / inference); training-mode
    # dropout would use pltpu.prng_seed + pltpu.prng_random_bits.
    return h2 + resid


def _perceiver_block_kernel(*refs, batch, seq_len, lat_len,
                            n_latent_layers, trnfr_heads):
    """Whole PerceiverBlock (cross-attn + latent transformer) in one invocation."""
    x_ref, l_ref = refs[0], refs[1]
    cross_refs = refs[2:2 + N_PARAMS]
    latent_refs = refs[2 + N_PARAMS:2 + 2 * N_PARAMS]
    o_ref = refs[2 + 2 * N_PARAMS]

    E = x_ref.shape[-1]
    # Fold batch into rows (leading-dim merge only; minor dim untouched).
    x = x_ref[...].reshape(batch * seq_len, E).astype(jnp.float32)
    lat = l_ref[...].reshape(batch * lat_len, E).astype(jnp.float32)

    # Cross-attention (n_heads = 1): query = latents, key/value = input rows.
    cross_p = {k: r[...] for k, r in zip(PARAM_KEYS, cross_refs)}
    lat = _attention(x, lat, cross_p, n_heads=1,
                     batch=batch, kv_len=seq_len, q_len=lat_len)

    # Latent transformer: static loop over stacked per-layer weights; the
    # latent state stays in registers/VMEM between layers (no HBM round trip).
    for i in range(n_latent_layers):
        layer_p = {k: r[i] for k, r in zip(PARAM_KEYS, latent_refs)}
        lat = _attention(lat, lat, layer_p, n_heads=trnfr_heads,
                         batch=batch, kv_len=lat_len, q_len=lat_len)

    o_ref[...] = lat.reshape(batch, lat_len, E).astype(o_ref.dtype)


def _cast_param(key, value):
    return value.astype(jnp.bfloat16 if key in _BF16_KEYS else jnp.float32)


@functools.partial(jax.jit, static_argnames=("trnfr_heads",))
def perceiver_block_forward(x_sbe, l_lbe, cross_params, latent_params, *, trnfr_heads):
    """PerceiverBlock.forward: x (S, B, E), l (L, B, E) -> (L, B, E), seq-first."""
    S, B, E = x_sbe.shape
    L = l_lbe.shape[0]
    n_latent = len(latent_params)

    # One-time layout change for the whole fused block (previously per layer):
    # batch-first so in-kernel activations are plain (rows, E) slabs.
    xb = jnp.transpose(x_sbe, (1, 0, 2))   # (B, S, E)
    lb = jnp.transpose(l_lbe, (1, 0, 2))   # (B, L, E)

    cross_flat = [_cast_param(k, cross_params[k]) for k in PARAM_KEYS]
    latent_flat = [_cast_param(k, jnp.stack([lp[k] for lp in latent_params], axis=0))
                   for k in PARAM_KEYS]

    def _whole(p):
        nd = p.ndim
        # Whole-array, grid-constant block: stays VMEM-resident.
        # TODO(synk): at production sizes use pipeline_mode=pl.Buffered(1) here —
        # constant-index weights don't need double buffering.
        return pl.BlockSpec(p.shape, lambda i, _nd=nd: (0,) * _nd)

    in_specs = ([_whole(xb), _whole(lb)]
                + [_whole(p) for p in cross_flat]
                + [_whole(p) for p in latent_flat])

    out = pl.pallas_call(
        functools.partial(_perceiver_block_kernel,
                          batch=B, seq_len=S, lat_len=L,
                          n_latent_layers=n_latent, trnfr_heads=trnfr_heads),
        out_shape=jax.ShapeDtypeStruct((B, L, E), l_lbe.dtype),
        grid=(1,),
        in_specs=in_specs,
        out_specs=pl.BlockSpec((B, L, E), lambda i: (0, 0, 0)),
        compiler_params=pltpu.CompilerParams(
            dimension_semantics=("arbitrary",),
            vmem_limit_bytes=32 * 1024 * 1024,
        ),
    )(xb, lb, *cross_flat, *latent_flat)

    return jnp.transpose(out, (1, 0, 2))   # back to (L, B, E)


# ------------------------- pure-JAX reference ------------------------------ #
def _perceiver_attention_reference(x_sbe, q_lbe, p, n_heads):
    hi = jax.lax.Precision.HIGHEST   # explicit, instead of a global config flag
    L, B, E = q_lbe.shape
    S = x_sbe.shape[0]
    D = E // n_heads
    scale = 1.0 / math.sqrt(D)
    qp = jnp.einsum("lbe,ef->lbf", q_lbe, p["wq"], precision=hi) + p["bq"][0]
    kp = jnp.einsum("sbe,ef->sbf", x_sbe, p["wk"], precision=hi) + p["bk"][0]
    vp = jnp.einsum("sbe,ef->sbf", x_sbe, p["wv"], precision=hi) + p["bv"][0]
    qh = qp.reshape(L, B, n_heads, D) * scale
    kh = kp.reshape(S, B, n_heads, D)
    vh = vp.reshape(S, B, n_heads, D)
    s = jnp.einsum("lbhd,sbhd->bhls", qh, kh, precision=hi)
    a = jax.nn.softmax(s, axis=-1)
    ctx = jnp.einsum("bhls,sbhd->lbhd", a, vh, precision=hi).reshape(L, B, E)
    attn_out = jnp.einsum("lbe,ef->lbf", ctx, p["wo"], precision=hi) + p["bo"][0]
    resid = attn_out + q_lbe
    h = _layernorm(resid, p["g2"][0], p["be2"][0])
    h = _gelu_tanh(jnp.einsum("lbe,ef->lbf", h, p["w1"], precision=hi) + p["b1"][0])
    h = jnp.einsum("lbf,fe->lbe", h, p["w2"], precision=hi) + p["b2"][0]
    return h + resid


def perceiver_block_reference(x_sbe, l_lbe, cross_params, latent_params, trnfr_heads):
    l = _perceiver_attention_reference(x_sbe, l_lbe, cross_params, 1)
    for lp in latent_params:
        l = _perceiver_attention_reference(l, l, lp, trnfr_heads)
    return l


def init_attention_params(key, embed_dim, mlp_dim):
    ks = jax.random.split(key, 12)

    def u(k, shape, fan_in):
        lim = 1.0 / math.sqrt(fan_in)
        return jax.random.uniform(k, shape, jnp.float32, -lim, lim)

    return {
        "wq": u(ks[0], (embed_dim, embed_dim), embed_dim),
        "bq": u(ks[1], (1, embed_dim), embed_dim),
        "wk": u(ks[2], (embed_dim, embed_dim), embed_dim),
        "bk": u(ks[3], (1, embed_dim), embed_dim),
        "wv": u(ks[4], (embed_dim, embed_dim), embed_dim),
        "bv": u(ks[5], (1, embed_dim), embed_dim),
        "wo": u(ks[6], (embed_dim, embed_dim), embed_dim),
        "bo": u(ks[7], (1, embed_dim), embed_dim),
        "g2": jnp.ones((1, embed_dim), jnp.float32),
        "be2": jnp.zeros((1, embed_dim), jnp.float32),
        "w1": u(ks[8], (embed_dim, mlp_dim), embed_dim),
        "b1": u(ks[9], (1, mlp_dim), embed_dim),
        "w2": u(ks[10], (mlp_dim, embed_dim), mlp_dim),
        "b2": u(ks[11], (1, embed_dim), mlp_dim),
    }


if __name__ == "__main__":
    # Small shapes consistent with the module.
    S, L, B = 16, 8, 2                 # input sequence, latent count, batch
    E = 32                             # embed_dim
    ATTN_MLP, TRNFR_MLP = 64, 64       # attn_mlp_dim, trnfr_mlp_dim
    TRNFR_HEADS, TRNFR_LAYERS = 4, 2

    key = jax.random.PRNGKey(0)
    kx, kl, kc, *klayers = jax.random.split(key, 3 + TRNFR_LAYERS)

    x = jax.random.normal(kx, (S, B, E), dtype=jnp.float32)   # input byte array
    l = jax.random.normal(kl, (L, B, E), dtype=jnp.float32)   # latents

    cross_params = init_attention_params(kc, E, ATTN_MLP)     # n_heads = 1
    latent_params = [init_attention_params(k, E, TRNFR_MLP) for k in klayers]

    out = perceiver_block_forward(x, l, cross_params, latent_params,
                                  trnfr_heads=TRNFR_HEADS)
    out = jax.block_until_ready(out)

    ref = perceiver_block_reference(x, l, cross_params, latent_params, TRNFR_HEADS)
    ref = jax.block_until_ready(ref)

    assert out.shape == (L, B, E), out.shape
    max_err = float(jnp.max(jnp.abs(out - ref)))
    # Kernel uses bf16 MXU operands (f32 accumulation) + an approximate EUP
    # reciprocal; the reference is full-f32 HIGHEST precision, so the tolerance
    # reflects bf16 operand rounding across three residual layers.
    assert jnp.allclose(out, ref, atol=2e-2, rtol=2e-2), f"mismatch, max_err={max_err}"

    print("KERNEL_OK")
</pallas_src>

<mosaic_0001>
module attributes {stable_mosaic.version = 11 : i64} {
  func.func @_perceiver_block_kernel(%arg0: i32, %arg1: memref<2x16x32xf32, #tpu.memory_space<vmem>>, %arg2: memref<2x8x32xf32, #tpu.memory_space<vmem>>, %arg3: memref<32x32xbf16, #tpu.memory_space<vmem>>, %arg4: memref<1x32xf32, #tpu.memory_space<vmem>>, %arg5: memref<32x32xbf16, #tpu.memory_space<vmem>>, %arg6: memref<1x32xf32, #tpu.memory_space<vmem>>, %arg7: memref<32x32xbf16, #tpu.memory_space<vmem>>, %arg8: memref<1x32xf32, #tpu.memory_space<vmem>>, %arg9: memref<32x32xbf16, #tpu.memory_space<vmem>>, %arg10: memref<1x32xf32, #tpu.memory_space<vmem>>, %arg11: memref<1x32xf32, #tpu.memory_space<vmem>>, %arg12: memref<1x32xf32, #tpu.memory_space<vmem>>, %arg13: memref<32x64xbf16, #tpu.memory_space<vmem>>, %arg14: memref<1x64xf32, #tpu.memory_space<vmem>>, %arg15: memref<64x32xbf16, #tpu.memory_space<vmem>>, %arg16: memref<1x32xf32, #tpu.memory_space<vmem>>, %arg17: memref<2x32x32xbf16, #tpu.memory_space<vmem>>, %arg18: memref<2x1x32xf32, #tpu.memory_space<vmem>>, %arg19: memref<2x32x32xbf16, #tpu.memory_space<vmem>>, %arg20: memref<2x1x32xf32, #tpu.memory_space<vmem>>, %arg21: memref<2x32x32xbf16, #tpu.memory_space<vmem>>, %arg22: memref<2x1x32xf32, #tpu.memory_space<vmem>>, %arg23: memref<2x32x32xbf16, #tpu.memory_space<vmem>>, %arg24: memref<2x1x32xf32, #tpu.memory_space<vmem>>, %arg25: memref<2x1x32xf32, #tpu.memory_space<vmem>>, %arg26: memref<2x1x32xf32, #tpu.memory_space<vmem>>, %arg27: memref<2x32x64xbf16, #tpu.memory_space<vmem>>, %arg28: memref<2x1x64xf32, #tpu.memory_space<vmem>>, %arg29: memref<2x64x32xbf16, #tpu.memory_space<vmem>>, %arg30: memref<2x1x32xf32, #tpu.memory_space<vmem>>, %arg31: memref<2x8x32xf32, #tpu.memory_space<vmem>>) attributes {dimension_semantics = [#tpu.dimension_semantics<arbitrary>], iteration_bounds = array<i64: 1>, scalar_prefetch = 0 : i64, scratch_operands = 0 : i64, tpu.core_type = #tpu.core_type<tc>, window_params = [{pipeline_mode = #tpu.pipeline_mode<synchronous>, transform_indices = @transform_0, window_bounds = array<i64: 2, 16, 32>}, {pipeline_mode = #tpu.pipeline_mode<synchronous>, transform_indices = @transform_1, window_bounds = array<i64: 2, 8, 32>}, {pipeline_mode = #tpu.pipeline_mode<synchronous>, transform_indices = @transform_2, window_bounds = array<i64: 32, 32>}, {pipeline_mode = #tpu.pipeline_mode<synchronous>, transform_indices = @transform_3, window_bounds = array<i64: 1, 32>}, {pipeline_mode = #tpu.pipeline_mode<synchronous>, transform_indices = @transform_4, window_bounds = array<i64: 32, 32>}, {pipeline_mode = #tpu.pipeline_mode<synchronous>, transform_indices = @transform_5, window_bounds = array<i64: 1, 32>}, {pipeline_mode = #tpu.pipeline_mode<synchronous>, transform_indices = @transform_6, window_bounds = array<i64: 32, 32>}, {pipeline_mode = #tpu.pipeline_mode<synchronous>, transform_indices = @transform_7, window_bounds = array<i64: 1, 32>}, {pipeline_mode = #tpu.pipeline_mode<synchronous>, transform_indices = @transform_8, window_bounds = array<i64: 32, 32>}, {pipeline_mode = #tpu.pipeline_mode<synchronous>, transform_indices = @transform_9, window_bounds = array<i64: 1, 32>}, {pipeline_mode = #tpu.pipeline_mode<synchronous>, transform_indices = @transform_10, window_bounds = array<i64: 1, 32>}, {pipeline_mode = #tpu.pipeline_mode<synchronous>, transform_indices = @transform_11, window_bounds = array<i64: 1, 32>}, {pipeline_mode = #tpu.pipeline_mode<synchronous>, transform_indices = @transform_12, window_bounds = array<i64: 32, 64>}, {pipeline_mode = #tpu.pipeline_mode<synchronous>, transform_indices = @transform_13, window_bounds = array<i64: 1, 64>}, {pipeline_mode = #tpu.pipeline_mode<synchronous>, transform_indices = @transform_14, window_bounds = array<i64: 64, 32>}, {pipeline_mode = #tpu.pipeline_mode<synchronous>, transform_indices = @transform_15, window_bounds = array<i64: 1, 32>}, {pipeline_mode = #tpu.pipeline_mode<synchronous>, transform_indices = @transform_16, window_bounds = array<i64: 2, 32, 32>}, {pipeline_mode = #tpu.pipeline_mode<synchronous>, transform_indices = @transform_17, window_bounds = array<i64: 2, 1, 32>}, {pipeline_mode = #tpu.pipeline_mode<synchronous>, transform_indices = @transform_18, window_bounds = array<i64: 2, 32, 32>}, {pipeline_mode = #tpu.pipeline_mode<synchronous>, transform_indices = @transform_19, window_bounds = array<i64: 2, 1, 32>}, {pipeline_mode = #tpu.pipeline_mode<synchronous>, transform_indices = @transform_20, window_bounds = array<i64: 2, 32, 32>}, {pipeline_mode = #tpu.pipeline_mode<synchronous>, transform_indices = @transform_21, window_bounds = array<i64: 2, 1, 32>}, {pipeline_mode = #tpu.pipeline_mode<synchronous>, transform_indices = @transform_22, window_bounds = array<i64: 2, 32, 32>}, {pipeline_mode = #tpu.pipeline_mode<synchronous>, transform_indices = @transform_23, window_bounds = array<i64: 2, 1, 32>}, {pipeline_mode = #tpu.pipeline_mode<synchronous>, transform_indices = @transform_24, window_bounds = array<i64: 2, 1, 32>}, {pipeline_mode = #tpu.pipeline_mode<synchronous>, transform_indices = @transform_25, window_bounds = array<i64: 2, 1, 32>}, {pipeline_mode = #tpu.pipeline_mode<synchronous>, transform_indices = @transform_26, window_bounds = array<i64: 2, 32, 64>}, {pipeline_mode = #tpu.pipeline_mode<synchronous>, transform_indices = @transform_27, window_bounds = array<i64: 2, 1, 64>}, {pipeline_mode = #tpu.pipeline_mode<synchronous>, transform_indices = @transform_28, window_bounds = array<i64: 2, 64, 32>}, {pipeline_mode = #tpu.pipeline_mode<synchronous>, transform_indices = @transform_29, window_bounds = array<i64: 2, 1, 32>}, {pipeline_mode = #tpu.pipeline_mode<synchronous>, transform_indices = @transform_30, window_bounds = array<i64: 2, 8, 32>}]} {
    %c0 = arith.constant 0 : index
    %c0_0 = arith.constant 0 : index
    %c0_1 = arith.constant 0 : index
    %0 = vector.load %arg1[%c0, %c0_0, %c0_1] : memref<2x16x32xf32, #tpu.memory_space<vmem>>, vector<2x16x32xf32>
    %1 = vector.shape_cast %0 : vector<2x16x32xf32> to vector<32x32xf32>
    %c0_2 = arith.constant 0 : index
    %c0_3 = arith.constant 0 : index
    %c0_4 = arith.constant 0 : index
    %2 = vector.load %arg2[%c0_2, %c0_3, %c0_4] : memref<2x8x32xf32, #tpu.memory_space<vmem>>, vector<2x8x32xf32>
    %3 = vector.shape_cast %2 : vector<2x8x32xf32> to vector<16x32xf32>
    %c0_5 = arith.constant 0 : index
    %c0_6 = arith.constant 0 : index
    %4 = vector.load %arg3[%c0_5, %c0_6] : memref<32x32xbf16, #tpu.memory_space<vmem>>, vector<32x32xbf16>
    %c0_7 = arith.constant 0 : index
    %c0_8 = arith.constant 0 : index
    %5 = vector.load %arg4[%c0_7, %c0_8] : memref<1x32xf32, #tpu.memory_space<vmem>>, vector<1x32xf32>
    %c0_9 = arith.constant 0 : index
    %c0_10 = arith.constant 0 : index
    %6 = vector.load %arg5[%c0_9, %c0_10] : memref<32x32xbf16, #tpu.memory_space<vmem>>, vector<32x32xbf16>
    %c0_11 = arith.constant 0 : index
    %c0_12 = arith.constant 0 : index
    %7 = vector.load %arg6[%c0_11, %c0_12] : memref<1x32xf32, #tpu.memory_space<vmem>>, vector<1x32xf32>
    %c0_13 = arith.constant 0 : index
    %c0_14 = arith.constant 0 : index
    %8 = vector.load %arg7[%c0_13, %c0_14] : memref<32x32xbf16, #tpu.memory_space<vmem>>, vector<32x32xbf16>
    %c0_15 = arith.constant 0 : index
    %c0_16 = arith.constant 0 : index
    %9 = vector.load %arg8[%c0_15, %c0_16] : memref<1x32xf32, #tpu.memory_space<vmem>>, vector<1x32xf32>
    %c0_17 = arith.constant 0 : index
    %c0_18 = arith.constant 0 : index
    %10 = vector.load %arg9[%c0_17, %c0_18] : memref<32x32xbf16, #tpu.memory_space<vmem>>, vector<32x32xbf16>
    %c0_19 = arith.constant 0 : index
    %c0_20 = arith.constant 0 : index
    %11 = vector.load %arg10[%c0_19, %c0_20] : memref<1x32xf32, #tpu.memory_space<vmem>>, vector<1x32xf32>
    %c0_21 = arith.constant 0 : index
    %c0_22 = arith.constant 0 : index
    %12 = vector.load %arg11[%c0_21, %c0_22] : memref<1x32xf32, #tpu.memory_space<vmem>>, vector<1x32xf32>
    %c0_23 = arith.constant 0 : index
    %c0_24 = arith.constant 0 : index
    %13 = vector.load %arg12[%c0_23, %c0_24] : memref<1x32xf32, #tpu.memory_space<vmem>>, vector<1x32xf32>
    %c0_25 = arith.constant 0 : index
    %c0_26 = arith.constant 0 : index
    %14 = vector.load %arg13[%c0_25, %c0_26] : memref<32x64xbf16, #tpu.memory_space<vmem>>, vector<32x64xbf16>
    %c0_27 = arith.constant 0 : index
    %c0_28 = arith.constant 0 : index
    %15 = vector.load %arg14[%c0_27, %c0_28] : memref<1x64xf32, #tpu.memory_space<vmem>>, vector<1x64xf32>
    %c0_29 = arith.constant 0 : index
    %c0_30 = arith.constant 0 : index
    %16 = vector.load %arg15[%c0_29, %c0_30] : memref<64x32xbf16, #tpu.memory_space<vmem>>, vector<64x32xbf16>
    %c0_31 = arith.constant 0 : index
    %c0_32 = arith.constant 0 : index
    %17 = vector.load %arg16[%c0_31, %c0_32] : memref<1x32xf32, #tpu.memory_space<vmem>>, vector<1x32xf32>
    %18 = arith.truncf %1 : vector<32x32xf32> to vector<32x32xbf16>
    %19 = arith.truncf %3 : vector<16x32xf32> to vector<16x32xbf16>
    %cst = arith.constant dense<0.000000e+00> : vector<16x32xf32>
    %20 = tpu.matmul %19, %4, %cst {dimension_numbers = #tpu.dot_dimension_numbers<[1], [0], [0], [1], [0, 0, 1, 1], [], []>} : vector<16x32xbf16>, vector<32x32xbf16>, vector<16x32xf32> -> vector<16x32xf32>
    %21 = vector.broadcast %5 : vector<1x32xf32> to vector<16x32xf32>
    %22 = arith.addf %20, %21 : vector<16x32xf32>
    %cst_33 = arith.constant 0.176776692 : f32
    %23 = vector.broadcast %cst_33 : f32 to vector<16x32xf32>
    %24 = arith.mulf %22, %23 : vector<16x32xf32>
    %cst_34 = arith.constant dense<0.000000e+00> : vector<32x32xf32>
    %25 = tpu.matmul %18, %6, %cst_34 {dimension_numbers = #tpu.dot_dimension_numbers<[1], [0], [0], [1], [0, 0, 1, 1], [], []>} : vector<32x32xbf16>, vector<32x32xbf16>, vector<32x32xf32> -> vector<32x32xf32>
    %26 = vector.broadcast %7 : vector<1x32xf32> to vector<32x32xf32>
    %27 = arith.addf %25, %26 : vector<32x32xf32>
    %cst_35 = arith.constant dense<0.000000e+00> : vector<32x32xf32>
    %28 = tpu.matmul %18, %8, %cst_35 {dimension_numbers = #tpu.dot_dimension_numbers<[1], [0], [0], [1], [0, 0, 1, 1], [], []>} : vector<32x32xbf16>, vector<32x32xbf16>, vector<32x32xf32> -> vector<32x32xf32>
    %29 = vector.broadcast %9 : vector<1x32xf32> to vector<32x32xf32>
    %30 = arith.addf %28, %29 : vector<32x32xf32>
    %31 = vector.extract_strided_slice %24 {offsets = [0, 0], sizes = [8, 32], strides = [1, 1]} : vector<16x32xf32> to vector<8x32xf32>
    %32 = vector.extract_strided_slice %24 {offsets = [8, 0], sizes = [8, 32], strides = [1, 1]} : vector<16x32xf32> to vector<8x32xf32>
    %33 = vector.shape_cast %31 : vector<8x32xf32> to vector<1x8x32xf32>
    %34 = vector.shape_cast %32 : vector<8x32xf32> to vector<1x8x32xf32>
    %35 = tpu.concatenate %33, %34 in 0 : vector<1x8x32xf32>, vector<1x8x32xf32> -> vector<2x8x32xf32>
    %36 = arith.truncf %35 : vector<2x8x32xf32> to vector<2x8x32xbf16>
    %37 = vector.extract_strided_slice %27 {offsets = [0, 0], sizes = [16, 32], strides = [1, 1]} : vector<32x32xf32> to vector<16x32xf32>
    %38 = vector.extract_strided_slice %27 {offsets = [16, 0], sizes = [16, 32], strides = [1, 1]} : vector<32x32xf32> to vector<16x32xf32>
    %39 = vector.shape_cast %37 : vector<16x32xf32> to vector<1x16x32xf32>
    %40 = vector.shape_cast %38 : vector<16x32xf32> to vector<1x16x32xf32>
    %41 = tpu.concatenate %39, %40 in 0 : vector<1x16x32xf32>, vector<1x16x32xf32> -> vector<2x16x32xf32>
    %42 = arith.truncf %41 : vector<2x16x32xf32> to vector<2x16x32xbf16>
    %43 = vector.extract_strided_slice %30 {offsets = [0, 0], sizes = [16, 32], strides = [1, 1]} : vector<32x32xf32> to vector<16x32xf32>
    %44 = vector.extract_strided_slice %30 {offsets = [16, 0], sizes = [16, 32], strides = [1, 1]} : vector<32x32xf32> to vector<16x32xf32>
    %45 = vector.shape_cast %43 : vector<16x32xf32> to vector<1x16x32xf32>
    %46 = vector.shape_cast %44 : vector<16x32xf32> to vector<1x16x32xf32>
    %47 = tpu.concatenate %45, %46 in 0 : vector<1x16x32xf32>, vector<1x16x32xf32> -> vector<2x16x32xf32>
    %48 = arith.truncf %47 : vector<2x16x32xf32> to vector<2x16x32xbf16>
    "tpu.trace_start"() <{level = 10 : i32, message = "gld,gsd->gls"}> : () -> ()
    %cst_36 = arith.constant dense<0.000000e+00> : vector<2x8x16xf32>
    %49 = tpu.matmul %36, %42, %cst_36 {dimension_numbers = #tpu.dot_dimension_numbers<[2], [2], [1], [1], [0, 0, 0, 1, 1, 1], [0], [0]>} : vector<2x8x32xbf16>, vector<2x16x32xbf16>, vector<2x8x16xf32> -> vector<2x8x16xf32>
    "tpu.trace_stop"() : () -> ()
    %cst_37 = arith.constant dense<0xFF800000> : vector<2x8xf32>
    %50 = vector.multi_reduction <maximumf>, %49, %cst_37 [2] : vector<2x8x16xf32> to vector<2x8xf32>
    %51 = vector.shape_cast %50 : vector<2x8xf32> to vector<2x8x1xf32>
    %52 = vector.broadcast %51 : vector<2x8x1xf32> to vector<2x8x16xf32>
    %53 = arith.subf %49, %52 : vector<2x8x16xf32>
    %54 = math.exp %53 : vector<2x8x16xf32>
    %55 = arith.truncf %54 : vector<2x8x16xf32> to vector<2x8x16xbf16>
    "tpu.trace_start"() <{level = 10 : i32, message = "gls,gsd->gld"}> : () -> ()
    %cst_38 = arith.constant dense<0.000000e+00> : vector<2x8x32xf32>
    %56 = tpu.matmul %55, %48, %cst_38 {dimension_numbers = #tpu.dot_dimension_numbers<[2], [1], [1], [2], [0, 0, 0, 1, 1, 2], [0], [0]>} : vector<2x8x16xbf16>, vector<2x16x32xbf16>, vector<2x8x32xf32> -> vector<2x8x32xf32>
    "tpu.trace_stop"() : () -> ()
    %cst_39 = arith.constant dense<0.000000e+00> : vector<2x8xf32>
    %57 = vector.multi_reduction <add>, %54, %cst_39 [2] : vector<2x8x16xf32> to vector<2x8xf32>
    %58 = vector.shape_cast %57 : vector<2x8xf32> to vector<2x8x1xf32>
    %59 = tpu.reciprocal %58 {approx = true} : vector<2x8x1xf32> -> vector<2x8x1xf32>
    %60 = vector.broadcast %59 : vector<2x8x1xf32> to vector<2x8x32xf32>
    %61 = arith.mulf %56, %60 : vector<2x8x32xf32>
    %62 = vector.extract_strided_slice %61 {offsets = [0, 0, 0], sizes = [1, 8, 32], strides = [1, 1, 1]} : vector<2x8x32xf32> to vector<1x8x32xf32>
    %63 = vector.shape_cast %62 : vector<1x8x32xf32> to vector<8x32xf32>
    %64 = vector.extract_strided_slice %61 {offsets = [1, 0, 0], sizes = [1, 8, 32], strides = [1, 1, 1]} : vector<2x8x32xf32> to vector<1x8x32xf32>
    %65 = vector.shape_cast %64 : vector<1x8x32xf32> to vector<8x32xf32>
    %66 = tpu.concatenate %63, %65 in 0 : vector<8x32xf32>, vector<8x32xf32> -> vector<16x32xf32>
    %67 = arith.truncf %66 : vector<16x32xf32> to vector<16x32xbf16>
    %cst_40 = arith.constant dense<0.000000e+00> : vector<16x32xf32>
    %68 = tpu.matmul %67, %10, %cst_40 {dimension_numbers = #tpu.dot_dimension_numbers<[1], [0], [0], [1], [0, 0, 1, 1], [], []>} : vector<16x32xbf16>, vector<32x32xbf16>, vector<16x32xf32> -> vector<16x32xf32>
    %69 = vector.broadcast %11 : vector<1x32xf32> to vector<16x32xf32>
    %70 = arith.addf %68, %69 : vector<16x32xf32>
    %71 = arith.addf %70, %3 : vector<16x32xf32>
    %cst_41 = arith.constant dense<0.000000e+00> : vector<16xf32>
    %72 = vector.multi_reduction <add>, %71, %cst_41 [1] : vector<16x32xf32> to vector<16xf32>
    %73 = vector.shape_cast %72 : vector<16xf32> to vector<16x1xf32>
    %cst_42 = arith.constant 3.200000e+01 : f32
    %74 = vector.broadcast %cst_42 : f32 to vector<16x1xf32>
    %75 = arith.divf %73, %74 : vector<16x1xf32>
    %76 = vector.broadcast %75 : vector<16x1xf32> to vector<16x32xf32>
    %77 = arith.subf %71, %76 : vector<16x32xf32>
    %78 = arith.mulf %77, %77 : vector<16x32xf32>
    %cst_43 = arith.constant dense<0.000000e+00> : vector<16xf32>
    %79 = vector.multi_reduction <add>, %78, %cst_43 [1] : vector<16x32xf32> to vector<16xf32>
    %80 = vector.shape_cast %79 : vector<16xf32> to vector<16x1xf32>
    %cst_44 = arith.constant 3.200000e+01 : f32
    %81 = vector.broadcast %cst_44 : f32 to vector<16x1xf32>
    %82 = arith.divf %80, %81 : vector<16x1xf32>
    %cst_45 = arith.constant 9.99999974E-6 : f32
    %83 = vector.broadcast %cst_45 : f32 to vector<16x1xf32>
    %84 = arith.addf %82, %83 : vector<16x1xf32>
    %85 = math.rsqrt %84 : vector<16x1xf32>
    %86 = vector.broadcast %85 : vector<16x1xf32> to vector<16x32xf32>
    %87 = arith.mulf %77, %86 : vector<16x32xf32>
    %88 = vector.broadcast %12 : vector<1x32xf32> to vector<16x32xf32>
    %89 = arith.mulf %87, %88 : vector<16x32xf32>
    %90 = vector.broadcast %13 : vector<1x32xf32> to vector<16x32xf32>
    %91 = arith.addf %89, %90 : vector<16x32xf32>
    %92 = arith.truncf %91 : vector<16x32xf32> to vector<16x32xbf16>
    %cst_46 = arith.constant dense<0.000000e+00> : vector<16x64xf32>
    %93 = tpu.matmul %92, %14, %cst_46 {dimension_numbers = #tpu.dot_dimension_numbers<[1], [0], [0], [1], [0, 0, 1, 1], [], []>} : vector<16x32xbf16>, vector<32x64xbf16>, vector<16x64xf32> -> vector<16x64xf32>
    %94 = vector.broadcast %15 : vector<1x64xf32> to vector<16x64xf32>
    %95 = arith.addf %93, %94 : vector<16x64xf32>
    %cst_47 = arith.constant 5.000000e-01 : f32
    %96 = vector.broadcast %cst_47 : f32 to vector<16x64xf32>
    %97 = arith.mulf %96, %95 : vector<16x64xf32>
    %98 = arith.mulf %95, %95 : vector<16x64xf32>
    %99 = arith.mulf %98, %95 : vector<16x64xf32>
    %cst_48 = arith.constant 4.471500e-02 : f32
    %100 = vector.broadcast %cst_48 : f32 to vector<16x64xf32>
    %101 = arith.mulf %100, %99 : vector<16x64xf32>
    %102 = arith.addf %95, %101 : vector<16x64xf32>
    %cst_49 = arith.constant 0.797884583 : f32
    %103 = vector.broadcast %cst_49 : f32 to vector<16x64xf32>
    %104 = arith.mulf %103, %102 : vector<16x64xf32>
    %105 = math.tanh %104 : vector<16x64xf32>
    %cst_50 = arith.constant 1.000000e+00 : f32
    %106 = vector.broadcast %cst_50 : f32 to vector<16x64xf32>
    %107 = arith.addf %106, %105 : vector<16x64xf32>
    %108 = arith.mulf %97, %107 : vector<16x64xf32>
    %109 = arith.truncf %108 : vector<16x64xf32> to vector<16x64xbf16>
    %cst_51 = arith.constant dense<0.000000e+00> : vector<16x32xf32>
    %110 = tpu.matmul %109, %16, %cst_51 {dimension_numbers = #tpu.dot_dimension_numbers<[1], [0], [0], [1], [0, 0, 1, 1], [], []>} : vector<16x64xbf16>, vector<64x32xbf16>, vector<16x32xf32> -> vector<16x32xf32>
    %111 = vector.broadcast %17 : vector<1x32xf32> to vector<16x32xf32>
    %112 = arith.addf %110, %111 : vector<16x32xf32>
    %113 = arith.addf %112, %71 : vector<16x32xf32>
    %c0_52 = arith.constant 0 : index
    %c0_53 = arith.constant 0 : index
    %c0_54 = arith.constant 0 : index
    %114 = vector.load %arg17[%c0_52, %c0_53, %c0_54] : memref<2x32x32xbf16, #tpu.memory_space<vmem>>, vector<1x32x32xbf16>
    %115 = vector.shape_cast %114 : vector<1x32x32xbf16> to vector<32x32xbf16>
    %c0_55 = arith.constant 0 : index
    %c0_56 = arith.constant 0 : index
    %c0_57 = arith.constant 0 : index
    %116 = vector.load %arg18[%c0_55, %c0_56, %c0_57] : memref<2x1x32xf32, #tpu.memory_space<vmem>>, vector<1x1x32xf32>
    %117 = vector.shape_cast %116 : vector<1x1x32xf32> to vector<1x32xf32>
    %c0_58 = arith.constant 0 : index
    %c0_59 = arith.constant 0 : index
    %c0_60 = arith.constant 0 : index
    %118 = vector.load %arg19[%c0_58, %c0_59, %c0_60] : memref<2x32x32xbf16, #tpu.memory_space<vmem>>, vector<1x32x32xbf16>
    %119 = vector.shape_cast %118 : vector<1x32x32xbf16> to vector<32x32xbf16>
    %c0_61 = arith.constant 0 : index
    %c0_62 = arith.constant 0 : index
    %c0_63 = arith.constant 0 : index
    %120 = vector.load %arg20[%c0_61, %c0_62, %c0_63] : memref<2x1x32xf32, #tpu.memory_space<vmem>>, vector<1x1x32xf32>
    %121 = vector.shape_cast %120 : vector<1x1x32xf32> to vector<1x32xf32>
    %c0_64 = arith.constant 0 : index
    %c0_65 = arith.constant 0 : index
    %c0_66 = arith.constant 0 : index
    %122 = vector.load %arg21[%c0_64, %c0_65, %c0_66] : memref<2x32x32xbf16, #tpu.memory_space<vmem>>, vector<1x32x32xbf16>
    %123 = vector.shape_cast %122 : vector<1x32x32xbf16> to vector<32x32xbf16>
    %c0_67 = arith.constant 0 : index
    %c0_68 = arith.constant 0 : index
    %c0_69 = arith.constant 0 : index
    %124 = vector.load %arg22[%c0_67, %c0_68, %c0_69] : memref<2x1x32xf32, #tpu.memory_space<vmem>>, vector<1x1x32xf32>
    %125 = vector.shape_cast %124 : vector<1x1x32xf32> to vector<1x32xf32>
    %c0_70 = arith.constant 0 : index
    %c0_71 = arith.constant 0 : index
    %c0_72 = arith.constant 0 : index
    %126 = vector.load %arg23[%c0_70, %c0_71, %c0_72] : memref<2x32x32xbf16, #tpu.memory_space<vmem>>, vector<1x32x32xbf16>
    %127 = vector.shape_cast %126 : vector<1x32x32xbf16> to vector<32x32xbf16>
    %c0_73 = arith.constant 0 : index
    %c0_74 = arith.constant 0 : index
    %c0_75 = arith.constant 0 : index
    %128 = vector.load %arg24[%c0_73, %c0_74, %c0_75] : memref<2x1x32xf32, #tpu.memory_space<vmem>>, vector<1x1x32xf32>
    %129 = vector.shape_cast %128 : vector<1x1x32xf32> to vector<1x32xf32>
    %c0_76 = arith.constant 0 : index
    %c0_77 = arith.constant 0 : index
    %c0_78 = arith.constant 0 : index
    %130 = vector.load %arg25[%c0_76, %c0_77, %c0_78] : memref<2x1x32xf32, #tpu.memory_space<vmem>>, vector<1x1x32xf32>
    %131 = vector.shape_cast %130 : vector<1x1x32xf32> to vector<1x32xf32>
    %c0_79 = arith.constant 0 : index
    %c0_80 = arith.constant 0 : index
    %c0_81 = arith.constant 0 : index
    %132 = vector.load %arg26[%c0_79, %c0_80, %c0_81] : memref<2x1x32xf32, #tpu.memory_space<vmem>>, vector<1x1x32xf32>
    %133 = vector.shape_cast %132 : vector<1x1x32xf32> to vector<1x32xf32>
    %c0_82 = arith.constant 0 : index
    %c0_83 = arith.constant 0 : index
    %c0_84 = arith.constant 0 : index
    %134 = vector.load %arg27[%c0_82, %c0_83, %c0_84] : memref<2x32x64xbf16, #tpu.memory_space<vmem>>, vector<1x32x64xbf16>
    %135 = vector.shape_cast %134 : vector<1x32x64xbf16> to vector<32x64xbf16>
    %c0_85 = arith.constant 0 : index
    %c0_86 = arith.constant 0 : index
    %c0_87 = arith.constant 0 : index
    %136 = vector.load %arg28[%c0_85, %c0_86, %c0_87] : memref<2x1x64xf32, #tpu.memory_space<vmem>>, vector<1x1x64xf32>
    %137 = vector.shape_cast %136 : vector<1x1x64xf32> to vector<1x64xf32>
    %c0_88 = arith.constant 0 : index
    %c0_89 = arith.constant 0 : index
    %c0_90 = arith.constant 0 : index
    %138 = vector.load %arg29[%c0_88, %c0_89, %c0_90] : memref<2x64x32xbf16, #tpu.memory_space<vmem>>, vector<1x64x32xbf16>
    %139 = vector.shape_cast %138 : vector<1x64x32xbf16> to vector<64x32xbf16>
    %c0_91 = arith.constant 0 : index
    %c0_92 = arith.constant 0 : index
    %c0_93 = arith.constant 0 : index
    %140 = vector.load %arg30[%c0_91, %c0_92, %c0_93] : memref<2x1x32xf32, #tpu.memory_space<vmem>>, vector<1x1x32xf32>
    %141 = vector.shape_cast %140 : vector<1x1x32xf32> to vector<1x32xf32>
    %142 = arith.truncf %113 : vector<16x32xf32> to vector<16x32xbf16>
    %143 = arith.truncf %113 : vector<16x32xf32> to vector<16x32xbf16>
    %cst_94 = arith.constant dense<0.000000e+00> : vector<16x32xf32>
    %144 = tpu.matmul %143, %115, %cst_94 {dimension_numbers = #tpu.dot_dimension_numbers<[1], [0], [0], [1], [0, 0, 1, 1], [], []>} : vector<16x32xbf16>, vector<32x32xbf16>, vector<16x32xf32> -> vector<16x32xf32>
    %145 = vector.broadcast %117 : vector<1x32xf32> to vector<16x32xf32>
    %146 = arith.addf %144, %145 : vector<16x32xf32>
    %cst_95 = arith.constant 0.353553385 : f32
    %147 = vector.broadcast %cst_95 : f32 to vector<16x32xf32>
    %148 = arith.mulf %146, %147 : vector<16x32xf32>
    %cst_96 = arith.constant dense<0.000000e+00> : vector<16x32xf32>
    %149 = tpu.matmul %142, %119, %cst_96 {dimension_numbers = #tpu.dot_dimension_numbers<[1], [0], [0], [1], [0, 0, 1, 1], [], []>} : vector<16x32xbf16>, vector<32x32xbf16>, vector<16x32xf32> -> vector<16x32xf32>
    %150 = vector.broadcast %121 : vector<1x32xf32> to vector<16x32xf32>
    %151 = arith.addf %149, %150 : vector<16x32xf32>
    %cst_97 = arith.constant dense<0.000000e+00> : vector<16x32xf32>
    %152 = tpu.matmul %142, %123, %cst_97 {dimension_numbers = #tpu.dot_dimension_numbers<[1], [0], [0], [1], [0, 0, 1, 1], [], []>} : vector<16x32xbf16>, vector<32x32xbf16>, vector<16x32xf32> -> vector<16x32xf32>
    %153 = vector.broadcast %125 : vector<1x32xf32> to vector<16x32xf32>
    %154 = arith.addf %152, %153 : vector<16x32xf32>
    %155 = vector.extract_strided_slice %148 {offsets = [0, 0], sizes = [8, 8], strides = [1, 1]} : vector<16x32xf32> to vector<8x8xf32>
    %156 = vector.extract_strided_slice %148 {offsets = [0, 8], sizes = [8, 8], strides = [1, 1]} : vector<16x32xf32> to vector<8x8xf32>
    %157 = vector.extract_strided_slice %148 {offsets = [0, 16], sizes = [8, 8], strides = [1, 1]} : vector<16x32xf32> to vector<8x8xf32>
    %158 = vector.extract_strided_slice %148 {offsets = [0, 24], sizes = [8, 8], strides = [1, 1]} : vector<16x32xf32> to vector<8x8xf32>
    %159 = vector.extract_strided_slice %148 {offsets = [8, 0], sizes = [8, 8], strides = [1, 1]} : vector<16x32xf32> to vector<8x8xf32>
    %160 = vector.extract_strided_slice %148 {offsets = [8, 8], sizes = [8, 8], strides = [1, 1]} : vector<16x32xf32> to vector<8x8xf32>
    %161 = vector.extract_strided_slice %148 {offsets = [8, 16], sizes = [8, 8], strides = [1, 1]} : vector<16x32xf32> to vector<8x8xf32>
    %162 = vector.extract_strided_slice %148 {offsets = [8, 24], sizes = [8, 8], strides = [1, 1]} : vector<16x32xf32> to vector<8x8xf32>
    %163 = vector.shape_cast %155 : vector<8x8xf32> to vector<1x8x8xf32>
    %164 = vector.shape_cast %156 : vector<8x8xf32> to vector<1x8x8xf32>
    %165 = vector.shape_cast %157 : vector<8x8xf32> to vector<1x8x8xf32>
    %166 = vector.shape_cast %158 : vector<8x8xf32> to vector<1x8x8xf32>
    %167 = vector.shape_cast %159 : vector<8x8xf32> to vector<1x8x8xf32>
    %168 = vector.shape_cast %160 : vector<8x8xf32> to vector<1x8x8xf32>
    %169 = vector.shape_cast %161 : vector<8x8xf32> to vector<1x8x8xf32>
    %170 = vector.shape_cast %162 : vector<8x8xf32> to vector<1x8x8xf32>
    %171 = tpu.concatenate %163, %164, %165, %166, %167, %168, %169, %170 in 0 : vector<1x8x8xf32>, vector<1x8x8xf32>, vector<1x8x8xf32>, vector<1x8x8xf32>, vector<1x8x8xf32>, vector<1x8x8xf32>, vector<1x8x8xf32>, vector<1x8x8xf32> -> vector<8x8x8xf32>
    %172 = arith.truncf %171 : vector<8x8x8xf32> to vector<8x8x8xbf16>
    %173 = vector.extract_strided_slice %151 {offsets = [0, 0], sizes = [8, 8], strides = [1, 1]} : vector<16x32xf32> to vector<8x8xf32>
    %174 = vector.extract_strided_slice %151 {offsets = [0, 8], sizes = [8, 8], strides = [1, 1]} : vector<16x32xf32> to vector<8x8xf32>
    %175 = vector.extract_strided_slice %151 {offsets = [0, 16], sizes = [8, 8], strides = [1, 1]} : vector<16x32xf32> to vector<8x8xf32>
    %176 = vector.extract_strided_slice %151 {offsets = [0, 24], sizes = [8, 8], strides = [1, 1]} : vector<16x32xf32> to vector<8x8xf32>
    %177 = vector.extract_strided_slice %151 {offsets = [8, 0], sizes = [8, 8], strides = [1, 1]} : vector<16x32xf32> to vector<8x8xf32>
    %178 = vector.extract_strided_slice %151 {offsets = [8, 8], sizes = [8, 8], strides = [1, 1]} : vector<16x32xf32> to vector<8x8xf32>
    %179 = vector.extract_strided_slice %151 {offsets = [8, 16], sizes = [8, 8], strides = [1, 1]} : vector<16x32xf32> to vector<8x8xf32>
    %180 = vector.extract_strided_slice %151 {offsets = [8, 24], sizes = [8, 8], strides = [1, 1]} : vector<16x32xf32> to vector<8x8xf32>
    %181 = vector.shape_cast %173 : vector<8x8xf32> to vector<1x8x8xf32>
    %182 = vector.shape_cast %174 : vector<8x8xf32> to vector<1x8x8xf32>
    %183 = vector.shape_cast %175 : vector<8x8xf32> to vector<1x8x8xf32>
    %184 = vector.shape_cast %176 : vector<8x8xf32> to vector<1x8x8xf32>
    %185 = vector.shape_cast %177 : vector<8x8xf32> to vector<1x8x8xf32>
    %186 = vector.shape_cast %178 : vector<8x8xf32> to vector<1x8x8xf32>
    %187 = vector.shape_cast %179 : vector<8x8xf32> to vector<1x8x8xf32>
    %188 = vector.shape_cast %180 : vector<8x8xf32> to vector<1x8x8xf32>
    %189 = tpu.concatenate %181, %182, %183, %184, %185, %186, %187, %188 in 0 : vector<1x8x8xf32>, vector<1x8x8xf32>, vector<1x8x8xf32>, vector<1x8x8xf32>, vector<1x8x8xf32>, vector<1x8x8xf32>, vector<1x8x8xf32>, vector<1x8x8xf32> -> vector<8x8x8xf32>
    %190 = arith.truncf %189 : vector<8x8x8xf32> to vector<8x8x8xbf16>
    %191 = vector.extract_strided_slice %154 {offsets = [0, 0], sizes = [8, 8], strides = [1, 1]} : vector<16x32xf32> to vector<8x8xf32>
    %192 = vector.extract_strided_slice %154 {offsets = [0, 8], sizes = [8, 8], strides = [1, 1]} : vector<16x32xf32> to vector<8x8xf32>
    %193 = vector.extract_strided_slice %154 {offsets = [0, 16], sizes = [8, 8], strides = [1, 1]} : vector<16x32xf32> to vector<8x8xf32>
    %194 = vector.extract_strided_slice %154 {offsets = [0, 24], sizes = [8, 8], strides = [1, 1]} : vector<16x32xf32> to vector<8x8xf32>
    %195 = vector.extract_strided_slice %154 {offsets = [8, 0], sizes = [8, 8], strides = [1, 1]} : vector<16x32xf32> to vector<8x8xf32>
    %196 = vector.extract_strided_slice %154 {offsets = [8, 8], sizes = [8, 8], strides = [1, 1]} : vector<16x32xf32> to vector<8x8xf32>
    %197 = vector.extract_strided_slice %154 {offsets = [8, 16], sizes = [8, 8], strides = [1, 1]} : vector<16x32xf32> to vector<8x8xf32>
    %198 = vector.extract_strided_slice %154 {offsets = [8, 24], sizes = [8, 8], strides = [1, 1]} : vector<16x32xf32> to vector<8x8xf32>
    %199 = vector.shape_cast %191 : vector<8x8xf32> to vector<1x8x8xf32>
    %200 = vector.shape_cast %192 : vector<8x8xf32> to vector<1x8x8xf32>
    %201 = vector.shape_cast %193 : vector<8x8xf32> to vector<1x8x8xf32>
    %202 = vector.shape_cast %194 : vector<8x8xf32> to vector<1x8x8xf32>
    %203 = vector.shape_cast %195 : vector<8x8xf32> to vector<1x8x8xf32>
    %204 = vector.shape_cast %196 : vector<8x8xf32> to vector<1x8x8xf32>
    %205 = vector.shape_cast %197 : vector<8x8xf32> to vector<1x8x8xf32>
    %206 = vector.shape_cast %198 : vector<8x8xf32> to vector<1x8x8xf32>
    %207 = tpu.concatenate %199, %200, %201, %202, %203, %204, %205, %206 in 0 : vector<1x8x8xf32>, vector<1x8x8xf32>, vector<1x8x8xf32>, vector<1x8x8xf32>, vector<1x8x8xf32>, vector<1x8x8xf32>, vector<1x8x8xf32>, vector<1x8x8xf32> -> vector<8x8x8xf32>
    %208 = arith.truncf %207 : vector<8x8x8xf32> to vector<8x8x8xbf16>
    "tpu.trace_start"() <{level = 10 : i32, message = "gld,gsd->gls"}> : () -> ()
    %cst_98 = arith.constant dense<0.000000e+00> : vector<8x8x8xf32>
    %209 = tpu.matmul %172, %190, %cst_98 {dimension_numbers = #tpu.dot_dimension_numbers<[2], [2], [1], [1], [0, 0, 0, 1, 1, 1], [0], [0]>} : vector<8x8x8xbf16>, vector<8x8x8xbf16>, vector<8x8x8xf32> -> vector<8x8x8xf32>
    "tpu.trace_stop"() : () -> ()
    %cst_99 = arith.constant dense<0xFF800000> : vector<8x8xf32>
    %210 = vector.multi_reduction <maximumf>, %209, %cst_99 [2] : vector<8x8x8xf32> to vector<8x8xf32>
    %211 = vector.shape_cast %210 : vector<8x8xf32> to vector<8x8x1xf32>
    %212 = vector.broadcast %211 : vector<8x8x1xf32> to vector<8x8x8xf32>
    %213 = arith.subf %209, %212 : vector<8x8x8xf32>
    %214 = math.exp %213 : vector<8x8x8xf32>
    %215 = arith.truncf %214 : vector<8x8x8xf32> to vector<8x8x8xbf16>
    "tpu.trace_start"() <{level = 10 : i32, message = "gls,gsd->gld"}> : () -> ()
    %cst_100 = arith.constant dense<0.000000e+00> : vector<8x8x8xf32>
    %216 = tpu.matmul %215, %208, %cst_100 {dimension_numbers = #tpu.dot_dimension_numbers<[2], [1], [1], [2], [0, 0, 0, 1, 1, 2], [0], [0]>} : vector<8x8x8xbf16>, vector<8x8x8xbf16>, vector<8x8x8xf32> -> vector<8x8x8xf32>
    "tpu.trace_stop"() : () -> ()
    %cst_101 = arith.constant dense<0.000000e+00> : vector<8x8xf32>
    %217 = vector.multi_reduction <add>, %214, %cst_101 [2] : vector<8x8x8xf32> to vector<8x8xf32>
    %218 = vector.shape_cast %217 : vector<8x8xf32> to vector<8x8x1xf32>
    %219 = tpu.reciprocal %218 {approx = true} : vector<8x8x1xf32> -> vector<8x8x1xf32>
    %220 = vector.broadcast %219 : vector<8x8x1xf32> to vector<8x8x8xf32>
    %221 = arith.mulf %216, %220 : vector<8x8x8xf32>
    %222 = vector.extract_strided_slice %221 {offsets = [0, 0, 0], sizes = [1, 8, 8], strides = [1, 1, 1]} : vector<8x8x8xf32> to vector<1x8x8xf32>
    %223 = vector.shape_cast %222 : vector<1x8x8xf32> to vector<8x8xf32>
    %224 = vector.extract_strided_slice %221 {offsets = [1, 0, 0], sizes = [1, 8, 8], strides = [1, 1, 1]} : vector<8x8x8xf32> to vector<1x8x8xf32>
    %225 = vector.shape_cast %224 : vector<1x8x8xf32> to vector<8x8xf32>
    %226 = vector.extract_strided_slice %221 {offsets = [2, 0, 0], sizes = [1, 8, 8], strides = [1, 1, 1]} : vector<8x8x8xf32> to vector<1x8x8xf32>
    %227 = vector.shape_cast %226 : vector<1x8x8xf32> to vector<8x8xf32>
    %228 = vector.extract_strided_slice %221 {offsets = [3, 0, 0], sizes = [1, 8, 8], strides = [1, 1, 1]} : vector<8x8x8xf32> to vector<1x8x8xf32>
    %229 = vector.shape_cast %228 : vector<1x8x8xf32> to vector<8x8xf32>
    %230 = tpu.concatenate %223, %225, %227, %229 in 1 : vector<8x8xf32>, vector<8x8xf32>, vector<8x8xf32>, vector<8x8xf32> -> vector<8x32xf32>
    %231 = vector.extract_strided_slice %221 {offsets = [4, 0, 0], sizes = [1, 8, 8], strides = [1, 1, 1]} : vector<8x8x8xf32> to vector<1x8x8xf32>
    %232 = vector.shape_cast %231 : vector<1x8x8xf32> to vector<8x8xf32>
    %233 = vector.extract_strided_slice %221 {offsets = [5, 0, 0], sizes = [1, 8, 8], strides = [1, 1, 1]} : vector<8x8x8xf32> to vector<1x8x8xf32>
    %234 = vector.shape_cast %233 : vector<1x8x8xf32> to vector<8x8xf32>
    %235 = vector.extract_strided_slice %221 {offsets = [6, 0, 0], sizes = [1, 8, 8], strides = [1, 1, 1]} : vector<8x8x8xf32> to vector<1x8x8xf32>
    %236 = vector.shape_cast %235 : vector<1x8x8xf32> to vector<8x8xf32>
    %237 = vector.extract_strided_slice %221 {offsets = [7, 0, 0], sizes = [1, 8, 8], strides = [1, 1, 1]} : vector<8x8x8xf32> to vector<1x8x8xf32>
    %238 = vector.shape_cast %237 : vector<1x8x8xf32> to vector<8x8xf32>
    %239 = tpu.concatenate %232, %234, %236, %238 in 1 : vector<8x8xf32>, vector<8x8xf32>, vector<8x8xf32>, vector<8x8xf32> -> vector<8x32xf32>
    %240 = tpu.concatenate %230, %239 in 0 : vector<8x32xf32>, vector<8x32xf32> -> vector<16x32xf32>
    %241 = arith.truncf %240 : vector<16x32xf32> to vector<16x32xbf16>
    %cst_102 = arith.constant dense<0.000000e+00> : vector<16x32xf32>
    %242 = tpu.matmul %241, %127, %cst_102 {dimension_numbers = #tpu.dot_dimension_numbers<[1], [0], [0], [1], [0, 0, 1, 1], [], []>} : vector<16x32xbf16>, vector<32x32xbf16>, vector<16x32xf32> -> vector<16x32xf32>
    %243 = vector.broadcast %129 : vector<1x32xf32> to vector<16x32xf32>
    %244 = arith.addf %242, %243 : vector<16x32xf32>
    %245 = arith.addf %244, %113 : vector<16x32xf32>
    %cst_103 = arith.constant dense<0.000000e+00> : vector<16xf32>
    %246 = vector.multi_reduction <add>, %245, %cst_103 [1] : vector<16x32xf32> to vector<16xf32>
    %247 = vector.shape_cast %246 : vector<16xf32> to vector<16x1xf32>
    %cst_104 = arith.constant 3.200000e+01 : f32
    %248 = vector.broadcast %cst_104 : f32 to vector<16x1xf32>
    %249 = arith.divf %247, %248 : vector<16x1xf32>
    %250 = vector.broadcast %249 : vector<16x1xf32> to vector<16x32xf32>
    %251 = arith.subf %245, %250 : vector<16x32xf32>
    %252 = arith.mulf %251, %251 : vector<16x32xf32>
    %cst_105 = arith.constant dense<0.000000e+00> : vector<16xf32>
    %253 = vector.multi_reduction <add>, %252, %cst_105 [1] : vector<16x32xf32> to vector<16xf32>
    %254 = vector.shape_cast %253 : vector<16xf32> to vector<16x1xf32>
    %cst_106 = arith.constant 3.200000e+01 : f32
    %255 = vector.broadcast %cst_106 : f32 to vector<16x1xf32>
    %256 = arith.divf %254, %255 : vector<16x1xf32>
    %cst_107 = arith.constant 9.99999974E-6 : f32
    %257 = vector.broadcast %cst_107 : f32 to vector<16x1xf32>
    %258 = arith.addf %256, %257 : vector<16x1xf32>
    %259 = math.rsqrt %258 : vector<16x1xf32>
    %260 = vector.broadcast %259 : vector<16x1xf32> to vector<16x32xf32>
    %261 = arith.mulf %251, %260 : vector<16x32xf32>
    %262 = vector.broadcast %131 : vector<1x32xf32> to vector<16x32xf32>
    %263 = arith.mulf %261, %262 : vector<16x32xf32>
    %264 = vector.broadcast %133 : vector<1x32xf32> to vector<16x32xf32>
    %265 = arith.addf %263, %264 : vector<16x32xf32>
    %266 = arith.truncf %265 : vector<16x32xf32> to vector<16x32xbf16>
    %cst_108 = arith.constant dense<0.000000e+00> : vector<16x64xf32>
    %267 = tpu.matmul %266, %135, %cst_108 {dimension_numbers = #tpu.dot_dimension_numbers<[1], [0], [0], [1], [0, 0, 1, 1], [], []>} : vector<16x32xbf16>, vector<32x64xbf16>, vector<16x64xf32> -> vector<16x64xf32>
    %268 = vector.broadcast %137 : vector<1x64xf32> to vector<16x64xf32>
    %269 = arith.addf %267, %268 : vector<16x64xf32>
    %cst_109 = arith.constant 5.000000e-01 : f32
    %270 = vector.broadcast %cst_109 : f32 to vector<16x64xf32>
    %271 = arith.mulf %270, %269 : vector<16x64xf32>
    %272 = arith.mulf %269, %269 : vector<16x64xf32>
    %273 = arith.mulf %272, %269 : vector<16x64xf32>
    %cst_110 = arith.constant 4.471500e-02 : f32
    %274 = vector.broadcast %cst_110 : f32 to vector<16x64xf32>
    %275 = arith.mulf %274, %273 : vector<16x64xf32>
    %276 = arith.addf %269, %275 : vector<16x64xf32>
    %cst_111 = arith.constant 0.797884583 : f32
    %277 = vector.broadcast %cst_111 : f32 to vector<16x64xf32>
    %278 = arith.mulf %277, %276 : vector<16x64xf32>
    %279 = math.tanh %278 : vector<16x64xf32>
    %cst_112 = arith.constant 1.000000e+00 : f32
    %280 = vector.broadcast %cst_112 : f32 to vector<16x64xf32>
    %281 = arith.addf %280, %279 : vector<16x64xf32>
    %282 = arith.mulf %271, %281 : vector<16x64xf32>
    %283 = arith.truncf %282 : vector<16x64xf32> to vector<16x64xbf16>
    %cst_113 = arith.constant dense<0.000000e+00> : vector<16x32xf32>
    %284 = tpu.matmul %283, %139, %cst_113 {dimension_numbers = #tpu.dot_dimension_numbers<[1], [0], [0], [1], [0, 0, 1, 1], [], []>} : vector<16x64xbf16>, vector<64x32xbf16>, vector<16x32xf32> -> vector<16x32xf32>
    %285 = vector.broadcast %141 : vector<1x32xf32> to vector<16x32xf32>
    %286 = arith.addf %284, %285 : vector<16x32xf32>
    %287 = arith.addf %286, %245 : vector<16x32xf32>
    %c1 = arith.constant 1 : index
    %c0_114 = arith.constant 0 : index
    %c0_115 = arith.constant 0 : index
    %288 = vector.load %arg17[%c1, %c0_114, %c0_115] : memref<2x32x32xbf16, #tpu.memory_space<vmem>>, vector<1x32x32xbf16>
    %289 = vector.shape_cast %288 : vector<1x32x32xbf16> to vector<32x32xbf16>
    %c1_116 = arith.constant 1 : index
    %c0_117 = arith.constant 0 : index
    %c0_118 = arith.constant 0 : index
    %290 = vector.load %arg18[%c1_116, %c0_117, %c0_118] : memref<2x1x32xf32, #tpu.memory_space<vmem>>, vector<1x1x32xf32>
    %291 = vector.shape_cast %290 : vector<1x1x32xf32> to vector<1x32xf32>
    %c1_119 = arith.constant 1 : index
    %c0_120 = arith.constant 0 : index
    %c0_121 = arith.constant 0 : index
    %292 = vector.load %arg19[%c1_119, %c0_120, %c0_121] : memref<2x32x32xbf16, #tpu.memory_space<vmem>>, vector<1x32x32xbf16>
    %293 = vector.shape_cast %292 : vector<1x32x32xbf16> to vector<32x32xbf16>
    %c1_122 = arith.constant 1 : index
    %c0_123 = arith.constant 0 : index
    %c0_124 = arith.constant 0 : index
    %294 = vector.load %arg20[%c1_122, %c0_123, %c0_124] : memref<2x1x32xf32, #tpu.memory_space<vmem>>, vector<1x1x32xf32>
    %295 = vector.shape_cast %294 : vector<1x1x32xf32> to vector<1x32xf32>
    %c1_125 = arith.constant 1 : index
    %c0_126 = arith.constant 0 : index
    %c0_127 = arith.constant 0 : index
    %296 = vector.load %arg21[%c1_125, %c0_126, %c0_127] : memref<2x32x32xbf16, #tpu.memory_space<vmem>>, vector<1x32x32xbf16>
    %297 = vector.shape_cast %296 : vector<1x32x32xbf16> to vector<32x32xbf16>
    %c1_128 = arith.constant 1 : index
    %c0_129 = arith.constant 0 : index
    %c0_130 = arith.constant 0 : index
    %298 = vector.load %arg22[%c1_128, %c0_129, %c0_130] : memref<2x1x32xf32, #tpu.memory_space<vmem>>, vector<1x1x32xf32>
    %299 = vector.shape_cast %298 : vector<1x1x32xf32> to vector<1x32xf32>
    %c1_131 = arith.constant 1 : index
    %c0_132 = arith.constant 0 : index
    %c0_133 = arith.constant 0 : index
    %300 = vector.load %arg23[%c1_131, %c0_132, %c0_133] : memref<2x32x32xbf16, #tpu.memory_space<vmem>>, vector<1x32x32xbf16>
    %301 = vector.shape_cast %300 : vector<1x32x32xbf16> to vector<32x32xbf16>
    %c1_134 = arith.constant 1 : index
    %c0_135 = arith.constant 0 : index
    %c0_136 = arith.constant 0 : index
    %302 = vector.load %arg24[%c1_134, %c0_135, %c0_136] : memref<2x1x32xf32, #tpu.memory_space<vmem>>, vector<1x1x32xf32>
    %303 = vector.shape_cast %302 : vector<1x1x32xf32> to vector<1x32xf32>
    %c1_137 = arith.constant 1 : index
    %c0_138 = arith.constant 0 : index
    %c0_139 = arith.constant 0 : index
    %304 = vector.load %arg25[%c1_137, %c0_138, %c0_139] : memref<2x1x32xf32, #tpu.memory_space<vmem>>, vector<1x1x32xf32>
    %305 = vector.shape_cast %304 : vector<1x1x32xf32> to vector<1x32xf32>
    %c1_140 = arith.constant 1 : index
    %c0_141 = arith.constant 0 : index
    %c0_142 = arith.constant 0 : index
    %306 = vector.load %arg26[%c1_140, %c0_141, %c0_142] : memref<2x1x32xf32, #tpu.memory_space<vmem>>, vector<1x1x32xf32>
    %307 = vector.shape_cast %306 : vector<1x1x32xf32> to vector<1x32xf32>
    %c1_143 = arith.constant 1 : index
    %c0_144 = arith.constant 0 : index
    %c0_145 = arith.constant 0 : index
    %308 = vector.load %arg27[%c1_143, %c0_144, %c0_145] : memref<2x32x64xbf16, #tpu.memory_space<vmem>>, vector<1x32x64xbf16>
    %309 = vector.shape_cast %308 : vector<1x32x64xbf16> to vector<32x64xbf16>
    %c1_146 = arith.constant 1 : index
    %c0_147 = arith.constant 0 : index
    %c0_148 = arith.constant 0 : index
    %310 = vector.load %arg28[%c1_146, %c0_147, %c0_148] : memref<2x1x64xf32, #tpu.memory_space<vmem>>, vector<1x1x64xf32>
    %311 = vector.shape_cast %310 : vector<1x1x64xf32> to vector<1x64xf32>
    %c1_149 = arith.constant 1 : index
    %c0_150 = arith.constant 0 : index
    %c0_151 = arith.constant 0 : index
    %312 = vector.load %arg29[%c1_149, %c0_150, %c0_151] : memref<2x64x32xbf16, #tpu.memory_space<vmem>>, vector<1x64x32xbf16>
    %313 = vector.shape_cast %312 : vector<1x64x32xbf16> to vector<64x32xbf16>
    %c1_152 = arith.constant 1 : index
    %c0_153 = arith.constant 0 : index
    %c0_154 = arith.constant 0 : index
    %314 = vector.load %arg30[%c1_152, %c0_153, %c0_154] : memref<2x1x32xf32, #tpu.memory_space<vmem>>, vector<1x1x32xf32>
    %315 = vector.shape_cast %314 : vector<1x1x32xf32> to vector<1x32xf32>
    %316 = arith.truncf %287 : vector<16x32xf32> to vector<16x32xbf16>
    %317 = arith.truncf %287 : vector<16x32xf32> to vector<16x32xbf16>
    %cst_155 = arith.constant dense<0.000000e+00> : vector<16x32xf32>
    %318 = tpu.matmul %317, %289, %cst_155 {dimension_numbers = #tpu.dot_dimension_numbers<[1], [0], [0], [1], [0, 0, 1, 1], [], []>} : vector<16x32xbf16>, vector<32x32xbf16>, vector<16x32xf32> -> vector<16x32xf32>
    %319 = vector.broadcast %291 : vector<1x32xf32> to vector<16x32xf32>
    %320 = arith.addf %318, %319 : vector<16x32xf32>
    %cst_156 = arith.constant 0.353553385 : f32
    %321 = vector.broadcast %cst_156 : f32 to vector<16x32xf32>
    %322 = arith.mulf %320, %321 : vector<16x32xf32>
    %cst_157 = arith.constant dense<0.000000e+00> : vector<16x32xf32>
    %323 = tpu.matmul %316, %293, %cst_157 {dimension_numbers = #tpu.dot_dimension_numbers<[1], [0], [0], [1], [0, 0, 1, 1], [], []>} : vector<16x32xbf16>, vector<32x32xbf16>, vector<16x32xf32> -> vector<16x32xf32>
    %324 = vector.broadcast %295 : vector<1x32xf32> to vector<16x32xf32>
    %325 = arith.addf %323, %324 : vector<16x32xf32>
    %cst_158 = arith.constant dense<0.000000e+00> : vector<16x32xf32>
    %326 = tpu.matmul %316, %297, %cst_158 {dimension_numbers = #tpu.dot_dimension_numbers<[1], [0], [0], [1], [0, 0, 1, 1], [], []>} : vector<16x32xbf16>, vector<32x32xbf16>, vector<16x32xf32> -> vector<16x32xf32>
    %327 = vector.broadcast %299 : vector<1x32xf32> to vector<16x32xf32>
    %328 = arith.addf %326, %327 : vector<16x32xf32>
    %329 = vector.extract_strided_slice %322 {offsets = [0, 0], sizes = [8, 8], strides = [1, 1]} : vector<16x32xf32> to vector<8x8xf32>
    %330 = vector.extract_strided_slice %322 {offsets = [0, 8], sizes = [8, 8], strides = [1, 1]} : vector<16x32xf32> to vector<8x8xf32>
    %331 = vector.extract_strided_slice %322 {offsets = [0, 16], sizes = [8, 8], strides = [1, 1]} : vector<16x32xf32> to vector<8x8xf32>
    %332 = vector.extract_strided_slice %322 {offsets = [0, 24], sizes = [8, 8], strides = [1, 1]} : vector<16x32xf32> to vector<8x8xf32>
    %333 = vector.extract_strided_slice %322 {offsets = [8, 0], sizes = [8, 8], strides = [1, 1]} : vector<16x32xf32> to vector<8x8xf32>
    %334 = vector.extract_strided_slice %322 {offsets = [8, 8], sizes = [8, 8], strides = [1, 1]} : vector<16x32xf32> to vector<8x8xf32>
    %335 = vector.extract_strided_slice %322 {offsets = [8, 16], sizes = [8, 8], strides = [1, 1]} : vector<16x32xf32> to vector<8x8xf32>
    %336 = vector.extract_strided_slice %322 {offsets = [8, 24], sizes = [8, 8], strides = [1, 1]} : vector<16x32xf32> to vector<8x8xf32>
    %337 = vector.shape_cast %329 : vector<8x8xf32> to vector<1x8x8xf32>
    %338 = vector.shape_cast %330 : vector<8x8xf32> to vector<1x8x8xf32>
    %339 = vector.shape_cast %331 : vector<8x8xf32> to vector<1x8x8xf32>
    %340 = vector.shape_cast %332 : vector<8x8xf32> to vector<1x8x8xf32>
    %341 = vector.shape_cast %333 : vector<8x8xf32> to vector<1x8x8xf32>
    %342 = vector.shape_cast %334 : vector<8x8xf32> to vector<1x8x8xf32>
    %343 = vector.shape_cast %335 : vector<8x8xf32> to vector<1x8x8xf32>
    %344 = vector.shape_cast %336 : vector<8x8xf32> to vector<1x8x8xf32>
    %345 = tpu.concatenate %337, %338, %339, %340, %341, %342, %343, %344 in 0 : vector<1x8x8xf32>, vector<1x8x8xf32>, vector<1x8x8xf32>, vector<1x8x8xf32>, vector<1x8x8xf32>, vector<1x8x8xf32>, vector<1x8x8xf32>, vector<1x8x8xf32> -> vector<8x8x8xf32>
    %346 = arith.truncf %345 : vector<8x8x8xf32> to vector<8x8x8xbf16>
    %347 = vector.extract_strided_slice %325 {offsets = [0, 0], sizes = [8, 8], strides = [1, 1]} : vector<16x32xf32> to vector<8x8xf32>
    %348 = vector.extract_strided_slice %325 {offsets = [0, 8], sizes = [8, 8], strides = [1, 1]} : vector<16x32xf32> to vector<8x8xf32>
    %349 = vector.extract_strided_slice %325 {offsets = [0, 16], sizes = [8, 8], strides = [1, 1]} : vector<16x32xf32> to vector<8x8xf32>
    %350 = vector.extract_strided_slice %325 {offsets = [0, 24], sizes = [8, 8], strides = [1, 1]} : vector<16x32xf32> to vector<8x8xf32>
    %351 = vector.extract_strided_slice %325 {offsets = [8, 0], sizes = [8, 8], strides = [1, 1]} : vector<16x32xf32> to vector<8x8xf32>
    %352 = vector.extract_strided_slice %325 {offsets = [8, 8], sizes = [8, 8], strides = [1, 1]} : vector<16x32xf32> to vector<8x8xf32>
    %353 = vector.extract_strided_slice %325 {offsets = [8, 16], sizes = [8, 8], strides = [1, 1]} : vector<16x32xf32> to vector<8x8xf32>
    %354 = vector.extract_strided_slice %325 {offsets = [8, 24], sizes = [8, 8], strides = [1, 1]} : vector<16x32xf32> to vector<8x8xf32>
    %355 = vector.shape_cast %347 : vector<8x8xf32> to vector<1x8x8xf32>
    %356 = vector.shape_cast %348 : vector<8x8xf32> to vector<1x8x8xf32>
    %357 = vector.shape_cast %349 : vector<8x8xf32> to vector<1x8x8xf32>
    %358 = vector.shape_cast %350 : vector<8x8xf32> to vector<1x8x8xf32>
    %359 = vector.shape_cast %351 : vector<8x8xf32> to vector<1x8x8xf32>
    %360 = vector.shape_cast %352 : vector<8x8xf32> to vector<1x8x8xf32>
    %361 = vector.shape_cast %353 : vector<8x8xf32> to vector<1x8x8xf32>
    %362 = vector.shape_cast %354 : vector<8x8xf32> to vector<1x8x8xf32>
    %363 = tpu.concatenate %355, %356, %357, %358, %359, %360, %361, %362 in 0 : vector<1x8x8xf32>, vector<1x8x8xf32>, vector<1x8x8xf32>, vector<1x8x8xf32>, vector<1x8x8xf32>, vector<1x8x8xf32>, vector<1x8x8xf32>, vector<1x8x8xf32> -> vector<8x8x8xf32>
    %364 = arith.truncf %363 : vector<8x8x8xf32> to vector<8x8x8xbf16>
    %365 = vector.extract_strided_slice %328 {offsets = [0, 0], sizes = [8, 8], strides = [1, 1]} : vector<16x32xf32> to vector<8x8xf32>
    %366 = vector.extract_strided_slice %328 {offsets = [0, 8], sizes = [8, 8], strides = [1, 1]} : vector<16x32xf32> to vector<8x8xf32>
    %367 = vector.extract_strided_slice %328 {offsets = [0, 16], sizes = [8, 8], strides = [1, 1]} : vector<16x32xf32> to vector<8x8xf32>
    %368 = vector.extract_strided_slice %328 {offsets = [0, 24], sizes = [8, 8], strides = [1, 1]} : vector<16x32xf32> to vector<8x8xf32>
    %369 = vector.extract_strided_slice %328 {offsets = [8, 0], sizes = [8, 8], strides = [1, 1]} : vector<16x32xf32> to vector<8x8xf32>
    %370 = vector.extract_strided_slice %328 {offsets = [8, 8], sizes = [8, 8], strides = [1, 1]} : vector<16x32xf32> to vector<8x8xf32>
    %371 = vector.extract_strided_slice %328 {offsets = [8, 16], sizes = [8, 8], strides = [1, 1]} : vector<16x32xf32> to vector<8x8xf32>
    %372 = vector.extract_strided_slice %328 {offsets = [8, 24], sizes = [8, 8], strides = [1, 1]} : vector<16x32xf32> to vector<8x8xf32>
    %373 = vector.shape_cast %365 : vector<8x8xf32> to vector<1x8x8xf32>
    %374 = vector.shape_cast %366 : vector<8x8xf32> to vector<1x8x8xf32>
    %375 = vector.shape_cast %367 : vector<8x8xf32> to vector<1x8x8xf32>
    %376 = vector.shape_cast %368 : vector<8x8xf32> to vector<1x8x8xf32>
    %377 = vector.shape_cast %369 : vector<8x8xf32> to vector<1x8x8xf32>
    %378 = vector.shape_cast %370 : vector<8x8xf32> to vector<1x8x8xf32>
    %379 = vector.shape_cast %371 : vector<8x8xf32> to vector<1x8x8xf32>
    %380 = vector.shape_cast %372 : vector<8x8xf32> to vector<1x8x8xf32>
    %381 = tpu.concatenate %373, %374, %375, %376, %377, %378, %379, %380 in 0 : vector<1x8x8xf32>, vector<1x8x8xf32>, vector<1x8x8xf32>, vector<1x8x8xf32>, vector<1x8x8xf32>, vector<1x8x8xf32>, vector<1x8x8xf32>, vector<1x8x8xf32> -> vector<8x8x8xf32>
    %382 = arith.truncf %381 : vector<8x8x8xf32> to vector<8x8x8xbf16>
    "tpu.trace_start"() <{level = 10 : i32, message = "gld,gsd->gls"}> : () -> ()
    %cst_159 = arith.constant dense<0.000000e+00> : vector<8x8x8xf32>
    %383 = tpu.matmul %346, %364, %cst_159 {dimension_numbers = #tpu.dot_dimension_numbers<[2], [2], [1], [1], [0, 0, 0, 1, 1, 1], [0], [0]>} : vector<8x8x8xbf16>, vector<8x8x8xbf16>, vector<8x8x8xf32> -> vector<8x8x8xf32>
    "tpu.trace_stop"() : () -> ()
    %cst_160 = arith.constant dense<0xFF800000> : vector<8x8xf32>
    %384 = vector.multi_reduction <maximumf>, %383, %cst_160 [2] : vector<8x8x8xf32> to vector<8x8xf32>
    %385 = vector.shape_cast %384 : vector<8x8xf32> to vector<8x8x1xf32>
    %386 = vector.broadcast %385 : vector<8x8x1xf32> to vector<8x8x8xf32>
    %387 = arith.subf %383, %386 : vector<8x8x8xf32>
    %388 = math.exp %387 : vector<8x8x8xf32>
    %389 = arith.truncf %388 : vector<8x8x8xf32> to vector<8x8x8xbf16>
    "tpu.trace_start"() <{level = 10 : i32, message = "gls,gsd->gld"}> : () -> ()
    %cst_161 = arith.constant dense<0.000000e+00> : vector<8x8x8xf32>
    %390 = tpu.matmul %389, %382, %cst_161 {dimension_numbers = #tpu.dot_dimension_numbers<[2], [1], [1], [2], [0, 0, 0, 1, 1, 2], [0], [0]>} : vector<8x8x8xbf16>, vector<8x8x8xbf16>, vector<8x8x8xf32> -> vector<8x8x8xf32>
    "tpu.trace_stop"() : () -> ()
    %cst_162 = arith.constant dense<0.000000e+00> : vector<8x8xf32>
    %391 = vector.multi_reduction <add>, %388, %cst_162 [2] : vector<8x8x8xf32> to vector<8x8xf32>
    %392 = vector.shape_cast %391 : vector<8x8xf32> to vector<8x8x1xf32>
    %393 = tpu.reciprocal %392 {approx = true} : vector<8x8x1xf32> -> vector<8x8x1xf32>
    %394 = vector.broadcast %393 : vector<8x8x1xf32> to vector<8x8x8xf32>
    %395 = arith.mulf %390, %394 : vector<8x8x8xf32>
    %396 = vector.extract_strided_slice %395 {offsets = [0, 0, 0], sizes = [1, 8, 8], strides = [1, 1, 1]} : vector<8x8x8xf32> to vector<1x8x8xf32>
    %397 = vector.shape_cast %396 : vector<1x8x8xf32> to vector<8x8xf32>
    %398 = vector.extract_strided_slice %395 {offsets = [1, 0, 0], sizes = [1, 8, 8], strides = [1, 1, 1]} : vector<8x8x8xf32> to vector<1x8x8xf32>
    %399 = vector.shape_cast %398 : vector<1x8x8xf32> to vector<8x8xf32>
    %400 = vector.extract_strided_slice %395 {offsets = [2, 0, 0], sizes = [1, 8, 8], strides = [1, 1, 1]} : vector<8x8x8xf32> to vector<1x8x8xf32>
    %401 = vector.shape_cast %400 : vector<1x8x8xf32> to vector<8x8xf32>
    %402 = vector.extract_strided_slice %395 {offsets = [3, 0, 0], sizes = [1, 8, 8], strides = [1, 1, 1]} : vector<8x8x8xf32> to vector<1x8x8xf32>
    %403 = vector.shape_cast %402 : vector<1x8x8xf32> to vector<8x8xf32>
    %404 = tpu.concatenate %397, %399, %401, %403 in 1 : vector<8x8xf32>, vector<8x8xf32>, vector<8x8xf32>, vector<8x8xf32> -> vector<8x32xf32>
    %405 = vector.extract_strided_slice %395 {offsets = [4, 0, 0], sizes = [1, 8, 8], strides = [1, 1, 1]} : vector<8x8x8xf32> to vector<1x8x8xf32>
    %406 = vector.shape_cast %405 : vector<1x8x8xf32> to vector<8x8xf32>
    %407 = vector.extract_strided_slice %395 {offsets = [5, 0, 0], sizes = [1, 8, 8], strides = [1, 1, 1]} : vector<8x8x8xf32> to vector<1x8x8xf32>
    %408 = vector.shape_cast %407 : vector<1x8x8xf32> to vector<8x8xf32>
    %409 = vector.extract_strided_slice %395 {offsets = [6, 0, 0], sizes = [1, 8, 8], strides = [1, 1, 1]} : vector<8x8x8xf32> to vector<1x8x8xf32>
    %410 = vector.shape_cast %409 : vector<1x8x8xf32> to vector<8x8xf32>
    %411 = vector.extract_strided_slice %395 {offsets = [7, 0, 0], sizes = [1, 8, 8], strides = [1, 1, 1]} : vector<8x8x8xf32> to vector<1x8x8xf32>
    %412 = vector.shape_cast %411 : vector<1x8x8xf32> to vector<8x8xf32>
    %413 = tpu.concatenate %406, %408, %410, %412 in 1 : vector<8x8xf32>, vector<8x8xf32>, vector<8x8xf32>, vector<8x8xf32> -> vector<8x32xf32>
    %414 = tpu.concatenate %404, %413 in 0 : vector<8x32xf32>, vector<8x32xf32> -> vector<16x32xf32>
    %415 = arith.truncf %414 : vector<16x32xf32> to vector<16x32xbf16>
    %cst_163 = arith.constant dense<0.000000e+00> : vector<16x32xf32>
    %416 = tpu.matmul %415, %301, %cst_163 {dimension_numbers = #tpu.dot_dimension_numbers<[1], [0], [0], [1], [0, 0, 1, 1], [], []>} : vector<16x32xbf16>, vector<32x32xbf16>, vector<16x32xf32> -> vector<16x32xf32>
    %417 = vector.broadcast %303 : vector<1x32xf32> to vector<16x32xf32>
    %418 = arith.addf %416, %417 : vector<16x32xf32>
    %419 = arith.addf %418, %287 : vector<16x32xf32>
    %cst_164 = arith.constant dense<0.000000e+00> : vector<16xf32>
    %420 = vector.multi_reduction <add>, %419, %cst_164 [1] : vector<16x32xf32> to vector<16xf32>
    %421 = vector.shape_cast %420 : vector<16xf32> to vector<16x1xf32>
    %cst_165 = arith.constant 3.200000e+01 : f32
    %422 = vector.broadcast %cst_165 : f32 to vector<16x1xf32>
    %423 = arith.divf %421, %422 : vector<16x1xf32>
    %424 = vector.broadcast %423 : vector<16x1xf32> to vector<16x32xf32>
    %425 = arith.subf %419, %424 : vector<16x32xf32>
    %426 = arith.mulf %425, %425 : vector<16x32xf32>
    %cst_166 = arith.constant dense<0.000000e+00> : vector<16xf32>
    %427 = vector.multi_reduction <add>, %426, %cst_166 [1] : vector<16x32xf32> to vector<16xf32>
    %428 = vector.shape_cast %427 : vector<16xf32> to vector<16x1xf32>
    %cst_167 = arith.constant 3.200000e+01 : f32
    %429 = vector.broadcast %cst_167 : f32 to vector<16x1xf32>
    %430 = arith.divf %428, %429 : vector<16x1xf32>
    %cst_168 = arith.constant 9.99999974E-6 : f32
    %431 = vector.broadcast %cst_168 : f32 to vector<16x1xf32>
    %432 = arith.addf %430, %431 : vector<16x1xf32>
    %433 = math.rsqrt %432 : vector<16x1xf32>
    %434 = vector.broadcast %433 : vector<16x1xf32> to vector<16x32xf32>
    %435 = arith.mulf %425, %434 : vector<16x32xf32>
    %436 = vector.broadcast %305 : vector<1x32xf32> to vector<16x32xf32>
    %437 = arith.mulf %435, %436 : vector<16x32xf32>
    %438 = vector.broadcast %307 : vector<1x32xf32> to vector<16x32xf32>
    %439 = arith.addf %437, %438 : vector<16x32xf32>
    %440 = arith.truncf %439 : vector<16x32xf32> to vector<16x32xbf16>
    %cst_169 = arith.constant dense<0.000000e+00> : vector<16x64xf32>
    %441 = tpu.matmul %440, %309, %cst_169 {dimension_numbers = #tpu.dot_dimension_numbers<[1], [0], [0], [1], [0, 0, 1, 1], [], []>} : vector<16x32xbf16>, vector<32x64xbf16>, vector<16x64xf32> -> vector<16x64xf32>
    %442 = vector.broadcast %311 : vector<1x64xf32> to vector<16x64xf32>
    %443 = arith.addf %441, %442 : vector<16x64xf32>
    %cst_170 = arith.constant 5.000000e-01 : f32
    %444 = vector.broadcast %cst_170 : f32 to vector<16x64xf32>
    %445 = arith.mulf %444, %443 : vector<16x64xf32>
    %446 = arith.mulf %443, %443 : vector<16x64xf32>
    %447 = arith.mulf %446, %443 : vector<16x64xf32>
    %cst_171 = arith.constant 4.471500e-02 : f32
    %448 = vector.broadcast %cst_171 : f32 to vector<16x64xf32>
    %449 = arith.mulf %448, %447 : vector<16x64xf32>
    %450 = arith.addf %443, %449 : vector<16x64xf32>
    %cst_172 = arith.constant 0.797884583 : f32
    %451 = vector.broadcast %cst_172 : f32 to vector<16x64xf32>
    %452 = arith.mulf %451, %450 : vector<16x64xf32>
    %453 = math.tanh %452 : vector<16x64xf32>
    %cst_173 = arith.constant 1.000000e+00 : f32
    %454 = vector.broadcast %cst_173 : f32 to vector<16x64xf32>
    %455 = arith.addf %454, %453 : vector<16x64xf32>
    %456 = arith.mulf %445, %455 : vector<16x64xf32>
    %457 = arith.truncf %456 : vector<16x64xf32> to vector<16x64xbf16>
    %cst_174 = arith.constant dense<0.000000e+00> : vector<16x32xf32>
    %458 = tpu.matmul %457, %313, %cst_174 {dimension_numbers = #tpu.dot_dimension_numbers<[1], [0], [0], [1], [0, 0, 1, 1], [], []>} : vector<16x64xbf16>, vector<64x32xbf16>, vector<16x32xf32> -> vector<16x32xf32>
    %459 = vector.broadcast %315 : vector<1x32xf32> to vector<16x32xf32>
    %460 = arith.addf %458, %459 : vector<16x32xf32>
    %461 = arith.addf %460, %419 : vector<16x32xf32>
    %462 = vector.shape_cast %461 : vector<16x32xf32> to vector<2x8x32xf32>
    %c0_175 = arith.constant 0 : index
    %c0_176 = arith.constant 0 : index
    %c0_177 = arith.constant 0 : index
    %463 = vector.load %arg31[%c0_175, %c0_176, %c0_177] : memref<2x8x32xf32, #tpu.memory_space<vmem>>, vector<2x8x32xf32>
    tpu.vector_store %arg31[%c0_175, %c0_176, %c0_177], %462 {strides = array<i32>} : memref<2x8x32xf32, #tpu.memory_space<vmem>>, vector<2x8x32xf32>,
    return
  }
  func.func @transform_0(%arg0: i32) -> (i32, i32, i32) {
    %c0_i32 = arith.constant 0 : i32
    %c0_i32_0 = arith.constant 0 : i32
    %c0_i32_1 = arith.constant 0 : i32
    %c0_i32_2 = arith.constant 0 : i32
    return %c0_i32, %c0_i32_0, %c0_i32_1 : i32, i32, i32
  }
  func.func @transform_1(%arg0: i32) -> (i32, i32, i32) {
    %c0_i32 = arith.constant 0 : i32
    %c0_i32_0 = arith.constant 0 : i32
    %c0_i32_1 = arith.constant 0 : i32
    %c0_i32_2 = arith.constant 0 : i32
    return %c0_i32, %c0_i32_0, %c0_i32_1 : i32, i32, i32
  }
  func.func @transform_2(%arg0: i32) -> (i32, i32) {
    %c0_i32 = arith.constant 0 : i32
    %c0_i32_0 = arith.constant 0 : i32
    %c0_i32_1 = arith.constant 0 : i32
    return %c0_i32, %c0_i32_0 : i32, i32
  }
  func.func @transform_3(%arg0: i32) -> (i32, i32) {
    %c0_i32 = arith.constant 0 : i32
    %c0_i32_0 = arith.constant 0 : i32
    %c0_i32_1 = arith.constant 0 : i32
    return %c0_i32, %c0_i32_0 : i32, i32
  }
  func.func @transform_4(%arg0: i32) -> (i32, i32) {
    %c0_i32 = arith.constant 0 : i32
    %c0_i32_0 = arith.constant 0 : i32
    %c0_i32_1 = arith.constant 0 : i32
    return %c0_i32, %c0_i32_0 : i32, i32
  }
  func.func @transform_5(%arg0: i32) -> (i32, i32) {
    %c0_i32 = arith.constant 0 : i32
    %c0_i32_0 = arith.constant 0 : i32
    %c0_i32_1 = arith.constant 0 : i32
    return %c0_i32, %c0_i32_0 : i32, i32
  }
  func.func @transform_6(%arg0: i32) -> (i32, i32) {
    %c0_i32 = arith.constant 0 : i32
    %c0_i32_0 = arith.constant 0 : i32
    %c0_i32_1 = arith.constant 0 : i32
    return %c0_i32, %c0_i32_0 : i32, i32
  }
  func.func @transform_7(%arg0: i32) -> (i32, i32) {
    %c0_i32 = arith.constant 0 : i32
    %c0_i32_0 = arith.constant 0 : i32
    %c0_i32_1 = arith.constant 0 : i32
    return %c0_i32, %c0_i32_0 : i32, i32
  }
  func.func @transform_8(%arg0: i32) -> (i32, i32) {
    %c0_i32 = arith.constant 0 : i32
    %c0_i32_0 = arith.constant 0 : i32
    %c0_i32_1 = arith.constant 0 : i32
    return %c0_i32, %c0_i32_0 : i32, i32
  }
  func.func @transform_9(%arg0: i32) -> (i32, i32) {
    %c0_i32 = arith.constant 0 : i32
    %c0_i32_0 = arith.constant 0 : i32
    %c0_i32_1 = arith.constant 0 : i32
    return %c0_i32, %c0_i32_0 : i32, i32
  }
  func.func @transform_10(%arg0: i32) -> (i32, i32) {
    %c0_i32 = arith.constant 0 : i32
    %c0_i32_0 = arith.constant 0 : i32
    %c0_i32_1 = arith.constant 0 : i32
    return %c0_i32, %c0_i32_0 : i32, i32
  }
  func.func @transform_11(%arg0: i32) -> (i32, i32) {
    %c0_i32 = arith.constant 0 : i32
    %c0_i32_0 = arith.constant 0 : i32
    %c0_i32_1 = arith.constant 0 : i32
    return %c0_i32, %c0_i32_0 : i32, i32
  }
  func.func @transform_12(%arg0: i32) -> (i32, i32) {
    %c0_i32 = arith.constant 0 : i32
    %c0_i32_0 = arith.constant 0 : i32
    %c0_i32_1 = arith.constant 0 : i32
    return %c0_i32, %c0_i32_0 : i32, i32
  }
  func.func @transform_13(%arg0: i32) -> (i32, i32) {
    %c0_i32 = arith.constant 0 : i32
    %c0_i32_0 = arith.constant 0 : i32
    %c0_i32_1 = arith.constant 0 : i32
    return %c0_i32, %c0_i32_0 : i32, i32
  }
  func.func @transform_14(%arg0: i32) -> (i32, i32) {
    %c0_i32 = arith.constant 0 : i32
    %c0_i32_0 = arith.constant 0 : i32
    %c0_i32_1 = arith.constant 0 : i32
    return %c0_i32, %c0_i32_0 : i32, i32
  }
  func.func @transform_15(%arg0: i32) -> (i32, i32) {
    %c0_i32 = arith.constant 0 : i32
    %c0_i32_0 = arith.constant 0 : i32
    %c0_i32_1 = arith.constant 0 : i32
    return %c0_i32, %c0_i32_0 : i32, i32
  }
  func.func @transform_16(%arg0: i32) -> (i32, i32, i32) {
    %c0_i32 = arith.constant 0 : i32
    %c0_i32_0 = arith.constant 0 : i32
    %c0_i32_1 = arith.constant 0 : i32
    %c0_i32_2 = arith.constant 0 : i32
    return %c0_i32, %c0_i32_0, %c0_i32_1 : i32, i32, i32
  }
  func.func @transform_17(%arg0: i32) -> (i32, i32, i32) {
    %c0_i32 = arith.constant 0 : i32
    %c0_i32_0 = arith.constant 0 : i32
    %c0_i32_1 = arith.constant 0 : i32
    %c0_i32_2 = arith.constant 0 : i32
    return %c0_i32, %c0_i32_0, %c0_i32_1 : i32, i32, i32
  }
  func.func @transform_18(%arg0: i32) -> (i32, i32, i32) {
    %c0_i32 = arith.constant 0 : i32
    %c0_i32_0 = arith.constant 0 : i32
    %c0_i32_1 = arith.constant 0 : i32
    %c0_i32_2 = arith.constant 0 : i32
    return %c0_i32, %c0_i32_0, %c0_i32_1 : i32, i32, i32
  }
  func.func @transform_19(%arg0: i32) -> (i32, i32, i32) {
    %c0_i32 = arith.constant 0 : i32
    %c0_i32_0 = arith.constant 0 : i32
    %c0_i32_1 = arith.constant 0 : i32
    %c0_i32_2 = arith.constant 0 : i32
    return %c0_i32, %c0_i32_0, %c0_i32_1 : i32, i32, i32
  }
  func.func @transform_20(%arg0: i32) -> (i32, i32, i32) {
    %c0_i32 = arith.constant 0 : i32
    %c0_i32_0 = arith.constant 0 : i32
    %c0_i32_1 = arith.constant 0 : i32
    %c0_i32_2 = arith.constant 0 : i32
    return %c0_i32, %c0_i32_0, %c0_i32_1 : i32, i32, i32
  }
  func.func @transform_21(%arg0: i32) -> (i32, i32, i32) {
    %c0_i32 = arith.constant 0 : i32
    %c0_i32_0 = arith.constant 0 : i32
    %c0_i32_1 = arith.constant 0 : i32
    %c0_i32_2 = arith.constant 0 : i32
    return %c0_i32, %c0_i32_0, %c0_i32_1 : i32, i32, i32
  }
  func.func @transform_22(%arg0: i32) -> (i32, i32, i32) {
    %c0_i32 = arith.constant 0 : i32
    %c0_i32_0 = arith.constant 0 : i32
    %c0_i32_1 = arith.constant 0 : i32
    %c0_i32_2 = arith.constant 0 : i32
    return %c0_i32, %c0_i32_0, %c0_i32_1 : i32, i32, i32
  }
  func.func @transform_23(%arg0: i32) -> (i32, i32, i32) {
    %c0_i32 = arith.constant 0 : i32
    %c0_i32_0 = arith.constant 0 : i32
    %c0_i32_1 = arith.constant 0 : i32
    %c0_i32_2 = arith.constant 0 : i32
    return %c0_i32, %c0_i32_0, %c0_i32_1 : i32, i32, i32
  }
  func.func @transform_24(%arg0: i32) -> (i32, i32, i32) {
    %c0_i32 = arith.constant 0 : i32
    %c0_i32_0 = arith.constant 0 : i32
    %c0_i32_1 = arith.constant 0 : i32
    %c0_i32_2 = arith.constant 0 : i32
    return %c0_i32, %c0_i32_0, %c0_i32_1 : i32, i32, i32
  }
  func.func @transform_25(%arg0: i32) -> (i32, i32, i32) {
    %c0_i32 = arith.constant 0 : i32
    %c0_i32_0 = arith.constant 0 : i32
    %c0_i32_1 = arith.constant 0 : i32
    %c0_i32_2 = arith.constant 0 : i32
    return %c0_i32, %c0_i32_0, %c0_i32_1 : i32, i32, i32
  }
  func.func @transform_26(%arg0: i32) -> (i32, i32, i32) {
    %c0_i32 = arith.constant 0 : i32
    %c0_i32_0 = arith.constant 0 : i32
    %c0_i32_1 = arith.constant 0 : i32
    %c0_i32_2 = arith.constant 0 : i32
    return %c0_i32, %c0_i32_0, %c0_i32_1 : i32, i32, i32
  }
  func.func @transform_27(%arg0: i32) -> (i32, i32, i32) {
    %c0_i32 = arith.constant 0 : i32
    %c0_i32_0 = arith.constant 0 : i32
    %c0_i32_1 = arith.constant 0 : i32
    %c0_i32_2 = arith.constant 0 : i32
    return %c0_i32, %c0_i32_0, %c0_i32_1 : i32, i32, i32
  }
  func.func @transform_28(%arg0: i32) -> (i32, i32, i32) {
    %c0_i32 = arith.constant 0 : i32
    %c0_i32_0 = arith.constant 0 : i32
    %c0_i32_1 = arith.constant 0 : i32
    %c0_i32_2 = arith.constant 0 : i32
    return %c0_i32, %c0_i32_0, %c0_i32_1 : i32, i32, i32
  }
  func.func @transform_29(%arg0: i32) -> (i32, i32, i32) {
    %c0_i32 = arith.constant 0 : i32
    %c0_i32_0 = arith.constant 0 : i32
    %c0_i32_1 = arith.constant 0 : i32
    %c0_i32_2 = arith.constant 0 : i32
    return %c0_i32, %c0_i32_0, %c0_i32_1 : i32, i32, i32
  }
  func.func @transform_30(%arg0: i32) -> (i32, i32, i32) {
    %c0_i32 = arith.constant 0 : i32
    %c0_i32_0 = arith.constant 0 : i32
    %c0_i32_1 = arith.constant 0 : i32
    %c0_i32_2 = arith.constant 0 : i32
    return %c0_i32, %c0_i32_0, %c0_i32_1 : i32, i32, i32
  }
}

</mosaic_0001>

<llo_original>
// kernel: perceiver_block_forward.1
$region0: #{perceiver_block_forward.1}
  #allocation0 [shape = 'u32[]', space=smem, size = 0x4, offset = 0x4, fixed_abs, tag = 'smem constant byte address 0x4 - core index']
  #allocation1 [shape = 'u32[144,128]{1,0:T(1,128)}', space=vmem, size = 0x12000, scoped, tag = 'internal scratch']
  %s0 = inlined_call_operand.smem [shape: u32[31], index: -1, kind: input, shape index: {}]
  %s1 = sld [smem:[%s0]]
  %s2 = scalar_lea.smem %s0, 1
  %s3 = sld [smem:[%s2]]
  %s4 = scalar_lea.smem %s0, 2
  %s5 = sld [smem:[%s4]]
  %s6 = scalar_lea.smem %s0, 3
  %s7 = sld [smem:[%s6]]
  %s8 = scalar_lea.smem %s0, 4
  %s9 = sld [smem:[%s8]]
  %s10 = scalar_lea.smem %s0, 5
  %s11 = sld [smem:[%s10]]
  %s12 = scalar_lea.smem %s0, 6
  %s13 = sld [smem:[%s12]]
  %s14 = scalar_lea.smem %s0, 7
  %s15 = sld [smem:[%s14]]
  %s16 = scalar_lea.smem %s0, 8
  %s17 = sld [smem:[%s16]]
  %s18 = scalar_lea.smem %s0, 9
  %s19 = sld [smem:[%s18]]
  %s20 = scalar_lea.smem %s0, 10
  %s21 = sld [smem:[%s20]]
  %s22 = scalar_lea.smem %s0, 11
  %s23 = sld [smem:[%s22]]
  %s24 = scalar_lea.smem %s0, 12
  %s25 = sld [smem:[%s24]]
  %s26 = scalar_lea.smem %s0, 13
  %s27 = sld [smem:[%s26]]
  %s28 = scalar_lea.smem %s0, 14
  %s29 = sld [smem:[%s28]]
  %s30 = scalar_lea.smem %s0, 15
  %s31 = sld [smem:[%s30]]
  %s32 = scalar_lea.smem %s0, 16
  %s33 = sld [smem:[%s32]]
  %s34 = scalar_lea.smem %s0, 17
  %s35 = sld [smem:[%s34]]
  %s36 = scalar_lea.smem %s0, 18
  %s37 = sld [smem:[%s36]]
  %s38 = scalar_lea.smem %s0, 19
  %s39 = sld [smem:[%s38]]
  %s40 = scalar_lea.smem %s0, 20
  %s41 = sld [smem:[%s40]]
  %s42 = scalar_lea.smem %s0, 21
  %s43 = sld [smem:[%s42]]
  %s44 = scalar_lea.smem %s0, 22
  %s45 = sld [smem:[%s44]]
  %s46 = scalar_lea.smem %s0, 23
  %s47 = sld [smem:[%s46]]
  %s48 = scalar_lea.smem %s0, 24
  %s49 = sld [smem:[%s48]]
  %s50 = scalar_lea.smem %s0, 25
  %s51 = sld [smem:[%s50]]
  %s52 = scalar_lea.smem %s0, 26
  %s53 = sld [smem:[%s52]]
  %s54 = scalar_lea.smem %s0, 27
  %s55 = sld [smem:[%s54]]
  %s56 = scalar_lea.smem %s0, 28
  %s57 = sld [smem:[%s56]]
  %s58 = scalar_lea.smem %s0, 29
  %s59 = sld [smem:[%s58]]
  %s60 = scalar_lea.smem %s0, 30
  %s61 = sld [smem:[%s60]]
  %s62 = sld [smem:[#allocation0]]
  $region130: #{perceiver_block_forward.1} parent=0
    _
  %s64 = ssub.s32 1, %s62
  %s65 = scalar_select 0, %s64, %s62
  // Predicated region
  $region2: #{perceiver_block_forward.1} parent=0 // pred_check
    _
  $region3: #{perceiver_block_forward.1} parent=0 // pred_check_branch
    %67 = sbr.rel (0) target = $region5
  $region4: #{perceiver_block_forward.1} parent=0 // pred_region
    _
  $region5: #{perceiver_block_forward.1} parent=0 // pred_fallthru
    _
  // Predicated region
  $region6: #{perceiver_block_forward.1} parent=0 // pred_check
    _
  $region7: #{perceiver_block_forward.1} parent=0 // pred_check_branch
    %69 = sbr.rel (0) target = $region9
  $region8: #{perceiver_block_forward.1} parent=0 // pred_region
    _
  $region9: #{perceiver_block_forward.1} parent=0 // pred_fallthru
    _
  // Predicated region
  $region10: #{perceiver_block_forward.1} parent=0 // pred_check
    _
  $region11: #{perceiver_block_forward.1} parent=0 // pred_check_branch
    %71 = sbr.rel (0) target = $region13
  $region12: #{perceiver_block_forward.1} parent=0 // pred_region
    _
  $region13: #{perceiver_block_forward.1} parent=0 // pred_fallthru
    _
  // Predicated region
  $region14: #{perceiver_block_forward.1} parent=0 // pred_check
    _
  $region15: #{perceiver_block_forward.1} parent=0 // pred_check_branch
    %73 = sbr.rel (0) target = $region17
  $region16: #{perceiver_block_forward.1} parent=0 // pred_region
    _
  $region17: #{perceiver_block_forward.1} parent=0 // pred_fallthru
    _
  // Predicated region
  $region18: #{perceiver_block_forward.1} parent=0 // pred_check
    _
  $region19: #{perceiver_block_forward.1} parent=0 // pred_check_branch
    %75 = sbr.rel (0) target = $region21
  $region20: #{perceiver_block_forward.1} parent=0 // pred_region
    _
  $region21: #{perceiver_block_forward.1} parent=0 // pred_fallthru
    _
  // Predicated region
  $region22: #{perceiver_block_forward.1} parent=0 // pred_check
    _
  $region23: #{perceiver_block_forward.1} parent=0 // pred_check_branch
    %77 = sbr.rel (0) target = $region25
  $region24: #{perceiver_block_forward.1} parent=0 // pred_region
    _
  $region25: #{perceiver_block_forward.1} parent=0 // pred_fallthru
    _
  // Predicated region
  $region26: #{perceiver_block_forward.1} parent=0 // pred_check
    _
  $region27: #{perceiver_block_forward.1} parent=0 // pred_check_branch
    %79 = sbr.rel (0) target = $region29
  $region28: #{perceiver_block_forward.1} parent=0 // pred_region
    _
  $region29: #{perceiver_block_forward.1} parent=0 // pred_fallthru
    _
  // Predicated region
  $region30: #{perceiver_block_forward.1} parent=0 // pred_check
    _
  $region31: #{perceiver_block_forward.1} parent=0 // pred_check_branch
    %81 = sbr.rel (0) target = $region33
  $region32: #{perceiver_block_forward.1} parent=0 // pred_region
    _
  $region33: #{perceiver_block_forward.1} parent=0 // pred_fallthru
    _
  // Predicated region
  $region34: #{perceiver_block_forward.1} parent=0 // pred_check
    _
  $region35: #{perceiver_block_forward.1} parent=0 // pred_check_branch
    %83 = sbr.rel (0) target = $region37
  $region36: #{perceiver_block_forward.1} parent=0 // pred_region
    _
  $region37: #{perceiver_block_forward.1} parent=0 // pred_fallthru
    _
  // Predicated region
  $region38: #{perceiver_block_forward.1} parent=0 // pred_check
    _
  $region39: #{perceiver_block_forward.1} parent=0 // pred_check_branch
    %85 = sbr.rel (0) target = $region41
  $region40: #{perceiver_block_forward.1} parent=0 // pred_region
    _
  $region41: #{perceiver_block_forward.1} parent=0 // pred_fallthru
    _
  // Predicated region
  $region42: #{perceiver_block_forward.1} parent=0 // pred_check
    _
  $region43: #{perceiver_block_forward.1} parent=0 // pred_check_branch
    %87 = sbr.rel (0) target = $region45
  $region44: #{perceiver_block_forward.1} parent=0 // pred_region
    _
  $region45: #{perceiver_block_forward.1} parent=0 // pred_fallthru
    _
  // Predicated region
  $region46: #{perceiver_block_forward.1} parent=0 // pred_check
    _
  $region47: #{perceiver_block_forward.1} parent=0 // pred_check_branch
    %89 = sbr.rel (0) target = $region49
  $region48: #{perceiver_block_forward.1} parent=0 // pred_region
    _
  $region49: #{perceiver_block_forward.1} parent=0 // pred_fallthru
    _
  // Predicated region
  $region50: #{perceiver_block_forward.1} parent=0 // pred_check
    _
  $region51: #{perceiver_block_forward.1} parent=0 // pred_check_branch
    %91 = sbr.rel (0) target = $region53
  $region52: #{perceiver_block_forward.1} parent=0 // pred_region
    _
  $region53: #{perceiver_block_forward.1} parent=0 // pred_fallthru
    _
  // Predicated region
  $region54: #{perceiver_block_forward.1} parent=0 // pred_check
    _
  $region55: #{perceiver_block_forward.1} parent=0 // pred_check_branch
    %93 = sbr.rel (0) target = $region57
  $region56: #{perceiver_block_forward.1} parent=0 // pred_region
    _
  $region57: #{perceiver_block_forward.1} parent=0 // pred_fallthru
    _
  // Predicated region
  $region58: #{perceiver_block_forward.1} parent=0 // pred_check
    _
  $region59: #{perceiver_block_forward.1} parent=0 // pred_check_branch
    %95 = sbr.rel (0) target = $region61
  $region60: #{perceiver_block_forward.1} parent=0 // pred_region
    _
  $region61: #{perceiver_block_forward.1} parent=0 // pred_fallthru
    _
  // Predicated region
  $region62: #{perceiver_block_forward.1} parent=0 // pred_check
    _
  $region63: #{perceiver_block_forward.1} parent=0 // pred_check_branch
    %97 = sbr.rel (0) target = $region65
  $region64: #{perceiver_block_forward.1} parent=0 // pred_region
    _
  $region65: #{perceiver_block_forward.1} parent=0 // pred_fallthru
    _
  // Predicated region
  $region66: #{perceiver_block_forward.1} parent=0 // pred_check
    _
  $region67: #{perceiver_block_forward.1} parent=0 // pred_check_branch
    %99 = sbr.rel (0) target = $region69
  $region68: #{perceiver_block_forward.1} parent=0 // pred_region
    _
  $region69: #{perceiver_block_forward.1} parent=0 // pred_fallthru
    _
  // Predicated region
  $region70: #{perceiver_block_forward.1} parent=0 // pred_check
    _
  $region71: #{perceiver_block_forward.1} parent=0 // pred_check_branch
    %101 = sbr.rel (0) target = $region73
  $region72: #{perceiver_block_forward.1} parent=0 // pred_region
    _
  $region73: #{perceiver_block_forward.1} parent=0 // pred_fallthru
    _
  // Predicated region
  $region74: #{perceiver_block_forward.1} parent=0 // pred_check
    _
  $region75: #{perceiver_block_forward.1} parent=0 // pred_check_branch
    %103 = sbr.rel (0) target = $region77
  $region76: #{perceiver_block_forward.1} parent=0 // pred_region
    _
  $region77: #{perceiver_block_forward.1} parent=0 // pred_fallthru
    _
  // Predicated region
  $region78: #{perceiver_block_forward.1} parent=0 // pred_check
    _
  $region79: #{perceiver_block_forward.1} parent=0 // pred_check_branch
    %105 = sbr.rel (0) target = $region81
  $region80: #{perceiver_block_forward.1} parent=0 // pred_region
    _
  $region81: #{perceiver_block_forward.1} parent=0 // pred_fallthru
    _
  // Predicated region
  $region82: #{perceiver_block_forward.1} parent=0 // pred_check
    _
  $region83: #{perceiver_block_forward.1} parent=0 // pred_check_branch
    %107 = sbr.rel (0) target = $region85
  $region84: #{perceiver_block_forward.1} parent=0 // pred_region
    _
  $region85: #{perceiver_block_forward.1} parent=0 // pred_fallthru
    _
  // Predicated region
  $region86: #{perceiver_block_forward.1} parent=0 // pred_check
    _
  $region87: #{perceiver_block_forward.1} parent=0 // pred_check_branch
    %109 = sbr.rel (0) target = $region89
  $region88: #{perceiver_block_forward.1} parent=0 // pred_region
    _
  $region89: #{perceiver_block_forward.1} parent=0 // pred_fallthru
    _
  // Predicated region
  $region90: #{perceiver_block_forward.1} parent=0 // pred_check
    _
  $region91: #{perceiver_block_forward.1} parent=0 // pred_check_branch
    %111 = sbr.rel (0) target = $region93
  $region92: #{perceiver_block_forward.1} parent=0 // pred_region
    _
  $region93: #{perceiver_block_forward.1} parent=0 // pred_fallthru
    _
  // Predicated region
  $region94: #{perceiver_block_forward.1} parent=0 // pred_check
    _
  $region95: #{perceiver_block_forward.1} parent=0 // pred_check_branch
    %113 = sbr.rel (0) target = $region97
  $region96: #{perceiver_block_forward.1} parent=0 // pred_region
    _
  $region97: #{perceiver_block_forward.1} parent=0 // pred_fallthru
    _
  // Predicated region
  $region98: #{perceiver_block_forward.1} parent=0 // pred_check
    _
  $region99: #{perceiver_block_forward.1} parent=0 // pred_check_branch
    %115 = sbr.rel (0) target = $region101
  $region100: #{perceiver_block_forward.1} parent=0 // pred_region
    _
  $region101: #{perceiver_block_forward.1} parent=0 // pred_fallthru
    _
  // Predicated region
  $region102: #{perceiver_block_forward.1} parent=0 // pred_check
    _
  $region103: #{perceiver_block_forward.1} parent=0 // pred_check_branch
    %117 = sbr.rel (0) target = $region105
  $region104: #{perceiver_block_forward.1} parent=0 // pred_region
    _
  $region105: #{perceiver_block_forward.1} parent=0 // pred_fallthru
    _
  // Predicated region
  $region106: #{perceiver_block_forward.1} parent=0 // pred_check
    _
  $region107: #{perceiver_block_forward.1} parent=0 // pred_check_branch
    %119 = sbr.rel (0) target = $region109
  $region108: #{perceiver_block_forward.1} parent=0 // pred_region
    _
  $region109: #{perceiver_block_forward.1} parent=0 // pred_fallthru
    _
  // Predicated region
  $region110: #{perceiver_block_forward.1} parent=0 // pred_check
    _
  $region111: #{perceiver_block_forward.1} parent=0 // pred_check_branch
    %121 = sbr.rel (0) target = $region113
  $region112: #{perceiver_block_forward.1} parent=0 // pred_region
    _
  $region113: #{perceiver_block_forward.1} parent=0 // pred_fallthru
    _
  // Predicated region
  $region114: #{perceiver_block_forward.1} parent=0 // pred_check
    _
  $region115: #{perceiver_block_forward.1} parent=0 // pred_check_branch
    %123 = sbr.rel (0) target = $region117
  $region116: #{perceiver_block_forward.1} parent=0 // pred_region
    _
  $region117: #{perceiver_block_forward.1} parent=0 // pred_fallthru
    _
  // Predicated region
  $region118: #{perceiver_block_forward.1} parent=0 // pred_check
    _
  $region119: #{perceiver_block_forward.1} parent=0 // pred_check_branch
    %125 = sbr.rel (0) target = $region121
  $region120: #{perceiver_block_forward.1} parent=0 // pred_region
    _
  $region121: #{perceiver_block_forward.1} parent=0 // pred_fallthru
    _
  %v127 = vld [vmem:[%s1] sm:$0xff]
  %v128 = vld [vmem:[%s1 + $0x8] sm:$0xff]
  %v129 = vld [vmem:[%s1 + $0x10] sm:$0xff]
  %v130 = vld [vmem:[%s1 + $0x18] sm:$0xff]
  %v131 = vld [vmem:[%s3] sm:$0xff]
  %v132 = vld [vmem:[%s3 + $0x8] sm:$0xff]
  %v133 = vld [vmem:[%s5] sm:$0xf]
  %v134 = vld [vmem:[%s5 + $0x4] sm:$0xf]
  %v135 = vld [vmem:[%s5 + $0x8] sm:$0xf]
  %v136 = vld [vmem:[%s5 + $0xc] sm:$0xf]
  %v137 = vld [vmem:[%s7] sm:$0x1]
  %v138 = vld [vmem:[%s9] sm:$0xf]
  %v139 = vld [vmem:[%s9 + $0x4] sm:$0xf]
  %v140 = vld [vmem:[%s9 + $0x8] sm:$0xf]
  %v141 = vld [vmem:[%s9 + $0xc] sm:$0xf]
  %v142 = vld [vmem:[%s11] sm:$0x1]
  %v143 = vld [vmem:[%s13] sm:$0xf]
  %v144 = vld [vmem:[%s13 + $0x4] sm:$0xf]
  %v145 = vld [vmem:[%s13 + $0x8] sm:$0xf]
  %v146 = vld [vmem:[%s13 + $0xc] sm:$0xf]
  %v147 = vld [vmem:[%s15] sm:$0x1]
  %v148 = vld [vmem:[%s17] sm:$0xf]
  %v149 = vld [vmem:[%s17 + $0x4] sm:$0xf]
  %v150 = vld [vmem:[%s17 + $0x8] sm:$0xf]
  %v151 = vld [vmem:[%s17 + $0xc] sm:$0xf]
  %v152 = vld [vmem:[%s19] sm:$0x1]
  %v153 = vld [vmem:[%s21] sm:$0x1]
  %v154 = vld [vmem:[%s23] sm:$0x1]
  %v155 = vld [vmem:[%s25] sm:$0xf]
  %v156 = vld [vmem:[%s25 + $0x4] sm:$0xf]
  %v157 = vld [vmem:[%s25 + $0x8] sm:$0xf]
  %v158 = vld [vmem:[%s25 + $0xc] sm:$0xf]
  %v159 = vld [vmem:[%s27] sm:$0x1]
  %v160 = vld [vmem:[%s29] sm:$0xf]
  %v161 = vld [vmem:[%s29 + $0x4] sm:$0xf]
  %v162 = vld [vmem:[%s29 + $0x8] sm:$0xf]
  %v163 = vld [vmem:[%s29 + $0xc] sm:$0xf]
  %v164 = vld [vmem:[%s29 + $0x10] sm:$0xf]
  %v165 = vld [vmem:[%s29 + $0x14] sm:$0xf]
  %v166 = vld [vmem:[%s29 + $0x18] sm:$0xf]
  %v167 = vld [vmem:[%s29 + $0x1c] sm:$0xf]
  %v168 = vld [vmem:[%s31] sm:$0x1]
  %v169 = vpack.c.bf16 %v128, %v127
  %v170 = vpack.c.bf16 %v130, %v129
  %v171 = vpack.c.bf16 %v132, %v131
  %v173 = vlaneseq
  %v174 = vshrl.u32 %v173, 7
  %v175 = vsub.s32 0, %v174
  %v176 = vrot.slane %v137, %v175
  %v182 = vunpack.c.l.b16 %v133
  %v183 = vunpack.c.l.b16 %v134
  %v184 = vunpack.c.l.b16 %v135
  %v185 = vunpack.c.l.b16 %v136
  %v186 = vpack.c.b16 %v183, %v182
  %v187 = vpack.c.b16 %v185, %v184
  %vm190 = vcmask 261120
  %v192 = vsel %vm190, %v171, 0
  %194 = vmatprep.subr.bf16.mxu0 0
  %195 = vmatpush1.bf16.msra.mxu0 %v186
  %196 = vmatprep.subr.bf16.mxu0 0
  %197 = vmatpush1.bf16.msra.mxu0 %v187
  %198 = vmatprep.subr.bf16.mxu0 0
  %199 = vmatpush1.bf16.msra.mxu0 0
  %200 = vmatprep.subr.bf16.mxu0 0
  %201 = vmatpush1.bf16.msra.mxu0 0
  %202 = vmatprep.subr.bf16.mxu0 0
  %203 = vmatpush1.bf16.msra.mxu0 0
  %204 = vmatprep.subr.bf16.mxu0 0
  %205 = vmatpush1.bf16.msra.mxu0 0
  %206 = vmatprep.subr.bf16.mxu0 0
  %207 = vmatpush1.bf16.msra.mxu0 0
  %208 = vmatprep.subr.bf16.mxu0 0
  %209 = vmatpush1.bf16.msra.mxu0 0
  %210 = vmatprep.subr.bf16.mxu0 0
  %211 = vmatpush1.bf16.msra.mxu0 0
  %212 = vmatprep.subr.bf16.mxu0 0
  %213 = vmatpush1.bf16.msra.mxu0 0
  %214 = vmatprep.subr.bf16.mxu0 0
  %215 = vmatpush1.bf16.msra.mxu0 0
  %216 = vmatprep.subr.bf16.mxu0 0
  %217 = vmatpush1.bf16.msra.mxu0 0
  %218 = vmatprep.subr.bf16.mxu0 0
  %219 = vmatpush1.bf16.msra.mxu0 0
  %220 = vmatprep.subr.bf16.mxu0 0
  %221 = vmatpush1.bf16.msra.mxu0 0
  %222 = vmatprep.subr.bf16.mxu0 0
  %223 = vmatpush1.bf16.msra.mxu0 0
  %224 = vmatprep.subr.bf16.mxu0 0
  %225 = vmatpush1.bf16.msra.mxu0 0
  %226 = vmatprep.mubr.bf16.mxu0 0
  %227 = vmatmul.mubr.bf16.gmra.mrb[0].mxu0 %v192
  %v228 = vpop.f32.mrb[0].mxu0
  %v229 = vadd.f32 %v176, %v228
  %v230 = vpop.f32.mrb[0].mxu0
  %v231 = vpop.f32.mrb[0].mxu0
  %v232 = vadd.f32 %v176, %v231
  %v233 = vpop.f32.mrb[0].mxu0
  %234 = vdwg.mxu0
  %v235 = vmul.f32 %v229, 0.17677669
  %v236 = vmul.f32 %v232, 0.17677669
  %v238 = vlaneseq
  %v239 = vshrl.u32 %v238, 7
  %v240 = vsub.s32 0, %v239
  %v241 = vrot.slane %v142, %v240
  %v247 = vunpack.c.l.b16 %v138
  %v248 = vunpack.c.l.b16 %v139
  %v249 = vunpack.c.l.b16 %v140
  %v250 = vunpack.c.l.b16 %v141
  %v251 = vpack.c.b16 %v248, %v247
  %v252 = vpack.c.b16 %v250, %v249
  %v256 = vsel %vm190, %v169, 0
  %v259 = vsel %vm190, %v170, 0
  %261 = vmatprep.subr.bf16.mxu0 0
  %262 = vmatpush1.bf16.msra.mxu0 %v251
  %263 = vmatprep.subr.bf16.mxu0 0
  %264 = vmatpush1.bf16.msra.mxu0 %v252
  %265 = vmatprep.subr.bf16.mxu0 0
  %266 = vmatpush1.bf16.msra.mxu0 0
  %267 = vmatprep.subr.bf16.mxu0 0
  %268 = vmatpush1.bf16.msra.mxu0 0
  %269 = vmatprep.subr.bf16.mxu0 0
  %270 = vmatpush1.bf16.msra.mxu0 0
  %271 = vmatprep.subr.bf16.mxu0 0
  %272 = vmatpush1.bf16.msra.mxu0 0
  %273 = vmatprep.subr.bf16.mxu0 0
  %274 = vmatpush1.bf16.msra.mxu0 0
  %275 = vmatprep.subr.bf16.mxu0 0
  %276 = vmatpush1.bf16.msra.mxu0 0
  %277 = vmatprep.subr.bf16.mxu0 0
  %278 = vmatpush1.bf16.msra.mxu0 0
  %279 = vmatprep.subr.bf16.mxu0 0
  %280 = vmatpush1.bf16.msra.mxu0 0
  %281 = vmatprep.subr.bf16.mxu0 0
  %282 = vmatpush1.bf16.msra.mxu0 0
  %283 = vmatprep.subr.bf16.mxu0 0
  %284 = vmatpush1.bf16.msra.mxu0 0
  %285 = vmatprep.subr.bf16.mxu0 0
  %286 = vmatpush1.bf16.msra.mxu0 0
  %287 = vmatprep.subr.bf16.mxu0 0
  %288 = vmatpush1.bf16.msra.mxu0 0
  %289 = vmatprep.subr.bf16.mxu0 0
  %290 = vmatpush1.bf16.msra.mxu0 0
  %291 = vmatprep.subr.bf16.mxu0 0
  %292 = vmatpush1.bf16.msra.mxu0 0
  %293 = vmatprep.mubr.bf16.mxu0 0
  %294 = vmatmul.mubr.bf16.gmra.mrb[0].mxu0 %v256
  %v295 = vpop.f32.mrb[0].mxu0
  %v296 = vadd.f32 %v241, %v295
  %v297 = vpop.f32.mrb[0].mxu0
  %v298 = vpop.f32.mrb[0].mxu0
  %v299 = vadd.f32 %v241, %v298
  %v300 = vpop.f32.mrb[0].mxu0
  %301 = vmatprep.mubr.bf16.mxu0 0
  %302 = vmatmul.mubr.bf16.gmra.mrb[0].mxu0 %v259
  %v303 = vpop.f32.mrb[0].mxu0
  %v304 = vadd.f32 %v241, %v303
  %v305 = vpop.f32.mrb[0].mxu0
  %v306 = vpop.f32.mrb[0].mxu0
  %v307 = vadd.f32 %v241, %v306
  %v308 = vpop.f32.mrb[0].mxu0
  %309 = vdwg.mxu0
  %v311 = vlaneseq
  %v312 = vshrl.u32 %v311, 7
  %v313 = vsub.s32 0, %v312
  %v314 = vrot.slane %v147, %v313
  %v320 = vunpack.c.l.b16 %v143
  %v321 = vunpack.c.l.b16 %v144
  %v322 = vunpack.c.l.b16 %v145
  %v323 = vunpack.c.l.b16 %v146
  %v324 = vpack.c.b16 %v321, %v320
  %v325 = vpack.c.b16 %v323, %v322
  %328 = vmatprep.subr.bf16.mxu0 0
  %329 = vmatpush1.bf16.msra.mxu0 %v324
  %330 = vmatprep.subr.bf16.mxu0 0
  %331 = vmatpush1.bf16.msra.mxu0 %v325
  %332 = vmatprep.subr.bf16.mxu0 0
  %333 = vmatpush1.bf16.msra.mxu0 0
  %334 = vmatprep.subr.bf16.mxu0 0
  %335 = vmatpush1.bf16.msra.mxu0 0
  %336 = vmatprep.subr.bf16.mxu0 0
  %337 = vmatpush1.bf16.msra.mxu0 0
  %338 = vmatprep.subr.bf16.mxu0 0
  %339 = vmatpush1.bf16.msra.mxu0 0
  %340 = vmatprep.subr.bf16.mxu0 0
  %341 = vmatpush1.bf16.msra.mxu0 0
  %342 = vmatprep.subr.bf16.mxu0 0
  %343 = vmatpush1.bf16.msra.mxu0 0
  %344 = vmatprep.subr.bf16.mxu0 0
  %345 = vmatpush1.bf16.msra.mxu0 0
  %346 = vmatprep.subr.bf16.mxu0 0
  %347 = vmatpush1.bf16.msra.mxu0 0
  %348 = vmatprep.subr.bf16.mxu0 0
  %349 = vmatpush1.bf16.msra.mxu0 0
  %350 = vmatprep.subr.bf16.mxu0 0
  %351 = vmatpush1.bf16.msra.mxu0 0
  %352 = vmatprep.subr.bf16.mxu0 0
  %353 = vmatpush1.bf16.msra.mxu0 0
  %354 = vmatprep.subr.bf16.mxu0 0
  %355 = vmatpush1.bf16.msra.mxu0 0
  %356 = vmatprep.subr.bf16.mxu0 0
  %357 = vmatpush1.bf16.msra.mxu0 0
  %358 = vmatprep.subr.bf16.mxu0 0
  %359 = vmatpush1.bf16.msra.mxu0 0
  %360 = vmatprep.mubr.bf16.mxu0 0
  %361 = vmatmul.mubr.bf16.gmra.mrb[0].mxu0 %v256
  %v362 = vpop.f32.mrb[0].mxu0
  %v363 = vadd.f32 %v314, %v362
  %v364 = vpop.f32.mrb[0].mxu0
  %v365 = vpop.f32.mrb[0].mxu0
  %v366 = vadd.f32 %v314, %v365
  %v367 = vpop.f32.mrb[0].mxu0
  %368 = vmatprep.mubr.bf16.mxu0 0
  %369 = vmatmul.mubr.bf16.gmra.mrb[0].mxu0 %v259
  %v370 = vpop.f32.mrb[0].mxu0
  %v371 = vadd.f32 %v314, %v370
  %v372 = vpop.f32.mrb[0].mxu0
  %v373 = vpop.f32.mrb[0].mxu0
  %v374 = vadd.f32 %v314, %v373
  %v375 = vpop.f32.mrb[0].mxu0
  %376 = vdwg.mxu0
  %v377 = vpack.c.bf16 %v235, %v235
  %v378 = vpack.c.bf16 %v236, %v236
  %v379 = vpack.c.bf16 %v299, %v296
  %v380 = vpack.c.bf16 %v307, %v304
  %v381 = vpack.c.bf16 %v366, %v363
  %v382 = vpack.c.bf16 %v374, %v371
  %v384 = vsel %vm190, %v377, 0
  %v387 = vsel %vm190, %v379, 0
  %389 = vmatprep.subr.bf16.mxu0 0
  %390 = vmatpush1.bf16.xpose.msra.mxu0 %v387
  %391 = vmatprep.subr.bf16.mxu0 0
  %392 = vmatpush1.bf16.xpose.msra.mxu0 0
  %393 = vmatprep.subr.bf16.mxu0 0
  %394 = vmatpush1.bf16.xpose.msra.mxu0 0
  %395 = vmatprep.subr.bf16.mxu0 0
  %396 = vmatpush1.bf16.xpose.msra.mxu0 0
  %397 = vmatprep.subr.bf16.mxu0 0
  %398 = vmatpush1.bf16.xpose.msra.mxu0 0
  %399 = vmatprep.subr.bf16.mxu0 0
  %400 = vmatpush1.bf16.xpose.msra.mxu0 0
  %401 = vmatprep.subr.bf16.mxu0 0
  %402 = vmatpush1.bf16.xpose.msra.mxu0 0
  %403 = vmatprep.subr.bf16.mxu0 0
  %404 = vmatpush1.bf16.xpose.msra.mxu0 0
  %405 = vmatprep.subr.bf16.mxu0 0
  %406 = vmatpush1.bf16.xpose.msra.mxu0 0
  %407 = vmatprep.subr.bf16.mxu0 0
  %408 = vmatpush1.bf16.xpose.msra.mxu0 0
  %409 = vmatprep.subr.bf16.mxu0 0
  %410 = vmatpush1.bf16.xpose.msra.mxu0 0
  %411 = vmatprep.subr.bf16.mxu0 0
  %412 = vmatpush1.bf16.xpose.msra.mxu0 0
  %413 = vmatprep.subr.bf16.mxu0 0
  %414 = vmatpush1.bf16.xpose.msra.mxu0 0
  %415 = vmatprep.subr.bf16.mxu0 0
  %416 = vmatpush1.bf16.xpose.msra.mxu0 0
  %417 = vmatprep.subr.bf16.mxu0 0
  %418 = vmatpush1.bf16.xpose.msra.mxu0 0
  %419 = vmatprep.subr.bf16.mxu0 0
  %420 = vmatpush1.bf16.xpose.msra.mxu0 0
  %421 = vmatprep.mubr.bf16.mxu0 0
  %422 = vmatmul.mubr.bf16.gmra.mrb[0].mxu0 %v384
  %v423 = vpop.f32.mrb[0].mxu0
  %v424 = vadd.f32 0.0, %v423
  %v425 = vpop.f32.mrb[0].mxu0
  %v426 = vpop.f32.mrb[0].mxu0
  %v427 = vpop.f32.mrb[0].mxu0
  %428 = vdwg.mxu0
  %v430 = vsel %vm190, %v378, 0
  %v433 = vsel %vm190, %v380, 0
  %435 = vmatprep.subr.bf16.mxu0 0
  %436 = vmatpush1.bf16.xpose.msra.mxu0 %v433
  %437 = vmatprep.subr.bf16.mxu0 0
  %438 = vmatpush1.bf16.xpose.msra.mxu0 0
  %439 = vmatprep.subr.bf16.mxu0 0
  %440 = vmatpush1.bf16.xpose.msra.mxu0 0
  %441 = vmatprep.subr.bf16.mxu0 0
  %442 = vmatpush1.bf16.xpose.msra.mxu0 0
  %443 = vmatprep.subr.bf16.mxu0 0
  %444 = vmatpush1.bf16.xpose.msra.mxu0 0
  %445 = vmatprep.subr.bf16.mxu0 0
  %446 = vmatpush1.bf16.xpose.msra.mxu0 0
  %447 = vmatprep.subr.bf16.mxu0 0
  %448 = vmatpush1.bf16.xpose.msra.mxu0 0
  %449 = vmatprep.subr.bf16.mxu0 0
  %450 = vmatpush1.bf16.xpose.msra.mxu0 0
  %451 = vmatprep.subr.bf16.mxu0 0
  %452 = vmatpush1.bf16.xpose.msra.mxu0 0
  %453 = vmatprep.subr.bf16.mxu0 0
  %454 = vmatpush1.bf16.xpose.msra.mxu0 0
  %455 = vmatprep.subr.bf16.mxu0 0
  %456 = vmatpush1.bf16.xpose.msra.mxu0 0
  %457 = vmatprep.subr.bf16.mxu0 0
  %458 = vmatpush1.bf16.xpose.msra.mxu0 0
  %459 = vmatprep.subr.bf16.mxu0 0
  %460 = vmatpush1.bf16.xpose.msra.mxu0 0
  %461 = vmatprep.subr.bf16.mxu0 0
  %462 = vmatpush1.bf16.xpose.msra.mxu0 0
  %463 = vmatprep.subr.bf16.mxu0 0
  %464 = vmatpush1.bf16.xpose.msra.mxu0 0
  %465 = vmatprep.subr.bf16.mxu0 0
  %466 = vmatpush1.bf16.xpose.msra.mxu0 0
  %467 = vmatprep.mubr.bf16.mxu0 0
  %468 = vmatmul.mubr.bf16.gmra.mrb[0].mxu0 %v430
  %v469 = vpop.f32.mrb[0].mxu0
  %v470 = vadd.f32 0.0, %v469
  %v471 = vpop.f32.mrb[0].mxu0
  %v472 = vpop.f32.mrb[0].mxu0
  %v473 = vpop.f32.mrb[0].mxu0
  %474 = vdwg.mxu0
  %vm475 = vcmask 130048
  %v476 = vsel %vm475, %v424, -inf
  %477 = vmax.xlane.f32.xlu0 %v476
  %v478 = vpop.xlane.xlu0 %477
  %v479 = vsel %vm475, %v470, -inf
  %480 = vmax.xlane.f32.xlu0 %v479
  %v481 = vpop.xlane.xlu0 %480
  %v482 = vsub.f32 %v424, %v478
  %v483 = vsub.f32 %v470, %v481
  %v484 = vmul.f32 %v482, 1.442695
  %v485 = vpow.pop %v484
  %v486 = vmul.f32 %v483, 1.442695
  %v487 = vpow.pop %v486
  %v488 = vpack.c.bf16 %v485, %v485
  %v489 = vpack.c.bf16 %v487, %v487
  %v491 = vsel %vm475, %v488, 0
  %493 = vmatprep.subr.bf16.mxu0 0
  %494 = vmatpush1.bf16.msra.mxu0 %v381
  %495 = vmatprep.subr.bf16.mxu0 0
  %496 = vmatpush1.bf16.msra.mxu0 0
  %497 = vmatprep.subr.bf16.mxu0 0
  %498 = vmatpush1.bf16.msra.mxu0 0
  %499 = vmatprep.subr.bf16.mxu0 0
  %500 = vmatpush1.bf16.msra.mxu0 0
  %501 = vmatprep.subr.bf16.mxu0 0
  %502 = vmatpush1.bf16.msra.mxu0 0
  %503 = vmatprep.subr.bf16.mxu0 0
  %504 = vmatpush1.bf16.msra.mxu0 0
  %505 = vmatprep.subr.bf16.mxu0 0
  %506 = vmatpush1.bf16.msra.mxu0 0
  %507 = vmatprep.subr.bf16.mxu0 0
  %508 = vmatpush1.bf16.msra.mxu0 0
  %509 = vmatprep.subr.bf16.mxu0 0
  %510 = vmatpush1.bf16.msra.mxu0 0
  %511 = vmatprep.subr.bf16.mxu0 0
  %512 = vmatpush1.bf16.msra.mxu0 0
  %513 = vmatprep.subr.bf16.mxu0 0
  %514 = vmatpush1.bf16.msra.mxu0 0
  %515 = vmatprep.subr.bf16.mxu0 0
  %516 = vmatpush1.bf16.msra.mxu0 0
  %517 = vmatprep.subr.bf16.mxu0 0
  %518 = vmatpush1.bf16.msra.mxu0 0
  %519 = vmatprep.subr.bf16.mxu0 0
  %520 = vmatpush1.bf16.msra.mxu0 0
  %521 = vmatprep.subr.bf16.mxu0 0
  %522 = vmatpush1.bf16.msra.mxu0 0
  %523 = vmatprep.subr.bf16.mxu0 0
  %524 = vmatpush1.bf16.msra.mxu0 0
  %525 = vmatprep.mubr.bf16.mxu0 0
  %526 = vmatmul.mubr.bf16.gmra.mrb[0].mxu0 %v491
  %v527 = vpop.f32.mrb[0].mxu0
  %v528 = vadd.f32 0.0, %v527
  %v529 = vpop.f32.mrb[0].mxu0
  %v530 = vpop.f32.mrb[0].mxu0
  %v531 = vpop.f32.mrb[0].mxu0
  %532 = vdwg.mxu0
  %v534 = vsel %vm475, %v489, 0
  %536 = vmatprep.subr.bf16.mxu0 0
  %537 = vmatpush1.bf16.msra.mxu0 %v382
  %538 = vmatprep.subr.bf16.mxu0 0
  %539 = vmatpush1.bf16.msra.mxu0 0
  %540 = vmatprep.subr.bf16.mxu0 0
  %541 = vmatpush1.bf16.msra.mxu0 0
  %542 = vmatprep.subr.bf16.mxu0 0
  %543 = vmatpush1.bf16.msra.mxu0 0
  %544 = vmatprep.subr.bf16.mxu0 0
  %545 = vmatpush1.bf16.msra.mxu0 0
  %546 = vmatprep.subr.bf16.mxu0 0
  %547 = vmatpush1.bf16.msra.mxu0 0
  %548 = vmatprep.subr.bf16.mxu0 0
  %549 = vmatpush1.bf16.msra.mxu0 0
  %550 = vmatprep.subr.bf16.mxu0 0
  %551 = vmatpush1.bf16.msra.mxu0 0
  %552 = vmatprep.subr.bf16.mxu0 0
  %553 = vmatpush1.bf16.msra.mxu0 0
  %554 = vmatprep.subr.bf16.mxu0 0
  %555 = vmatpush1.bf16.msra.mxu0 0
  %556 = vmatprep.subr.bf16.mxu0 0
  %557 = vmatpush1.bf16.msra.mxu0 0
  %558 = vmatprep.subr.bf16.mxu0 0
  %559 = vmatpush1.bf16.msra.mxu0 0
  %560 = vmatprep.subr.bf16.mxu0 0
  %561 = vmatpush1.bf16.msra.mxu0 0
  %562 = vmatprep.subr.bf16.mxu0 0
  %563 = vmatpush1.bf16.msra.mxu0 0
  %564 = vmatprep.subr.bf16.mxu0 0
  %565 = vmatpush1.bf16.msra.mxu0 0
  %566 = vmatprep.subr.bf16.mxu0 0
  %567 = vmatpush1.bf16.msra.mxu0 0
  %568 = vmatprep.mubr.bf16.mxu0 0
  %569 = vmatmul.mubr.bf16.gmra.mrb[0].mxu0 %v534
  %v570 = vpop.f32.mrb[0].mxu0
  %v571 = vadd.f32 0.0, %v570
  %v572 = vpop.f32.mrb[0].mxu0
  %v573 = vpop.f32.mrb[0].mxu0
  %v574 = vpop.f32.mrb[0].mxu0
  %575 = vdwg.mxu0
  %v576 = vsel %vm475, %v485, 0.0
  %577 = vadd.xlane.f32.xlu0 %v576
  %v578 = vpop.xlane.xlu0 %577
  %v579 = vsel %vm475, %v487, 0.0
  %580 = vadd.xlane.f32.xlu0 %v579
  %v581 = vpop.xlane.xlu0 %580
  %v582 = vrcp.pop %v578
  %v583 = vrcp.pop %v581
  %v584 = vmul.f32 %v528, %v582
  %v585 = vmul.f32 %v571, %v583
  %v586 = vpack.c.bf16 %v585, %v584
  %v588 = vlaneseq
  %v589 = vshrl.u32 %v588, 7
  %v590 = vsub.s32 0, %v589
  %v591 = vrot.slane %v152, %v590
  %v597 = vunpack.c.l.b16 %v148
  %v598 = vunpack.c.l.b16 %v149
  %v599 = vunpack.c.l.b16 %v150
  %v600 = vunpack.c.l.b16 %v151
  %v601 = vpack.c.b16 %v598, %v597
  %v602 = vpack.c.b16 %v600, %v599
  %v606 = vsel %vm190, %v586, 0
  %608 = vmatprep.subr.bf16.mxu0 0
  %609 = vmatpush1.bf16.msra.mxu0 %v601
  %610 = vmatprep.subr.bf16.mxu0 0
  %611 = vmatpush1.bf16.msra.mxu0 %v602
  %612 = vmatprep.subr.bf16.mxu0 0
  %613 = vmatpush1.bf16.msra.mxu0 0
  %614 = vmatprep.subr.bf16.mxu0 0
  %615 = vmatpush1.bf16.msra.mxu0 0
  %616 = vmatprep.subr.bf16.mxu0 0
  %617 = vmatpush1.bf16.msra.mxu0 0
  %618 = vmatprep.subr.bf16.mxu0 0
  %619 = vmatpush1.bf16.msra.mxu0 0
  %620 = vmatprep.subr.bf16.mxu0 0
  %621 = vmatpush1.bf16.msra.mxu0 0
  %622 = vmatprep.subr.bf16.mxu0 0
  %623 = vmatpush1.bf16.msra.mxu0 0
  %624 = vmatprep.subr.bf16.mxu0 0
  %625 = vmatpush1.bf16.msra.mxu0 0
  %626 = vmatprep.subr.bf16.mxu0 0
  %627 = vmatpush1.bf16.msra.mxu0 0
  %628 = vmatprep.subr.bf16.mxu0 0
  %629 = vmatpush1.bf16.msra.mxu0 0
  %630 = vmatprep.subr.bf16.mxu0 0
  %631 = vmatpush1.bf16.msra.mxu0 0
  %632 = vmatprep.subr.bf16.mxu0 0
  %633 = vmatpush1.bf16.msra.mxu0 0
  %634 = vmatprep.subr.bf16.mxu0 0
  %635 = vmatpush1.bf16.msra.mxu0 0
  %636 = vmatprep.subr.bf16.mxu0 0
  %637 = vmatpush1.bf16.msra.mxu0 0
  %638 = vmatprep.subr.bf16.mxu0 0
  %639 = vmatpush1.bf16.msra.mxu0 0
  %640 = vmatprep.mubr.bf16.mxu0 0
  %641 = vmatmul.mubr.bf16.gmra.mrb[0].mxu0 %v606
  %v642 = vpop.f32.mrb[0].mxu0
  %v643 = vadd.f32 %v591, %v642
  %v644 = vpop.f32.mrb[0].mxu0
  %v645 = vpop.f32.mrb[0].mxu0
  %v646 = vadd.f32 %v591, %v645
  %v647 = vpop.f32.mrb[0].mxu0
  %648 = vdwg.mxu0
  %v649 = vadd.f32 %v643, %v131
  %v650 = vadd.f32 %v646, %v132
  %v651 = vsel %vm190, %v649, 0.0
  %652 = vadd.xlane.f32.xlu0 %v651
  %v653 = vpop.xlane.xlu0 %652
  %v654 = vsel %vm190, %v650, 0.0
  %655 = vadd.xlane.f32.xlu0 %v654
  %v656 = vpop.xlane.xlu0 %655
  %v657 = vrcp.pop 32.0
  %v658 = vmul.f32 %v653, %v657
  %v659 = vmul.f32 %v656, %v657
  %v660 = vsub.f32 %v649, %v658
  %v661 = vsub.f32 %v650, %v659
  %v662 = vmul.f32 %v660, %v660
  %v663 = vmul.f32 %v661, %v661
  %v664 = vsel %vm190, %v662, 0.0
  %665 = vadd.xlane.f32.xlu0 %v664
  %v666 = vpop.xlane.xlu0 %665
  %v667 = vsel %vm190, %v663, 0.0
  %668 = vadd.xlane.f32.xlu0 %v667
  %v669 = vpop.xlane.xlu0 %668
  %v670 = vmul.f32 %v666, %v657
  %v671 = vmul.f32 %v669, %v657
  %v672 = vadd.f32 %v670, 1e-05
  %v673 = vadd.f32 %v671, 1e-05
  %v674 = vrsqrt.pop %v672
  %v675 = vrsqrt.pop %v673
  %v676 = vmul.f32 %v660, %v674
  %v677 = vmul.f32 %v661, %v675
  %v679 = vlaneseq
  %v680 = vshrl.u32 %v679, 7
  %v681 = vsub.s32 0, %v680
  %v682 = vrot.slane %v153, %v681
  %v684 = vmul.f32 %v676, %v682
  %v685 = vmul.f32 %v677, %v682
  %v687 = vlaneseq
  %v688 = vshrl.u32 %v687, 7
  %v689 = vsub.s32 0, %v688
  %v690 = vrot.slane %v154, %v689
  %v692 = vadd.f32 %v684, %v690
  %v693 = vadd.f32 %v685, %v690
  %v694 = vpack.c.bf16 %v693, %v692
  %v696 = vlaneseq
  %v697 = vshrl.u32 %v696, 7
  %v698 = vsub.s32 0, %v697
  %v699 = vrot.slane %v159, %v698
  %v705 = vunpack.c.l.b16 %v155
  %v706 = vunpack.c.l.b16 %v156
  %v707 = vunpack.c.l.b16 %v157
  %v708 = vunpack.c.l.b16 %v158
  %v709 = vpack.c.b16 %v706, %v705
  %v710 = vpack.c.b16 %v708, %v707
  %v714 = vsel %vm190, %v694, 0
  %716 = vmatprep.subr.bf16.mxu0 0
  %717 = vmatpush1.bf16.msra.mxu0 %v709
  %718 = vmatprep.subr.bf16.mxu0 0
  %719 = vmatpush1.bf16.msra.mxu0 %v710
  %720 = vmatprep.subr.bf16.mxu0 0
  %721 = vmatpush1.bf16.msra.mxu0 0
  %722 = vmatprep.subr.bf16.mxu0 0
  %723 = vmatpush1.bf16.msra.mxu0 0
  %724 = vmatprep.subr.bf16.mxu0 0
  %725 = vmatpush1.bf16.msra.mxu0 0
  %726 = vmatprep.subr.bf16.mxu0 0
  %727 = vmatpush1.bf16.msra.mxu0 0
  %728 = vmatprep.subr.bf16.mxu0 0
  %729 = vmatpush1.bf16.msra.mxu0 0
  %730 = vmatprep.subr.bf16.mxu0 0
  %731 = vmatpush1.bf16.msra.mxu0 0
  %732 = vmatprep.subr.bf16.mxu0 0
  %733 = vmatpush1.bf16.msra.mxu0 0
  %734 = vmatprep.subr.bf16.mxu0 0
  %735 = vmatpush1.bf16.msra.mxu0 0
  %736 = vmatprep.subr.bf16.mxu0 0
  %737 = vmatpush1.bf16.msra.mxu0 0
  %738 = vmatprep.subr.bf16.mxu0 0
  %739 = vmatpush1.bf16.msra.mxu0 0
  %740 = vmatprep.subr.bf16.mxu0 0
  %741 = vmatpush1.bf16.msra.mxu0 0
  %742 = vmatprep.subr.bf16.mxu0 0
  %743 = vmatpush1.bf16.msra.mxu0 0
  %744 = vmatprep.subr.bf16.mxu0 0
  %745 = vmatpush1.bf16.msra.mxu0 0
  %746 = vmatprep.subr.bf16.mxu0 0
  %747 = vmatpush1.bf16.msra.mxu0 0
  %748 = vmatprep.mubr.bf16.mxu0 0
  %749 = vmatmul.mubr.bf16.gmra.mrb[0].mxu0 %v714
  %v750 = vpop.f32.mrb[0].mxu0
  %v751 = vadd.f32 %v699, %v750
  %v752 = vpop.f32.mrb[0].mxu0
  %v753 = vpop.f32.mrb[0].mxu0
  %v754 = vadd.f32 %v699, %v753
  %v755 = vpop.f32.mrb[0].mxu0
  %756 = vdwg.mxu0
  %v757 = vmul.f32 %v751, 0.5
  %v758 = vmul.f32 %v754, 0.5
  %v759 = vmul.f32 %v751, %v751
  %v760 = vmul.f32 %v754, %v754
  %v761 = vmul.f32 %v759, %v751
  %v762 = vmul.f32 %v760, %v754
  %v763 = vmul.f32 %v761, 0.044715
  %v764 = vmul.f32 %v762, 0.044715
  %v765 = vadd.f32 %v751, %v763
  %v766 = vadd.f32 %v754, %v764
  %v767 = vmul.f32 %v765, 0.7978846
  %v768 = vmul.f32 %v766, 0.7978846
  %v769 = vtanh.pop %v767
  %v770 = vtanh.pop %v768
  %v771 = vadd.f32 %v769, 1.0
  %v772 = vadd.f32 %v770, 1.0
  %v773 = vmul.f32 %v757, %v771
  %v774 = vmul.f32 %v758, %v772
  %v775 = vpack.c.bf16 %v774, %v773
  %v777 = vlaneseq
  %v778 = vshrl.u32 %v777, 7
  %v779 = vsub.s32 0, %v778
  %v780 = vrot.slane %v168, %v779
  %v790 = vunpack.c.l.b16 %v160
  %v791 = vunpack.c.l.b16 %v161
  %v792 = vunpack.c.l.b16 %v162
  %v793 = vunpack.c.l.b16 %v163
  %v794 = vunpack.c.l.b16 %v164
  %v795 = vunpack.c.l.b16 %v165
  %v796 = vunpack.c.l.b16 %v166
  %v797 = vunpack.c.l.b16 %v167
  %v798 = vpack.c.b16 %v791, %v790
  %v799 = vpack.c.b16 %v793, %v792
  %v800 = vpack.c.b16 %v795, %v794
  %v801 = vpack.c.b16 %v797, %v796
  %vm806 = vcmask 523264
  %v808 = vsel %vm806, %v775, 0
  %810 = vmatprep.subr.bf16.mxu0 0
  %811 = vmatpush1.bf16.msra.mxu0 %v798
  %812 = vmatprep.subr.bf16.mxu0 0
  %813 = vmatpush1.bf16.msra.mxu0 %v799
  %814 = vmatprep.subr.bf16.mxu0 0
  %815 = vmatpush1.bf16.msra.mxu0 %v800
  %816 = vmatprep.subr.bf16.mxu0 0
  %817 = vmatpush1.bf16.msra.mxu0 %v801
  %818 = vmatprep.subr.bf16.mxu0 0
  %819 = vmatpush1.bf16.msra.mxu0 0
  %820 = vmatprep.subr.bf16.mxu0 0
  %821 = vmatpush1.bf16.msra.mxu0 0
  %822 = vmatprep.subr.bf16.mxu0 0
  %823 = vmatpush1.bf16.msra.mxu0 0
  %824 = vmatprep.subr.bf16.mxu0 0
  %825 = vmatpush1.bf16.msra.mxu0 0
  %826 = vmatprep.subr.bf16.mxu0 0
  %827 = vmatpush1.bf16.msra.mxu0 0
  %828 = vmatprep.subr.bf16.mxu0 0
  %829 = vmatpush1.bf16.msra.mxu0 0
  %830 = vmatprep.subr.bf16.mxu0 0
  %831 = vmatpush1.bf16.msra.mxu0 0
  %832 = vmatprep.subr.bf16.mxu0 0
  %833 = vmatpush1.bf16.msra.mxu0 0
  %834 = vmatprep.subr.bf16.mxu0 0
  %835 = vmatpush1.bf16.msra.mxu0 0
  %836 = vmatprep.subr.bf16.mxu0 0
  %837 = vmatpush1.bf16.msra.mxu0 0
  %838 = vmatprep.subr.bf16.mxu0 0
  %839 = vmatpush1.bf16.msra.mxu0 0
  %840 = vmatprep.subr.bf16.mxu0 0
  %841 = vmatpush1.bf16.msra.mxu0 0
  %842 = vmatprep.mubr.bf16.mxu0 0
  %843 = vmatmul.mubr.bf16.gmra.mrb[0].mxu0 %v808
  %v844 = vpop.f32.mrb[0].mxu0
  %v845 = vadd.f32 %v780, %v844
  %v846 = vpop.f32.mrb[0].mxu0
  %v847 = vpop.f32.mrb[0].mxu0
  %v848 = vadd.f32 %v780, %v847
  %v849 = vpop.f32.mrb[0].mxu0
  %850 = vdwg.mxu0
  %v851 = vadd.f32 %v845, %v649
  %v852 = vadd.f32 %v848, %v650
  %v853 = vld [vmem:[%s33] sm:$0xf]
  %v854 = vld [vmem:[%s33 + $0x4] sm:$0xf]
  %v855 = vld [vmem:[%s33 + $0x8] sm:$0xf]
  %v856 = vld [vmem:[%s33 + $0xc] sm:$0xf]
  %v857 = vld [vmem:[%s35] sm:$0x1]
  %v858 = vld [vmem:[%s37] sm:$0xf]
  %v859 = vld [vmem:[%s37 + $0x4] sm:$0xf]
  %v860 = vld [vmem:[%s37 + $0x8] sm:$0xf]
  %v861 = vld [vmem:[%s37 + $0xc] sm:$0xf]
  %v862 = vld [vmem:[%s39] sm:$0x1]
  %v863 = vld [vmem:[%s41] sm:$0xf]
  %v864 = vld [vmem:[%s41 + $0x4] sm:$0xf]
  %v865 = vld [vmem:[%s41 + $0x8] sm:$0xf]
  %v866 = vld [vmem:[%s41 + $0xc] sm:$0xf]
  %v867 = vld [vmem:[%s43] sm:$0x1]
  %v868 = vld [vmem:[%s45] sm:$0xf]
  %v869 = vld [vmem:[%s45 + $0x4] sm:$0xf]
  %v870 = vld [vmem:[%s45 + $0x8] sm:$0xf]
  %v871 = vld [vmem:[%s45 + $0xc] sm:$0xf]
  %v872 = vld [vmem:[%s47] sm:$0x1]
  %v873 = vld [vmem:[%s49] sm:$0x1]
  %v874 = vld [vmem:[%s51] sm:$0x1]
  %v875 = vld [vmem:[%s53] sm:$0xf]
  %v876 = vld [vmem:[%s53 + $0x4] sm:$0xf]
  %v877 = vld [vmem:[%s53 + $0x8] sm:$0xf]
  %v878 = vld [vmem:[%s53 + $0xc] sm:$0xf]
  %v879 = vld [vmem:[%s55] sm:$0x1]
  %v880 = vld [vmem:[%s57] sm:$0xf]
  %v881 = vld [vmem:[%s57 + $0x4] sm:$0xf]
  %v882 = vld [vmem:[%s57 + $0x8] sm:$0xf]
  %v883 = vld [vmem:[%s57 + $0xc] sm:$0xf]
  %v884 = vld [vmem:[%s57 + $0x10] sm:$0xf]
  %v885 = vld [vmem:[%s57 + $0x14] sm:$0xf]
  %v886 = vld [vmem:[%s57 + $0x18] sm:$0xf]
  %v887 = vld [vmem:[%s57 + $0x1c] sm:$0xf]
  %v888 = vld [vmem:[%s59] sm:$0x1]
  %v889 = vpack.c.bf16 %v852, %v851
  %v891 = vlaneseq
  %v892 = vshrl.u32 %v891, 7
  %v893 = vsub.s32 0, %v892
  %v894 = vrot.slane %v857, %v893
  %v900 = vunpack.c.l.b16 %v853
  %v901 = vunpack.c.l.b16 %v854
  %v902 = vunpack.c.l.b16 %v855
  %v903 = vunpack.c.l.b16 %v856
  %v904 = vpack.c.b16 %v901, %v900
  %v905 = vpack.c.b16 %v903, %v902
  %v909 = vsel %vm190, %v889, 0
  %911 = vmatprep.subr.bf16.mxu0 0
  %912 = vmatpush1.bf16.msra.mxu0 %v904
  %913 = vmatprep.subr.bf16.mxu0 0
  %914 = vmatpush1.bf16.msra.mxu0 %v905
  %915 = vmatprep.subr.bf16.mxu0 0
  %916 = vmatpush1.bf16.msra.mxu0 0
  %917 = vmatprep.subr.bf16.mxu0 0
  %918 = vmatpush1.bf16.msra.mxu0 0
  %919 = vmatprep.subr.bf16.mxu0 0
  %920 = vmatpush1.bf16.msra.mxu0 0
  %921 = vmatprep.subr.bf16.mxu0 0
  %922 = vmatpush1.bf16.msra.mxu0 0
  %923 = vmatprep.subr.bf16.mxu0 0
  %924 = vmatpush1.bf16.msra.mxu0 0
  %925 = vmatprep.subr.bf16.mxu0 0
  %926 = vmatpush1.bf16.msra.mxu0 0
  %927 = vmatprep.subr.bf16.mxu0 0
  %928 = vmatpush1.bf16.msra.mxu0 0
  %929 = vmatprep.subr.bf16.mxu0 0
  %930 = vmatpush1.bf16.msra.mxu0 0
  %931 = vmatprep.subr.bf16.mxu0 0
  %932 = vmatpush1.bf16.msra.mxu0 0
  %933 = vmatprep.subr.bf16.mxu0 0
  %934 = vmatpush1.bf16.msra.mxu0 0
  %935 = vmatprep.subr.bf16.mxu0 0
  %936 = vmatpush1.bf16.msra.mxu0 0
  %937 = vmatprep.subr.bf16.mxu0 0
  %938 = vmatpush1.bf16.msra.mxu0 0
  %939 = vmatprep.subr.bf16.mxu0 0
  %940 = vmatpush1.bf16.msra.mxu0 0
  %941 = vmatprep.subr.bf16.mxu0 0
  %942 = vmatpush1.bf16.msra.mxu0 0
  %943 = vmatprep.mubr.bf16.mxu0 0
  %944 = vmatmul.mubr.bf16.gmra.mrb[0].mxu0 %v909
  %v945 = vpop.f32.mrb[0].mxu0
  %v946 = vadd.f32 %v894, %v945
  %v947 = vpop.f32.mrb[0].mxu0
  %v948 = vpop.f32.mrb[0].mxu0
  %v949 = vadd.f32 %v894, %v948
  %v950 = vpop.f32.mrb[0].mxu0
  %951 = vdwg.mxu0
  %v952 = vmul.f32 %v946, 0.35355338
  %v953 = vmul.f32 %v949, 0.35355338
  %v955 = vlaneseq
  %v956 = vshrl.u32 %v955, 7
  %v957 = vsub.s32 0, %v956
  %v958 = vrot.slane %v862, %v957
  %v964 = vunpack.c.l.b16 %v858
  %v965 = vunpack.c.l.b16 %v859
  %v966 = vunpack.c.l.b16 %v860
  %v967 = vunpack.c.l.b16 %v861
  %v968 = vpack.c.b16 %v965, %v964
  %v969 = vpack.c.b16 %v967, %v966
  %972 = vmatprep.subr.bf16.mxu0 0
  %973 = vmatpush1.bf16.msra.mxu0 %v968
  %974 = vmatprep.subr.bf16.mxu0 0
  %975 = vmatpush1.bf16.msra.mxu0 %v969
  %976 = vmatprep.subr.bf16.mxu0 0
  %977 = vmatpush1.bf16.msra.mxu0 0
  %978 = vmatprep.subr.bf16.mxu0 0
  %979 = vmatpush1.bf16.msra.mxu0 0
  %980 = vmatprep.subr.bf16.mxu0 0
  %981 = vmatpush1.bf16.msra.mxu0 0
  %982 = vmatprep.subr.bf16.mxu0 0
  %983 = vmatpush1.bf16.msra.mxu0 0
  %984 = vmatprep.subr.bf16.mxu0 0
  %985 = vmatpush1.bf16.msra.mxu0 0
  %986 = vmatprep.subr.bf16.mxu0 0
  %987 = vmatpush1.bf16.msra.mxu0 0
  %988 = vmatprep.subr.bf16.mxu0 0
  %989 = vmatpush1.bf16.msra.mxu0 0
  %990 = vmatprep.subr.bf16.mxu0 0
  %991 = vmatpush1.bf16.msra.mxu0 0
  %992 = vmatprep.subr.bf16.mxu0 0
  %993 = vmatpush1.bf16.msra.mxu0 0
  %994 = vmatprep.subr.bf16.mxu0 0
  %995 = vmatpush1.bf16.msra.mxu0 0
  %996 = vmatprep.subr.bf16.mxu0 0
  %997 = vmatpush1.bf16.msra.mxu0 0
  %998 = vmatprep.subr.bf16.mxu0 0
  %999 = vmatpush1.bf16.msra.mxu0 0
  %1000 = vmatprep.subr.bf16.mxu0 0
  %1001 = vmatpush1.bf16.msra.mxu0 0
  %1002 = vmatprep.subr.bf16.mxu0 0
  %1003 = vmatpush1.bf16.msra.mxu0 0
  %1004 = vmatprep.mubr.bf16.mxu0 0
  %1005 = vmatmul.mubr.bf16.gmra.mrb[0].mxu0 %v909
  %v1006 = vpop.f32.mrb[0].mxu0
  %v1007 = vadd.f32 %v958, %v1006
  %v1008 = vpop.f32.mrb[0].mxu0
  %v1009 = vpop.f32.mrb[0].mxu0
  %v1010 = vadd.f32 %v958, %v1009
  %v1011 = vpop.f32.mrb[0].mxu0
  %1012 = vdwg.mxu0
  %v1014 = vlaneseq
  %v1015 = vshrl.u32 %v1014, 7
  %v1016 = vsub.s32 0, %v1015
  %v1017 = vrot.slane %v867, %v1016
  %v1023 = vunpack.c.l.b16 %v863
  %v1024 = vunpack.c.l.b16 %v864
  %v1025 = vunpack.c.l.b16 %v865
  %v1026 = vunpack.c.l.b16 %v866
  %v1027 = vpack.c.b16 %v1024, %v1023
  %v1028 = vpack.c.b16 %v1026, %v1025
  %1031 = vmatprep.subr.bf16.mxu0 0
  %1032 = vmatpush1.bf16.msra.mxu0 %v1027
  %1033 = vmatprep.subr.bf16.mxu0 0
  %1034 = vmatpush1.bf16.msra.mxu0 %v1028
  %1035 = vmatprep.subr.bf16.mxu0 0
  %1036 = vmatpush1.bf16.msra.mxu0 0
  %1037 = vmatprep.subr.bf16.mxu0 0
  %1038 = vmatpush1.bf16.msra.mxu0 0
  %1039 = vmatprep.subr.bf16.mxu0 0
  %1040 = vmatpush1.bf16.msra.mxu0 0
  %1041 = vmatprep.subr.bf16.mxu0 0
  %1042 = vmatpush1.bf16.msra.mxu0 0
  %1043 = vmatprep.subr.bf16.mxu0 0
  %1044 = vmatpush1.bf16.msra.mxu0 0
  %1045 = vmatprep.subr.bf16.mxu0 0
  %1046 = vmatpush1.bf16.msra.mxu0 0
  %1047 = vmatprep.subr.bf16.mxu0 0
  %1048 = vmatpush1.bf16.msra.mxu0 0
  %1049 = vmatprep.subr.bf16.mxu0 0
  %1050 = vmatpush1.bf16.msra.mxu0 0
  %1051 = vmatprep.subr.bf16.mxu0 0
  %1052 = vmatpush1.bf16.msra.mxu0 0
  %1053 = vmatprep.subr.bf16.mxu0 0
  %1054 = vmatpush1.bf16.msra.mxu0 0
  %1055 = vmatprep.subr.bf16.mxu0 0
  %1056 = vmatpush1.bf16.msra.mxu0 0
  %1057 = vmatprep.subr.bf16.mxu0 0
  %1058 = vmatpush1.bf16.msra.mxu0 0
  %1059 = vmatprep.subr.bf16.mxu0 0
  %1060 = vmatpush1.bf16.msra.mxu0 0
  %1061 = vmatprep.subr.bf16.mxu0 0
  %1062 = vmatpush1.bf16.msra.mxu0 0
  %1063 = vmatprep.mubr.bf16.mxu0 0
  %1064 = vmatmul.mubr.bf16.gmra.mrb[0].mxu0 %v909
  %v1065 = vpop.f32.mrb[0].mxu0
  %v1066 = vadd.f32 %v1017, %v1065
  %v1067 = vpop.f32.mrb[0].mxu0
  %v1068 = vpop.f32.mrb[0].mxu0
  %v1069 = vadd.f32 %v1017, %v1068
  %v1070 = vpop.f32.mrb[0].mxu0
  %1071 = vdwg.mxu0
  %1073 = vrot.lane.b32.xlu0 %v952, 120
  %v1074 = vpop.permute.xlu0 %1073
  %1076 = vrot.lane.b32.xlu0 %v952, 112
  %v1077 = vpop.permute.xlu0 %1076
  %1079 = vrot.lane.b32.xlu0 %v952, 104
  %v1080 = vpop.permute.xlu0 %1079
  %1083 = vrot.lane.b32.xlu0 %v953, 120
  %v1084 = vpop.permute.xlu0 %1083
  %1086 = vrot.lane.b32.xlu0 %v953, 112
  %v1087 = vpop.permute.xlu0 %1086
  %1089 = vrot.lane.b32.xlu0 %v953, 104
  %v1090 = vpop.permute.xlu0 %1089
  %v1092 = vpack.c.bf16 %v952, %v952
  %v1093 = vpack.c.bf16 %v1074, %v1074
  %v1094 = vpack.c.bf16 %v1077, %v1077
  %v1095 = vpack.c.bf16 %v1080, %v1080
  %v1096 = vpack.c.bf16 %v953, %v953
  %v1097 = vpack.c.bf16 %v1084, %v1084
  %v1098 = vpack.c.bf16 %v1087, %v1087
  %v1099 = vpack.c.bf16 %v1090, %v1090
  %1101 = vrot.lane.b32.xlu0 %v1007, 120
  %v1102 = vpop.permute.xlu0 %1101
  %1104 = vrot.lane.b32.xlu0 %v1007, 112
  %v1105 = vpop.permute.xlu0 %1104
  %1107 = vrot.lane.b32.xlu0 %v1007, 104
  %v1108 = vpop.permute.xlu0 %1107
  %1111 = vrot.lane.b32.xlu0 %v1010, 120
  %v1112 = vpop.permute.xlu0 %1111
  %1114 = vrot.lane.b32.xlu0 %v1010, 112
  %v1115 = vpop.permute.xlu0 %1114
  %1117 = vrot.lane.b32.xlu0 %v1010, 104
  %v1118 = vpop.permute.xlu0 %1117
  %v1120 = vpack.c.bf16 %v1007, %v1007
  %v1121 = vpack.c.bf16 %v1102, %v1102
  %v1122 = vpack.c.bf16 %v1105, %v1105
  %v1123 = vpack.c.bf16 %v1108, %v1108
  %v1124 = vpack.c.bf16 %v1010, %v1010
  %v1125 = vpack.c.bf16 %v1112, %v1112
  %v1126 = vpack.c.bf16 %v1115, %v1115
  %v1127 = vpack.c.bf16 %v1118, %v1118
  %1129 = vrot.lane.b32.xlu0 %v1066, 120
  %v1130 = vpop.permute.xlu0 %1129
  %1132 = vrot.lane.b32.xlu0 %v1066, 112
  %v1133 = vpop.permute.xlu0 %1132
  %1135 = vrot.lane.b32.xlu0 %v1066, 104
  %v1136 = vpop.permute.xlu0 %1135
  %1139 = vrot.lane.b32.xlu0 %v1069, 120
  %v1140 = vpop.permute.xlu0 %1139
  %1142 = vrot.lane.b32.xlu0 %v1069, 112
  %v1143 = vpop.permute.xlu0 %1142
  %1145 = vrot.lane.b32.xlu0 %v1069, 104
  %v1146 = vpop.permute.xlu0 %1145
  %v1148 = vpack.c.bf16 %v1066, %v1066
  %v1149 = vpack.c.bf16 %v1130, %v1130
  %v1150 = vpack.c.bf16 %v1133, %v1133
  %v1151 = vpack.c.bf16 %v1136, %v1136
  %v1152 = vpack.c.bf16 %v1069, %v1069
  %v1153 = vpack.c.bf16 %v1140, %v1140
  %v1154 = vpack.c.bf16 %v1143, %v1143
  %v1155 = vpack.c.bf16 %v1146, %v1146
  %vm1156 = vcmask 64512
  %v1158 = vsel %vm1156, %v1092, 0
  %v1161 = vsel %vm1156, %v1120, 0
  %1163 = vmatprep.subr.bf16.mxu0 0
  %1164 = vmatpush1.bf16.xpose.msra.mxu0 %v1161
  %1165 = vmatprep.subr.bf16.mxu0 0
  %1166 = vmatpush1.bf16.xpose.msra.mxu0 0
  %1167 = vmatprep.subr.bf16.mxu0 0
  %1168 = vmatpush1.bf16.xpose.msra.mxu0 0
  %1169 = vmatprep.subr.bf16.mxu0 0
  %1170 = vmatpush1.bf16.xpose.msra.mxu0 0
  %1171 = vmatprep.subr.bf16.mxu0 0
  %1172 = vmatpush1.bf16.xpose.msra.mxu0 0
  %1173 = vmatprep.subr.bf16.mxu0 0
  %1174 = vmatpush1.bf16.xpose.msra.mxu0 0
  %1175 = vmatprep.subr.bf16.mxu0 0
  %1176 = vmatpush1.bf16.xpose.msra.mxu0 0
  %1177 = vmatprep.subr.bf16.mxu0 0
  %1178 = vmatpush1.bf16.xpose.msra.mxu0 0
  %1179 = vmatprep.subr.bf16.mxu0 0
  %1180 = vmatpush1.bf16.xpose.msra.mxu0 0
  %1181 = vmatprep.subr.bf16.mxu0 0
  %1182 = vmatpush1.bf16.xpose.msra.mxu0 0
  %1183 = vmatprep.subr.bf16.mxu0 0
  %1184 = vmatpush1.bf16.xpose.msra.mxu0 0
  %1185 = vmatprep.subr.bf16.mxu0 0
  %1186 = vmatpush1.bf16.xpose.msra.mxu0 0
  %1187 = vmatprep.subr.bf16.mxu0 0
  %1188 = vmatpush1.bf16.xpose.msra.mxu0 0
  %1189 = vmatprep.subr.bf16.mxu0 0
  %1190 = vmatpush1.bf16.xpose.msra.mxu0 0
  %1191 = vmatprep.subr.bf16.mxu0 0
  %1192 = vmatpush1.bf16.xpose.msra.mxu0 0
  %1193 = vmatprep.subr.bf16.mxu0 0
  %1194 = vmatpush1.bf16.xpose.msra.mxu0 0
  %1195 = vmatprep.mubr.bf16.mxu0 0
  %1196 = vmatmul.mubr.bf16.gmra.mrb[0].mxu0 %v1158
  %v1197 = vpop.f32.mrb[0].mxu0
  %v1198 = vadd.f32 0.0, %v1197
  %v1199 = vpop.f32.mrb[0].mxu0
  %v1200 = vpop.f32.mrb[0].mxu0
  %v1201 = vpop.f32.mrb[0].mxu0
  %1202 = vdwg.mxu0
  %v1204 = vsel %vm1156, %v1093, 0
  %v1207 = vsel %vm1156, %v1121, 0
  %1209 = vmatprep.subr.bf16.mxu0 0
  %1210 = vmatpush1.bf16.xpose.msra.mxu0 %v1207
  %1211 = vmatprep.subr.bf16.mxu0 0
  %1212 = vmatpush1.bf16.xpose.msra.mxu0 0
  %1213 = vmatprep.subr.bf16.mxu0 0
  %1214 = vmatpush1.bf16.xpose.msra.mxu0 0
  %1215 = vmatprep.subr.bf16.mxu0 0
  %1216 = vmatpush1.bf16.xpose.msra.mxu0 0
  %1217 = vmatprep.subr.bf16.mxu0 0
  %1218 = vmatpush1.bf16.xpose.msra.mxu0 0
  %1219 = vmatprep.subr.bf16.mxu0 0
  %1220 = vmatpush1.bf16.xpose.msra.mxu0 0
  %1221 = vmatprep.subr.bf16.mxu0 0
  %1222 = vmatpush1.bf16.xpose.msra.mxu0 0
  %1223 = vmatprep.subr.bf16.mxu0 0
  %1224 = vmatpush1.bf16.xpose.msra.mxu0 0
  %1225 = vmatprep.subr.bf16.mxu0 0
  %1226 = vmatpush1.bf16.xpose.msra.mxu0 0
  %1227 = vmatprep.subr.bf16.mxu0 0
  %1228 = vmatpush1.bf16.xpose.msra.mxu0 0
  %1229 = vmatprep.subr.bf16.mxu0 0
  %1230 = vmatpush1.bf16.xpose.msra.mxu0 0
  %1231 = vmatprep.subr.bf16.mxu0 0
  %1232 = vmatpush1.bf16.xpose.msra.mxu0 0
  %1233 = vmatprep.subr.bf16.mxu0 0
  %1234 = vmatpush1.bf16.xpose.msra.mxu0 0
  %1235 = vmatprep.subr.bf16.mxu0 0
  %1236 = vmatpush1.bf16.xpose.msra.mxu0 0
  %1237 = vmatprep.subr.bf16.mxu0 0
  %1238 = vmatpush1.bf16.xpose.msra.mxu0 0
  %1239 = vmatprep.subr.bf16.mxu0 0
  %1240 = vmatpush1.bf16.xpose.msra.mxu0 0
  %1241 = vmatprep.mubr.bf16.mxu0 0
  %1242 = vmatmul.mubr.bf16.gmra.mrb[0].mxu0 %v1204
  %v1243 = vpop.f32.mrb[0].mxu0
  %v1244 = vadd.f32 0.0, %v1243
  %v1245 = vpop.f32.mrb[0].mxu0
  %v1246 = vpop.f32.mrb[0].mxu0
  %v1247 = vpop.f32.mrb[0].mxu0
  %1248 = vdwg.mxu0
  %v1250 = vsel %vm1156, %v1094, 0
  %v1253 = vsel %vm1156, %v1122, 0
  %1255 = vmatprep.subr.bf16.mxu0 0
  %1256 = vmatpush1.bf16.xpose.msra.mxu0 %v1253
  %1257 = vmatprep.subr.bf16.mxu0 0
  %1258 = vmatpush1.bf16.xpose.msra.mxu0 0
  %1259 = vmatprep.subr.bf16.mxu0 0
  %1260 = vmatpush1.bf16.xpose.msra.mxu0 0
  %1261 = vmatprep.subr.bf16.mxu0 0
  %1262 = vmatpush1.bf16.xpose.msra.mxu0 0
  %1263 = vmatprep.subr.bf16.mxu0 0
  %1264 = vmatpush1.bf16.xpose.msra.mxu0 0
  %1265 = vmatprep.subr.bf16.mxu0 0
  %1266 = vmatpush1.bf16.xpose.msra.mxu0 0
  %1267 = vmatprep.subr.bf16.mxu0 0
  %1268 = vmatpush1.bf16.xpose.msra.mxu0 0
  %1269 = vmatprep.subr.bf16.mxu0 0
  %1270 = vmatpush1.bf16.xpose.msra.mxu0 0
  %1271 = vmatprep.subr.bf16.mxu0 0
  %1272 = vmatpush1.bf16.xpose.msra.mxu0 0
  %1273 = vmatprep.subr.bf16.mxu0 0
  %1274 = vmatpush1.bf16.xpose.msra.mxu0 0
  %1275 = vmatprep.subr.bf16.mxu0 0
  %1276 = vmatpush1.bf16.xpose.msra.mxu0 0
  %1277 = vmatprep.subr.bf16.mxu0 0
  %1278 = vmatpush1.bf16.xpose.msra.mxu0 0
  %1279 = vmatprep.subr.bf16.mxu0 0
  %1280 = vmatpush1.bf16.xpose.msra.mxu0 0
  %1281 = vmatprep.subr.bf16.mxu0 0
  %1282 = vmatpush1.bf16.xpose.msra.mxu0 0
  %1283 = vmatprep.subr.bf16.mxu0 0
  %1284 = vmatpush1.bf16.xpose.msra.mxu0 0
  %1285 = vmatprep.subr.bf16.mxu0 0
  %1286 = vmatpush1.bf16.xpose.msra.mxu0 0
  %1287 = vmatprep.mubr.bf16.mxu0 0
  %1288 = vmatmul.mubr.bf16.gmra.mrb[0].mxu0 %v1250
  %v1289 = vpop.f32.mrb[0].mxu0
  %v1290 = vadd.f32 0.0, %v1289
  %v1291 = vpop.f32.mrb[0].mxu0
  %v1292 = vpop.f32.mrb[0].mxu0
  %v1293 = vpop.f32.mrb[0].mxu0
  %1294 = vdwg.mxu0
  %v1296 = vsel %vm1156, %v1095, 0
  %v1299 = vsel %vm1156, %v1123, 0
  %1301 = vmatprep.subr.bf16.mxu0 0
  %1302 = vmatpush1.bf16.xpose.msra.mxu0 %v1299
  %1303 = vmatprep.subr.bf16.mxu0 0
  %1304 = vmatpush1.bf16.xpose.msra.mxu0 0
  %1305 = vmatprep.subr.bf16.mxu0 0
  %1306 = vmatpush1.bf16.xpose.msra.mxu0 0
  %1307 = vmatprep.subr.bf16.mxu0 0
  %1308 = vmatpush1.bf16.xpose.msra.mxu0 0
  %1309 = vmatprep.subr.bf16.mxu0 0
  %1310 = vmatpush1.bf16.xpose.msra.mxu0 0
  %1311 = vmatprep.subr.bf16.mxu0 0
  %1312 = vmatpush1.bf16.xpose.msra.mxu0 0
  %1313 = vmatprep.subr.bf16.mxu0 0
  %1314 = vmatpush1.bf16.xpose.msra.mxu0 0
  %1315 = vmatprep.subr.bf16.mxu0 0
  %1316 = vmatpush1.bf16.xpose.msra.mxu0 0
  %1317 = vmatprep.subr.bf16.mxu0 0
  %1318 = vmatpush1.bf16.xpose.msra.mxu0 0
  %1319 = vmatprep.subr.bf16.mxu0 0
  %1320 = vmatpush1.bf16.xpose.msra.mxu0 0
  %1321 = vmatprep.subr.bf16.mxu0 0
  %1322 = vmatpush1.bf16.xpose.msra.mxu0 0
  %1323 = vmatprep.subr.bf16.mxu0 0
  %1324 = vmatpush1.bf16.xpose.msra.mxu0 0
  %1325 = vmatprep.subr.bf16.mxu0 0
  %1326 = vmatpush1.bf16.xpose.msra.mxu0 0
  %1327 = vmatprep.subr.bf16.mxu0 0
  %1328 = vmatpush1.bf16.xpose.msra.mxu0 0
  %1329 = vmatprep.subr.bf16.mxu0 0
  %1330 = vmatpush1.bf16.xpose.msra.mxu0 0
  %1331 = vmatprep.subr.bf16.mxu0 0
  %1332 = vmatpush1.bf16.xpose.msra.mxu0 0
  %1333 = vmatprep.mubr.bf16.mxu0 0
  %1334 = vmatmul.mubr.bf16.gmra.mrb[0].mxu0 %v1296
  %v1335 = vpop.f32.mrb[0].mxu0
  %v1336 = vadd.f32 0.0, %v1335
  %v1337 = vpop.f32.mrb[0].mxu0
  %v1338 = vpop.f32.mrb[0].mxu0
  %v1339 = vpop.f32.mrb[0].mxu0
  %1340 = vdwg.mxu0
  %v1342 = vsel %vm1156, %v1096, 0
  %v1345 = vsel %vm1156, %v1124, 0
  %1347 = vmatprep.subr.bf16.mxu0 0
  %1348 = vmatpush1.bf16.xpose.msra.mxu0 %v1345
  %1349 = vmatprep.subr.bf16.mxu0 0
  %1350 = vmatpush1.bf16.xpose.msra.mxu0 0
  %1351 = vmatprep.subr.bf16.mxu0 0
  %1352 = vmatpush1.bf16.xpose.msra.mxu0 0
  %1353 = vmatprep.subr.bf16.mxu0 0
  %1354 = vmatpush1.bf16.xpose.msra.mxu0 0
  %1355 = vmatprep.subr.bf16.mxu0 0
  %1356 = vmatpush1.bf16.xpose.msra.mxu0 0
  %1357 = vmatprep.subr.bf16.mxu0 0
  %1358 = vmatpush1.bf16.xpose.msra.mxu0 0
  %1359 = vmatprep.subr.bf16.mxu0 0
  %1360 = vmatpush1.bf16.xpose.msra.mxu0 0
  %1361 = vmatprep.subr.bf16.mxu0 0
  %1362 = vmatpush1.bf16.xpose.msra.mxu0 0
  %1363 = vmatprep.subr.bf16.mxu0 0
  %1364 = vmatpush1.bf16.xpose.msra.mxu0 0
  %1365 = vmatprep.subr.bf16.mxu0 0
  %1366 = vmatpush1.bf16.xpose.msra.mxu0 0
  %1367 = vmatprep.subr.bf16.mxu0 0
  %1368 = vmatpush1.bf16.xpose.msra.mxu0 0
  %1369 = vmatprep.subr.bf16.mxu0 0
  %1370 = vmatpush1.bf16.xpose.msra.mxu0 0
  %1371 = vmatprep.subr.bf16.mxu0 0
  %1372 = vmatpush1.bf16.xpose.msra.mxu0 0
  %1373 = vmatprep.subr.bf16.mxu0 0
  %1374 = vmatpush1.bf16.xpose.msra.mxu0 0
  %1375 = vmatprep.subr.bf16.mxu0 0
  %1376 = vmatpush1.bf16.xpose.msra.mxu0 0
  %1377 = vmatprep.subr.bf16.mxu0 0
  %1378 = vmatpush1.bf16.xpose.msra.mxu0 0
  %1379 = vmatprep.mubr.bf16.mxu0 0
  %1380 = vmatmul.mubr.bf16.gmra.mrb[0].mxu0 %v1342
  %v1381 = vpop.f32.mrb[0].mxu0
  %v1382 = vadd.f32 0.0, %v1381
  %v1383 = vpop.f32.mrb[0].mxu0
  %v1384 = vpop.f32.mrb[0].mxu0
  %v1385 = vpop.f32.mrb[0].mxu0
  %1386 = vdwg.mxu0
  %v1388 = vsel %vm1156, %v1097, 0
  %v1391 = vsel %vm1156, %v1125, 0
  %1393 = vmatprep.subr.bf16.mxu0 0
  %1394 = vmatpush1.bf16.xpose.msra.mxu0 %v1391
  %1395 = vmatprep.subr.bf16.mxu0 0
  %1396 = vmatpush1.bf16.xpose.msra.mxu0 0
  %1397 = vmatprep.subr.bf16.mxu0 0
  %1398 = vmatpush1.bf16.xpose.msra.mxu0 0
  %1399 = vmatprep.subr.bf16.mxu0 0
  %1400 = vmatpush1.bf16.xpose.msra.mxu0 0
  %1401 = vmatprep.subr.bf16.mxu0 0
  %1402 = vmatpush1.bf16.xpose.msra.mxu0 0
  %1403 = vmatprep.subr.bf16.mxu0 0
  %1404 = vmatpush1.bf16.xpose.msra.mxu0 0
  %1405 = vmatprep.subr.bf16.mxu0 0
  %1406 = vmatpush1.bf16.xpose.msra.mxu0 0
  %1407 = vmatprep.subr.bf16.mxu0 0
  %1408 = vmatpush1.bf16.xpose.msra.mxu0 0
  %1409 = vmatprep.subr.bf16.mxu0 0
  %1410 = vmatpush1.bf16.xpose.msra.mxu0 0
  %1411 = vmatprep.subr.bf16.mxu0 0
  %1412 = vmatpush1.bf16.xpose.msra.mxu0 0
  %1413 = vmatprep.subr.bf16.mxu0 0
  %1414 = vmatpush1.bf16.xpose.msra.mxu0 0
  %1415 = vmatprep.subr.bf16.mxu0 0
  %1416 = vmatpush1.bf16.xpose.msra.mxu0 0
  %1417 = vmatprep.subr.bf16.mxu0 0
  %1418 = vmatpush1.bf16.xpose.msra.mxu0 0
  %1419 = vmatprep.subr.bf16.mxu0 0
  %1420 = vmatpush1.bf16.xpose.msra.mxu0 0
  %1421 = vmatprep.subr.bf16.mxu0 0
  %1422 = vmatpush1.bf16.xpose.msra.mxu0 0
  %1423 = vmatprep.subr.bf16.mxu0 0
  %1424 = vmatpush1.bf16.xpose.msra.mxu0 0
  %1425 = vmatprep.mubr.bf16.mxu0 0
  %1426 = vmatmul.mubr.bf16.gmra.mrb[0].mxu0 %v1388
  %v1427 = vpop.f32.mrb[0].mxu0
  %v1428 = vadd.f32 0.0, %v1427
  %v1429 = vpop.f32.mrb[0].mxu0
  %v1430 = vpop.f32.mrb[0].mxu0
  %v1431 = vpop.f32.mrb[0].mxu0
  %1432 = vdwg.mxu0
  %v1434 = vsel %vm1156, %v1098, 0
  %v1437 = vsel %vm1156, %v1126, 0
  %1439 = vmatprep.subr.bf16.mxu0 0
  %1440 = vmatpush1.bf16.xpose.msra.mxu0 %v1437
  %1441 = vmatprep.subr.bf16.mxu0 0
  %1442 = vmatpush1.bf16.xpose.msra.mxu0 0
  %1443 = vmatprep.subr.bf16.mxu0 0
  %1444 = vmatpush1.bf16.xpose.msra.mxu0 0
  %1445 = vmatprep.subr.bf16.mxu0 0
  %1446 = vmatpush1.bf16.xpose.msra.mxu0 0
  %1447 = vmatprep.subr.bf16.mxu0 0
  %1448 = vmatpush1.bf16.xpose.msra.mxu0 0
  %1449 = vmatprep.subr.bf16.mxu0 0
  %1450 = vmatpush1.bf16.xpose.msra.mxu0 0
  %1451 = vmatprep.subr.bf16.mxu0 0
  %1452 = vmatpush1.bf16.xpose.msra.mxu0 0
  %1453 = vmatprep.subr.bf16.mxu0 0
  %1454 = vmatpush1.bf16.xpose.msra.mxu0 0
  %1455 = vmatprep.subr.bf16.mxu0 0
  %1456 = vmatpush1.bf16.xpose.msra.mxu0 0
  %1457 = vmatprep.subr.bf16.mxu0 0
  %1458 = vmatpush1.bf16.xpose.msra.mxu0 0
  %1459 = vmatprep.subr.bf16.mxu0 0
  %1460 = vmatpush1.bf16.xpose.msra.mxu0 0
  %1461 = vmatprep.subr.bf16.mxu0 0
  %1462 = vmatpush1.bf16.xpose.msra.mxu0 0
  %1463 = vmatprep.subr.bf16.mxu0 0
  %1464 = vmatpush1.bf16.xpose.msra.mxu0 0
  %1465 = vmatprep.subr.bf16.mxu0 0
  %1466 = vmatpush1.bf16.xpose.msra.mxu0 0
  %1467 = vmatprep.subr.bf16.mxu0 0
  %1468 = vmatpush1.bf16.xpose.msra.mxu0 0
  %1469 = vmatprep.subr.bf16.mxu0 0
  %1470 = vmatpush1.bf16.xpose.msra.mxu0 0
  %1471 = vmatprep.mubr.bf16.mxu0 0
  %1472 = vmatmul.mubr.bf16.gmra.mrb[0].mxu0 %v1434
  %v1473 = vpop.f32.mrb[0].mxu0
  %v1474 = vadd.f32 0.0, %v1473
  %v1475 = vpop.f32.mrb[0].mxu0
  %v1476 = vpop.f32.mrb[0].mxu0
  %v1477 = vpop.f32.mrb[0].mxu0
  %1478 = vdwg.mxu0
  %v1480 = vsel %vm1156, %v1099, 0
  %v1483 = vsel %vm1156, %v1127, 0
  %1485 = vmatprep.subr.bf16.mxu0 0
  %1486 = vmatpush1.bf16.xpose.msra.mxu0 %v1483
  %1487 = vmatprep.subr.bf16.mxu0 0
  %1488 = vmatpush1.bf16.xpose.msra.mxu0 0
  %1489 = vmatprep.subr.bf16.mxu0 0
  %1490 = vmatpush1.bf16.xpose.msra.mxu0 0
  %1491 = vmatprep.subr.bf16.mxu0 0
  %1492 = vmatpush1.bf16.xpose.msra.mxu0 0
  %1493 = vmatprep.subr.bf16.mxu0 0
  %1494 = vmatpush1.bf16.xpose.msra.mxu0 0
  %1495 = vmatprep.subr.bf16.mxu0 0
  %1496 = vmatpush1.bf16.xpose.msra.mxu0 0
  %1497 = vmatprep.subr.bf16.mxu0 0
  %1498 = vmatpush1.bf16.xpose.msra.mxu0 0
  %1499 = vmatprep.subr.bf16.mxu0 0
  %1500 = vmatpush1.bf16.xpose.msra.mxu0 0
  %1501 = vmatprep.subr.bf16.mxu0 0
  %1502 = vmatpush1.bf16.xpose.msra.mxu0 0
  %1503 = vmatprep.subr.bf16.mxu0 0
  %1504 = vmatpush1.bf16.xpose.msra.mxu0 0
  %1505 = vmatprep.subr.bf16.mxu0 0
  %1506 = vmatpush1.bf16.xpose.msra.mxu0 0
  %1507 = vmatprep.subr.bf16.mxu0 0
  %1508 = vmatpush1.bf16.xpose.msra.mxu0 0
  %1509 = vmatprep.subr.bf16.mxu0 0
  %1510 = vmatpush1.bf16.xpose.msra.mxu0 0
  %1511 = vmatprep.subr.bf16.mxu0 0
  %1512 = vmatpush1.bf16.xpose.msra.mxu0 0
  %1513 = vmatprep.subr.bf16.mxu0 0
  %1514 = vmatpush1.bf16.xpose.msra.mxu0 0
  %1515 = vmatprep.subr.bf16.mxu0 0
  %1516 = vmatpush1.bf16.xpose.msra.mxu0 0
  %1517 = vmatprep.mubr.bf16.mxu0 0
  %1518 = vmatmul.mubr.bf16.gmra.mrb[0].mxu0 %v1480
  %v1519 = vpop.f32.mrb[0].mxu0
  %v1520 = vadd.f32 0.0, %v1519
  %v1521 = vpop.f32.mrb[0].mxu0
  %v1522 = vpop.f32.mrb[0].mxu0
  %v1523 = vpop.f32.mrb[0].mxu0
  %1524 = vdwg.mxu0
  %v1525 = vsel %vm1156, %v1198, -inf
  %1526 = vmax.xlane.f32.xlu0 %v1525
  %v1527 = vpop.xlane.xlu0 %1526
  %v1528 = vsel %vm1156, %v1244, -inf
  %1529 = vmax.xlane.f32.xlu0 %v1528
  %v1530 = vpop.xlane.xlu0 %1529
  %v1531 = vsel %vm1156, %v1290, -inf
  %1532 = vmax.xlane.f32.xlu0 %v1531
  %v1533 = vpop.xlane.xlu0 %1532
  %v1534 = vsel %vm1156, %v1336, -inf
  %1535 = vmax.xlane.f32.xlu0 %v1534
  %v1536 = vpop.xlane.xlu0 %1535
  %v1537 = vsel %vm1156, %v1382, -inf
  %1538 = vmax.xlane.f32.xlu0 %v1537
  %v1539 = vpop.xlane.xlu0 %1538
  %v1540 = vsel %vm1156, %v1428, -inf
  %1541 = vmax.xlane.f32.xlu0 %v1540
  %v1542 = vpop.xlane.xlu0 %1541
  %v1543 = vsel %vm1156, %v1474, -inf
  %1544 = vmax.xlane.f32.xlu0 %v1543
  %v1545 = vpop.xlane.xlu0 %1544
  %v1546 = vsel %vm1156, %v1520, -inf
  %1547 = vmax.xlane.f32.xlu0 %v1546
  %v1548 = vpop.xlane.xlu0 %1547
  %v1549 = vsub.f32 %v1198, %v1527
  %v1550 = vsub.f32 %v1244, %v1530
  %v1551 = vsub.f32 %v1290, %v1533
  %v1552 = vsub.f32 %v1336, %v1536
  %v1553 = vsub.f32 %v1382, %v1539
  %v1554 = vsub.f32 %v1428, %v1542
  %v1555 = vsub.f32 %v1474, %v1545
  %v1556 = vsub.f32 %v1520, %v1548
  %v1557 = vmul.f32 %v1549, 1.442695
  %v1558 = vpow.pop %v1557
  %v1559 = vmul.f32 %v1550, 1.442695
  %v1560 = vpow.pop %v1559
  %v1561 = vmul.f32 %v1551, 1.442695
  %v1562 = vpow.pop %v1561
  %v1563 = vmul.f32 %v1552, 1.442695
  %v1564 = vpow.pop %v1563
  %v1565 = vmul.f32 %v1553, 1.442695
  %v1566 = vpow.pop %v1565
  %v1567 = vmul.f32 %v1554, 1.442695
  %v1568 = vpow.pop %v1567
  %v1569 = vmul.f32 %v1555, 1.442695
  %v1570 = vpow.pop %v1569
  %v1571 = vmul.f32 %v1556, 1.442695
  %v1572 = vpow.pop %v1571
  %v1573 = vpack.c.bf16 %v1558, %v1558
  %v1574 = vpack.c.bf16 %v1560, %v1560
  %v1575 = vpack.c.bf16 %v1562, %v1562
  %v1576 = vpack.c.bf16 %v1564, %v1564
  %v1577 = vpack.c.bf16 %v1566, %v1566
  %v1578 = vpack.c.bf16 %v1568, %v1568
  %v1579 = vpack.c.bf16 %v1570, %v1570
  %v1580 = vpack.c.bf16 %v1572, %v1572
  %v1582 = vsel %vm1156, %v1573, 0
  %vm1584 = vcmask 1043456
  %v1586 = vsel %vm1584, %v1148, 0
  %1588 = vmatprep.subr.bf16.mxu0 0
  %1589 = vmatpush1.bf16.msra.mxu0 %v1586
  %1590 = vmatprep.subr.bf16.mxu0 0
  %1591 = vmatpush1.bf16.msra.mxu0 0
  %1592 = vmatprep.subr.bf16.mxu0 0
  %1593 = vmatpush1.bf16.msra.mxu0 0
  %1594 = vmatprep.subr.bf16.mxu0 0
  %1595 = vmatpush1.bf16.msra.mxu0 0
  %1596 = vmatprep.subr.bf16.mxu0 0
  %1597 = vmatpush1.bf16.msra.mxu0 0
  %1598 = vmatprep.subr.bf16.mxu0 0
  %1599 = vmatpush1.bf16.msra.mxu0 0
  %1600 = vmatprep.subr.bf16.mxu0 0
  %1601 = vmatpush1.bf16.msra.mxu0 0
  %1602 = vmatprep.subr.bf16.mxu0 0
  %1603 = vmatpush1.bf16.msra.mxu0 0
  %1604 = vmatprep.subr.bf16.mxu0 0
  %1605 = vmatpush1.bf16.msra.mxu0 0
  %1606 = vmatprep.subr.bf16.mxu0 0
  %1607 = vmatpush1.bf16.msra.mxu0 0
  %1608 = vmatprep.subr.bf16.mxu0 0
  %1609 = vmatpush1.bf16.msra.mxu0 0
  %1610 = vmatprep.subr.bf16.mxu0 0
  %1611 = vmatpush1.bf16.msra.mxu0 0
  %1612 = vmatprep.subr.bf16.mxu0 0
  %1613 = vmatpush1.bf16.msra.mxu0 0
  %1614 = vmatprep.subr.bf16.mxu0 0
  %1615 = vmatpush1.bf16.msra.mxu0 0
  %1616 = vmatprep.subr.bf16.mxu0 0
  %1617 = vmatpush1.bf16.msra.mxu0 0
  %1618 = vmatprep.subr.bf16.mxu0 0
  %1619 = vmatpush1.bf16.msra.mxu0 0
  %1620 = vmatprep.mubr.bf16.mxu0 0
  %1621 = vmatmul.mubr.bf16.gmra.mrb[0].mxu0 %v1582
  %v1622 = vpop.f32.mrb[0].mxu0
  %v1623 = vadd.f32 0.0, %v1622
  %v1624 = vpop.f32.mrb[0].mxu0
  %v1625 = vpop.f32.mrb[0].mxu0
  %v1626 = vpop.f32.mrb[0].mxu0
  %1627 = vdwg.mxu0
  %v1629 = vsel %vm1156, %v1574, 0
  %v1632 = vsel %vm1584, %v1149, 0
  %1634 = vmatprep.subr.bf16.mxu0 0
  %1635 = vmatpush1.bf16.msra.mxu0 %v1632
  %1636 = vmatprep.subr.bf16.mxu0 0
  %1637 = vmatpush1.bf16.msra.mxu0 0
  %1638 = vmatprep.subr.bf16.mxu0 0
  %1639 = vmatpush1.bf16.msra.mxu0 0
  %1640 = vmatprep.subr.bf16.mxu0 0
  %1641 = vmatpush1.bf16.msra.mxu0 0
  %1642 = vmatprep.subr.bf16.mxu0 0
  %1643 = vmatpush1.bf16.msra.mxu0 0
  %1644 = vmatprep.subr.bf16.mxu0 0
  %1645 = vmatpush1.bf16.msra.mxu0 0
  %1646 = vmatprep.subr.bf16.mxu0 0
  %1647 = vmatpush1.bf16.msra.mxu0 0
  %1648 = vmatprep.subr.bf16.mxu0 0
  %1649 = vmatpush1.bf16.msra.mxu0 0
  %1650 = vmatprep.subr.bf16.mxu0 0
  %1651 = vmatpush1.bf16.msra.mxu0 0
  %1652 = vmatprep.subr.bf16.mxu0 0
  %1653 = vmatpush1.bf16.msra.mxu0 0
  %1654 = vmatprep.subr.bf16.mxu0 0
  %1655 = vmatpush1.bf16.msra.mxu0 0
  %1656 = vmatprep.subr.bf16.mxu0 0
  %1657 = vmatpush1.bf16.msra.mxu0 0
  %1658 = vmatprep.subr.bf16.mxu0 0
  %1659 = vmatpush1.bf16.msra.mxu0 0
  %1660 = vmatprep.subr.bf16.mxu0 0
  %1661 = vmatpush1.bf16.msra.mxu0 0
  %1662 = vmatprep.subr.bf16.mxu0 0
  %1663 = vmatpush1.bf16.msra.mxu0 0
  %1664 = vmatprep.subr.bf16.mxu0 0
  %1665 = vmatpush1.bf16.msra.mxu0 0
  %1666 = vmatprep.mubr.bf16.mxu0 0
  %1667 = vmatmul.mubr.bf16.gmra.mrb[0].mxu0 %v1629
  %v1668 = vpop.f32.mrb[0].mxu0
  %v1669 = vadd.f32 0.0, %v1668
  %v1670 = vpop.f32.mrb[0].mxu0
  %v1671 = vpop.f32.mrb[0].mxu0
  %v1672 = vpop.f32.mrb[0].mxu0
  %1673 = vdwg.mxu0
  %v1675 = vsel %vm1156, %v1575, 0
  %v1678 = vsel %vm1584, %v1150, 0
  %1680 = vmatprep.subr.bf16.mxu0 0
  %1681 = vmatpush1.bf16.msra.mxu0 %v1678
  %1682 = vmatprep.subr.bf16.mxu0 0
  %1683 = vmatpush1.bf16.msra.mxu0 0
  %1684 = vmatprep.subr.bf16.mxu0 0
  %1685 = vmatpush1.bf16.msra.mxu0 0
  %1686 = vmatprep.subr.bf16.mxu0 0
  %1687 = vmatpush1.bf16.msra.mxu0 0
  %1688 = vmatprep.subr.bf16.mxu0 0
  %1689 = vmatpush1.bf16.msra.mxu0 0
  %1690 = vmatprep.subr.bf16.mxu0 0
  %1691 = vmatpush1.bf16.msra.mxu0 0
  %1692 = vmatprep.subr.bf16.mxu0 0
  %1693 = vmatpush1.bf16.msra.mxu0 0
  %1694 = vmatprep.subr.bf16.mxu0 0
  %1695 = vmatpush1.bf16.msra.mxu0 0
  %1696 = vmatprep.subr.bf16.mxu0 0
  %1697 = vmatpush1.bf16.msra.mxu0 0
  %1698 = vmatprep.subr.bf16.mxu0 0
  %1699 = vmatpush1.bf16.msra.mxu0 0
  %1700 = vmatprep.subr.bf16.mxu0 0
  %1701 = vmatpush1.bf16.msra.mxu0 0
  %1702 = vmatprep.subr.bf16.mxu0 0
  %1703 = vmatpush1.bf16.msra.mxu0 0
  %1704 = vmatprep.subr.bf16.mxu0 0
  %1705 = vmatpush1.bf16.msra.mxu0 0
  %1706 = vmatprep.subr.bf16.mxu0 0
  %1707 = vmatpush1.bf16.msra.mxu0 0
  %1708 = vmatprep.subr.bf16.mxu0 0
  %1709 = vmatpush1.bf16.msra.mxu0 0
  %1710 = vmatprep.subr.bf16.mxu0 0
  %1711 = vmatpush1.bf16.msra.mxu0 0
  %1712 = vmatprep.mubr.bf16.mxu0 0
  %1713 = vmatmul.mubr.bf16.gmra.mrb[0].mxu0 %v1675
  %v1714 = vpop.f32.mrb[0].mxu0
  %v1715 = vadd.f32 0.0, %v1714
  %v1716 = vpop.f32.mrb[0].mxu0
  %v1717 = vpop.f32.mrb[0].mxu0
  %v1718 = vpop.f32.mrb[0].mxu0
  %1719 = vdwg.mxu0
  %v1721 = vsel %vm1156, %v1576, 0
  %v1724 = vsel %vm1584, %v1151, 0
  %1726 = vmatprep.subr.bf16.mxu0 0
  %1727 = vmatpush1.bf16.msra.mxu0 %v1724
  %1728 = vmatprep.subr.bf16.mxu0 0
  %1729 = vmatpush1.bf16.msra.mxu0 0
  %1730 = vmatprep.subr.bf16.mxu0 0
  %1731 = vmatpush1.bf16.msra.mxu0 0
  %1732 = vmatprep.subr.bf16.mxu0 0
  %1733 = vmatpush1.bf16.msra.mxu0 0
  %1734 = vmatprep.subr.bf16.mxu0 0
  %1735 = vmatpush1.bf16.msra.mxu0 0
  %1736 = vmatprep.subr.bf16.mxu0 0
  %1737 = vmatpush1.bf16.msra.mxu0 0
  %1738 = vmatprep.subr.bf16.mxu0 0
  %1739 = vmatpush1.bf16.msra.mxu0 0
  %1740 = vmatprep.subr.bf16.mxu0 0
  %1741 = vmatpush1.bf16.msra.mxu0 0
  %1742 = vmatprep.subr.bf16.mxu0 0
  %1743 = vmatpush1.bf16.msra.mxu0 0
  %1744 = vmatprep.subr.bf16.mxu0 0
  %1745 = vmatpush1.bf16.msra.mxu0 0
  %1746 = vmatprep.subr.bf16.mxu0 0
  %1747 = vmatpush1.bf16.msra.mxu0 0
  %1748 = vmatprep.subr.bf16.mxu0 0
  %1749 = vmatpush1.bf16.msra.mxu0 0
  %1750 = vmatprep.subr.bf16.mxu0 0
  %1751 = vmatpush1.bf16.msra.mxu0 0
  %1752 = vmatprep.subr.bf16.mxu0 0
  %1753 = vmatpush1.bf16.msra.mxu0 0
  %1754 = vmatprep.subr.bf16.mxu0 0
  %1755 = vmatpush1.bf16.msra.mxu0 0
  %1756 = vmatprep.subr.bf16.mxu0 0
  %1757 = vmatpush1.bf16.msra.mxu0 0
  %1758 = vmatprep.mubr.bf16.mxu0 0
  %1759 = vmatmul.mubr.bf16.gmra.mrb[0].mxu0 %v1721
  %v1760 = vpop.f32.mrb[0].mxu0
  %v1761 = vadd.f32 0.0, %v1760
  %v1762 = vpop.f32.mrb[0].mxu0
  %v1763 = vpop.f32.mrb[0].mxu0
  %v1764 = vpop.f32.mrb[0].mxu0
  %1765 = vdwg.mxu0
  %v1767 = vsel %vm1156, %v1577, 0
  %v1770 = vsel %vm1584, %v1152, 0
  %1772 = vmatprep.subr.bf16.mxu0 0
  %1773 = vmatpush1.bf16.msra.mxu0 %v1770
  %1774 = vmatprep.subr.bf16.mxu0 0
  %1775 = vmatpush1.bf16.msra.mxu0 0
  %1776 = vmatprep.subr.bf16.mxu0 0
  %1777 = vmatpush1.bf16.msra.mxu0 0
  %1778 = vmatprep.subr.bf16.mxu0 0
  %1779 = vmatpush1.bf16.msra.mxu0 0
  %1780 = vmatprep.subr.bf16.mxu0 0
  %1781 = vmatpush1.bf16.msra.mxu0 0
  %1782 = vmatprep.subr.bf16.mxu0 0
  %1783 = vmatpush1.bf16.msra.mxu0 0
  %1784 = vmatprep.subr.bf16.mxu0 0
  %1785 = vmatpush1.bf16.msra.mxu0 0
  %1786 = vmatprep.subr.bf16.mxu0 0
  %1787 = vmatpush1.bf16.msra.mxu0 0
  %1788 = vmatprep.subr.bf16.mxu0 0
  %1789 = vmatpush1.bf16.msra.mxu0 0
  %1790 = vmatprep.subr.bf16.mxu0 0
  %1791 = vmatpush1.bf16.msra.mxu0 0
  %1792 = vmatprep.subr.bf16.mxu0 0
  %1793 = vmatpush1.bf16.msra.mxu0 0
  %1794 = vmatprep.subr.bf16.mxu0 0
  %1795 = vmatpush1.bf16.msra.mxu0 0
  %1796 = vmatprep.subr.bf16.mxu0 0
  %1797 = vmatpush1.bf16.msra.mxu0 0
  %1798 = vmatprep.subr.bf16.mxu0 0
  %1799 = vmatpush1.bf16.msra.mxu0 0
  %1800 = vmatprep.subr.bf16.mxu0 0
  %1801 = vmatpush1.bf16.msra.mxu0 0
  %1802 = vmatprep.subr.bf16.mxu0 0
  %1803 = vmatpush1.bf16.msra.mxu0 0
  %1804 = vmatprep.mubr.bf16.mxu0 0
  %1805 = vmatmul.mubr.bf16.gmra.mrb[0].mxu0 %v1767
  %v1806 = vpop.f32.mrb[0].mxu0
  %v1807 = vadd.f32 0.0, %v1806
  %v1808 = vpop.f32.mrb[0].mxu0
  %v1809 = vpop.f32.mrb[0].mxu0
  %v1810 = vpop.f32.mrb[0].mxu0
  %1811 = vdwg.mxu0
  %v1813 = vsel %vm1156, %v1578, 0
  %v1816 = vsel %vm1584, %v1153, 0
  %1818 = vmatprep.subr.bf16.mxu0 0
  %1819 = vmatpush1.bf16.msra.mxu0 %v1816
  %1820 = vmatprep.subr.bf16.mxu0 0
  %1821 = vmatpush1.bf16.msra.mxu0 0
  %1822 = vmatprep.subr.bf16.mxu0 0
  %1823 = vmatpush1.bf16.msra.mxu0 0
  %1824 = vmatprep.subr.bf16.mxu0 0
  %1825 = vmatpush1.bf16.msra.mxu0 0
  %1826 = vmatprep.subr.bf16.mxu0 0
  %1827 = vmatpush1.bf16.msra.mxu0 0
  %1828 = vmatprep.subr.bf16.mxu0 0
  %1829 = vmatpush1.bf16.msra.mxu0 0
  %1830 = vmatprep.subr.bf16.mxu0 0
  %1831 = vmatpush1.bf16.msra.mxu0 0
  %1832 = vmatprep.subr.bf16.mxu0 0
  %1833 = vmatpush1.bf16.msra.mxu0 0
  %1834 = vmatprep.subr.bf16.mxu0 0
  %1835 = vmatpush1.bf16.msra.mxu0 0
  %1836 = vmatprep.subr.bf16.mxu0 0
  %1837 = vmatpush1.bf16.msra.mxu0 0
  %1838 = vmatprep.subr.bf16.mxu0 0
  %1839 = vmatpush1.bf16.msra.mxu0 0
  %1840 = vmatprep.subr.bf16.mxu0 0
  %1841 = vmatpush1.bf16.msra.mxu0 0
  %1842 = vmatprep.subr.bf16.mxu0 0
  %1843 = vmatpush1.bf16.msra.mxu0 0
  %1844 = vmatprep.subr.bf16.mxu0 0
  %1845 = vmatpush1.bf16.msra.mxu0 0
  %1846 = vmatprep.subr.bf16.mxu0 0
  %1847 = vmatpush1.bf16.msra.mxu0 0
  %1848 = vmatprep.subr.bf16.mxu0 0
  %1849 = vmatpush1.bf16.msra.mxu0 0
  %1850 = vmatprep.mubr.bf16.mxu0 0
  %1851 = vmatmul.mubr.bf16.gmra.mrb[0].mxu0 %v1813
  %v1852 = vpop.f32.mrb[0].mxu0
  %v1853 = vadd.f32 0.0, %v1852
  %v1854 = vpop.f32.mrb[0].mxu0
  %v1855 = vpop.f32.mrb[0].mxu0
  %v1856 = vpop.f32.mrb[0].mxu0
  %1857 = vdwg.mxu0
  %v1859 = vsel %vm1156, %v1579, 0
  %v1862 = vsel %vm1584, %v1154, 0
  %1864 = vmatprep.subr.bf16.mxu0 0
  %1865 = vmatpush1.bf16.msra.mxu0 %v1862
  %1866 = vmatprep.subr.bf16.mxu0 0
  %1867 = vmatpush1.bf16.msra.mxu0 0
  %1868 = vmatprep.subr.bf16.mxu0 0
  %1869 = vmatpush1.bf16.msra.mxu0 0
  %1870 = vmatprep.subr.bf16.mxu0 0
  %1871 = vmatpush1.bf16.msra.mxu0 0
  %1872 = vmatprep.subr.bf16.mxu0 0
  %1873 = vmatpush1.bf16.msra.mxu0 0
  %1874 = vmatprep.subr.bf16.mxu0 0
  %1875 = vmatpush1.bf16.msra.mxu0 0
  %1876 = vmatprep.subr.bf16.mxu0 0
  %1877 = vmatpush1.bf16.msra.mxu0 0
  %1878 = vmatprep.subr.bf16.mxu0 0
  %1879 = vmatpush1.bf16.msra.mxu0 0
  %1880 = vmatprep.subr.bf16.mxu0 0
  %1881 = vmatpush1.bf16.msra.mxu0 0
  %1882 = vmatprep.subr.bf16.mxu0 0
  %1883 = vmatpush1.bf16.msra.mxu0 0
  %1884 = vmatprep.subr.bf16.mxu0 0
  %1885 = vmatpush1.bf16.msra.mxu0 0
  %1886 = vmatprep.subr.bf16.mxu0 0
  %1887 = vmatpush1.bf16.msra.mxu0 0
  %1888 = vmatprep.subr.bf16.mxu0 0
  %1889 = vmatpush1.bf16.msra.mxu0 0
  %1890 = vmatprep.subr.bf16.mxu0 0
  %1891 = vmatpush1.bf16.msra.mxu0 0
  %1892 = vmatprep.subr.bf16.mxu0 0
  %1893 = vmatpush1.bf16.msra.mxu0 0
  %1894 = vmatprep.subr.bf16.mxu0 0
  %1895 = vmatpush1.bf16.msra.mxu0 0
  %1896 = vmatprep.mubr.bf16.mxu0 0
  %1897 = vmatmul.mubr.bf16.gmra.mrb[0].mxu0 %v1859
  %v1898 = vpop.f32.mrb[0].mxu0
  %v1899 = vadd.f32 0.0, %v1898
  %v1900 = vpop.f32.mrb[0].mxu0
  %v1901 = vpop.f32.mrb[0].mxu0
  %v1902 = vpop.f32.mrb[0].mxu0
  %1903 = vdwg.mxu0
  %v1905 = vsel %vm1156, %v1580, 0
  %v1908 = vsel %vm1584, %v1155, 0
  %1910 = vmatprep.subr.bf16.mxu0 0
  %1911 = vmatpush1.bf16.msra.mxu0 %v1908
  %1912 = vmatprep.subr.bf16.mxu0 0
  %1913 = vmatpush1.bf16.msra.mxu0 0
  %1914 = vmatprep.subr.bf16.mxu0 0
  %1915 = vmatpush1.bf16.msra.mxu0 0
  %1916 = vmatprep.subr.bf16.mxu0 0
  %1917 = vmatpush1.bf16.msra.mxu0 0
  %1918 = vmatprep.subr.bf16.mxu0 0
  %1919 = vmatpush1.bf16.msra.mxu0 0
  %1920 = vmatprep.subr.bf16.mxu0 0
  %1921 = vmatpush1.bf16.msra.mxu0 0
  %1922 = vmatprep.subr.bf16.mxu0 0
  %1923 = vmatpush1.bf16.msra.mxu0 0
  %1924 = vmatprep.subr.bf16.mxu0 0
  %1925 = vmatpush1.bf16.msra.mxu0 0
  %1926 = vmatprep.subr.bf16.mxu0 0
  %1927 = vmatpush1.bf16.msra.mxu0 0
  %1928 = vmatprep.subr.bf16.mxu0 0
  %1929 = vmatpush1.bf16.msra.mxu0 0
  %1930 = vmatprep.subr.bf16.mxu0 0
  %1931 = vmatpush1.bf16.msra.mxu0 0
  %1932 = vmatprep.subr.bf16.mxu0 0
  %1933 = vmatpush1.bf16.msra.mxu0 0
  %1934 = vmatprep.subr.bf16.mxu0 0
  %1935 = vmatpush1.bf16.msra.mxu0 0
  %1936 = vmatprep.subr.bf16.mxu0 0
  %1937 = vmatpush1.bf16.msra.mxu0 0
  %1938 = vmatprep.subr.bf16.mxu0 0
  %1939 = vmatpush1.bf16.msra.mxu0 0
  %1940 = vmatprep.subr.bf16.mxu0 0
  %1941 = vmatpush1.bf16.msra.mxu0 0
  %1942 = vmatprep.mubr.bf16.mxu0 0
  %1943 = vmatmul.mubr.bf16.gmra.mrb[0].mxu0 %v1905
  %v1944 = vpop.f32.mrb[0].mxu0
  %v1945 = vadd.f32 0.0, %v1944
  %v1946 = vpop.f32.mrb[0].mxu0
  %v1947 = vpop.f32.mrb[0].mxu0
  %v1948 = vpop.f32.mrb[0].mxu0
  %1949 = vdwg.mxu0
  %v1950 = vsel %vm1156, %v1558, 0.0
  %1951 = vadd.xlane.f32.xlu0 %v1950
  %v1952 = vpop.xlane.xlu0 %1951
  %v1953 = vsel %vm1156, %v1560, 0.0
  %1954 = vadd.xlane.f32.xlu0 %v1953
  %v1955 = vpop.xlane.xlu0 %1954
  %v1956 = vsel %vm1156, %v1562, 0.0
  %1957 = vadd.xlane.f32.xlu0 %v1956
  %v1958 = vpop.xlane.xlu0 %1957
  %v1959 = vsel %vm1156, %v1564, 0.0
  %1960 = vadd.xlane.f32.xlu0 %v1959
  %v1961 = vpop.xlane.xlu0 %1960
  %v1962 = vsel %vm1156, %v1566, 0.0
  %1963 = vadd.xlane.f32.xlu0 %v1962
  %v1964 = vpop.xlane.xlu0 %1963
  %v1965 = vsel %vm1156, %v1568, 0.0
  %1966 = vadd.xlane.f32.xlu0 %v1965
  %v1967 = vpop.xlane.xlu0 %1966
  %v1968 = vsel %vm1156, %v1570, 0.0
  %1969 = vadd.xlane.f32.xlu0 %v1968
  %v1970 = vpop.xlane.xlu0 %1969
  %v1971 = vsel %vm1156, %v1572, 0.0
  %1972 = vadd.xlane.f32.xlu0 %v1971
  %v1973 = vpop.xlane.xlu0 %1972
  %v1974 = vrcp.pop %v1952
  %v1975 = vrcp.pop %v1955
  %v1976 = vrcp.pop %v1958
  %v1977 = vrcp.pop %v1961
  %v1978 = vrcp.pop %v1964
  %v1979 = vrcp.pop %v1967
  %v1980 = vrcp.pop %v1970
  %v1981 = vrcp.pop %v1973
  %v1982 = vmul.f32 %v1623, %v1974
  %v1983 = vmul.f32 %v1669, %v1975
  %v1984 = vmul.f32 %v1715, %v1976
  %v1985 = vmul.f32 %v1761, %v1977
  %v1986 = vmul.f32 %v1807, %v1978
  %v1987 = vmul.f32 %v1853, %v1979
  %v1988 = vmul.f32 %v1899, %v1980
  %v1989 = vmul.f32 %v1945, %v1981
  %1991 = vrot.lane.b32.xlu0 %v1983, 8
  %v1992 = vpop.permute.xlu0 %1991
  %1995 = vrot.lane.b32.xlu0 %v1984, 16
  %v1996 = vpop.permute.xlu0 %1995
  %1999 = vrot.lane.b32.xlu0 %v1985, 24
  %v2000 = vpop.permute.xlu0 %1999
  %v2002 = vsel %vm1156, %v1982, %v1992
  %v2003 = vsel %vm475, %v2002, %v1996
  %vm2004 = vcmask 195584
  %v2005 = vsel %vm2004, %v2003, %v2000
  %2007 = vrot.lane.b32.xlu0 %v1987, 8
  %v2008 = vpop.permute.xlu0 %2007
  %2011 = vrot.lane.b32.xlu0 %v1988, 16
  %v2012 = vpop.permute.xlu0 %2011
  %2015 = vrot.lane.b32.xlu0 %v1989, 24
  %v2016 = vpop.permute.xlu0 %2015
  %v2018 = vsel %vm1156, %v1986, %v2008
  %v2019 = vsel %vm475, %v2018, %v2012
  %v2020 = vsel %vm2004, %v2019, %v2016
  %v2021 = vpack.c.bf16 %v2020, %v2005
  %v2023 = vlaneseq
  %v2024 = vshrl.u32 %v2023, 7
  %v2025 = vsub.s32 0, %v2024
  %v2026 = vrot.slane %v872, %v2025
  %v2032 = vunpack.c.l.b16 %v868
  %v2033 = vunpack.c.l.b16 %v869
  %v2034 = vunpack.c.l.b16 %v870
  %v2035 = vunpack.c.l.b16 %v871
  %v2036 = vpack.c.b16 %v2033, %v2032
  %v2037 = vpack.c.b16 %v2035, %v2034
  %v2041 = vsel %vm190, %v2021, 0
  %2043 = vmatprep.subr.bf16.mxu0 0
  %2044 = vmatpush1.bf16.msra.mxu0 %v2036
  %2045 = vmatprep.subr.bf16.mxu0 0
  %2046 = vmatpush1.bf16.msra.mxu0 %v2037
  %2047 = vmatprep.subr.bf16.mxu0 0
  %2048 = vmatpush1.bf16.msra.mxu0 0
  %2049 = vmatprep.subr.bf16.mxu0 0
  %2050 = vmatpush1.bf16.msra.mxu0 0
  %2051 = vmatprep.subr.bf16.mxu0 0
  %2052 = vmatpush1.bf16.msra.mxu0 0
  %2053 = vmatprep.subr.bf16.mxu0 0
  %2054 = vmatpush1.bf16.msra.mxu0 0
  %2055 = vmatprep.subr.bf16.mxu0 0
  %2056 = vmatpush1.bf16.msra.mxu0 0
  %2057 = vmatprep.subr.bf16.mxu0 0
  %2058 = vmatpush1.bf16.msra.mxu0 0
  %2059 = vmatprep.subr.bf16.mxu0 0
  %2060 = vmatpush1.bf16.msra.mxu0 0
  %2061 = vmatprep.subr.bf16.mxu0 0
  %2062 = vmatpush1.bf16.msra.mxu0 0
  %2063 = vmatprep.subr.bf16.mxu0 0
  %2064 = vmatpush1.bf16.msra.mxu0 0
  %2065 = vmatprep.subr.bf16.mxu0 0
  %2066 = vmatpush1.bf16.msra.mxu0 0
  %2067 = vmatprep.subr.bf16.mxu0 0
  %2068 = vmatpush1.bf16.msra.mxu0 0
  %2069 = vmatprep.subr.bf16.mxu0 0
  %2070 = vmatpush1.bf16.msra.mxu0 0
  %2071 = vmatprep.subr.bf16.mxu0 0
  %2072 = vmatpush1.bf16.msra.mxu0 0
  %2073 = vmatprep.subr.bf16.mxu0 0
  %2074 = vmatpush1.bf16.msra.mxu0 0
  %2075 = vmatprep.mubr.bf16.mxu0 0
  %2076 = vmatmul.mubr.bf16.gmra.mrb[0].mxu0 %v2041
  %v2077 = vpop.f32.mrb[0].mxu0
  %v2078 = vadd.f32 %v2026, %v2077
  %v2079 = vpop.f32.mrb[0].mxu0
  %v2080 = vpop.f32.mrb[0].mxu0
  %v2081 = vadd.f32 %v2026, %v2080
  %v2082 = vpop.f32.mrb[0].mxu0
  %2083 = vdwg.mxu0
  %v2084 = vadd.f32 %v2078, %v851
  %v2085 = vadd.f32 %v2081, %v852
  %v2086 = vsel %vm190, %v2084, 0.0
  %2087 = vadd.xlane.f32.xlu0 %v2086
  %v2088 = vpop.xlane.xlu0 %2087
  %v2089 = vsel %vm190, %v2085, 0.0
  %2090 = vadd.xlane.f32.xlu0 %v2089
  %v2091 = vpop.xlane.xlu0 %2090
  %v2092 = vmul.f32 %v2088, %v657
  %v2093 = vmul.f32 %v2091, %v657
  %v2094 = vsub.f32 %v2084, %v2092
  %v2095 = vsub.f32 %v2085, %v2093
  %v2096 = vmul.f32 %v2094, %v2094
  %v2097 = vmul.f32 %v2095, %v2095
  %v2098 = vsel %vm190, %v2096, 0.0
  %2099 = vadd.xlane.f32.xlu0 %v2098
  %v2100 = vpop.xlane.xlu0 %2099
  %v2101 = vsel %vm190, %v2097, 0.0
  %2102 = vadd.xlane.f32.xlu0 %v2101
  %v2103 = vpop.xlane.xlu0 %2102
  %v2104 = vmul.f32 %v2100, %v657
  %v2105 = vmul.f32 %v2103, %v657
  %v2106 = vadd.f32 %v2104, 1e-05
  %v2107 = vadd.f32 %v2105, 1e-05
  %v2108 = vrsqrt.pop %v2106
  %v2109 = vrsqrt.pop %v2107
  %v2110 = vmul.f32 %v2094, %v2108
  %v2111 = vmul.f32 %v2095, %v2109
  %v2113 = vlaneseq
  %v2114 = vshrl.u32 %v2113, 7
  %v2115 = vsub.s32 0, %v2114
  %v2116 = vrot.slane %v873, %v2115
  %v2118 = vmul.f32 %v2110, %v2116
  %v2119 = vmul.f32 %v2111, %v2116
  %v2121 = vlaneseq
  %v2122 = vshrl.u32 %v2121, 7
  %v2123 = vsub.s32 0, %v2122
  %v2124 = vrot.slane %v874, %v2123
  %v2126 = vadd.f32 %v2118, %v2124
  %v2127 = vadd.f32 %v2119, %v2124
  %v2128 = vpack.c.bf16 %v2127, %v2126
  %v2130 = vlaneseq
  %v2131 = vshrl.u32 %v2130, 7
  %v2132 = vsub.s32 0, %v2131
  %v2133 = vrot.slane %v879, %v2132
  %v2139 = vunpack.c.l.b16 %v875
  %v2140 = vunpack.c.l.b16 %v876
  %v2141 = vunpack.c.l.b16 %v877
  %v2142 = vunpack.c.l.b16 %v878
  %v2143 = vpack.c.b16 %v2140, %v2139
  %v2144 = vpack.c.b16 %v2142, %v2141
  %v2148 = vsel %vm190, %v2128, 0
  %2150 = vmatprep.subr.bf16.mxu0 0
  %2151 = vmatpush1.bf16.msra.mxu0 %v2143
  %2152 = vmatprep.subr.bf16.mxu0 0
  %2153 = vmatpush1.bf16.msra.mxu0 %v2144
  %2154 = vmatprep.subr.bf16.mxu0 0
  %2155 = vmatpush1.bf16.msra.mxu0 0
  %2156 = vmatprep.subr.bf16.mxu0 0
  %2157 = vmatpush1.bf16.msra.mxu0 0
  %2158 = vmatprep.subr.bf16.mxu0 0
  %2159 = vmatpush1.bf16.msra.mxu0 0
  %2160 = vmatprep.subr.bf16.mxu0 0
  %2161 = vmatpush1.bf16.msra.mxu0 0
  %2162 = vmatprep.subr.bf16.mxu0 0
  %2163 = vmatpush1.bf16.msra.mxu0 0
  %2164 = vmatprep.subr.bf16.mxu0 0
  %2165 = vmatpush1.bf16.msra.mxu0 0
  %2166 = vmatprep.subr.bf16.mxu0 0
  %2167 = vmatpush1.bf16.msra.mxu0 0
  %2168 = vmatprep.subr.bf16.mxu0 0
  %2169 = vmatpush1.bf16.msra.mxu0 0
  %2170 = vmatprep.subr.bf16.mxu0 0
  %2171 = vmatpush1.bf16.msra.mxu0 0
  %2172 = vmatprep.subr.bf16.mxu0 0
  %2173 = vmatpush1.bf16.msra.mxu0 0
  %2174 = vmatprep.subr.bf16.mxu0 0
  %2175 = vmatpush1.bf16.msra.mxu0 0
  %2176 = vmatprep.subr.bf16.mxu0 0
  %2177 = vmatpush1.bf16.msra.mxu0 0
  %2178 = vmatprep.subr.bf16.mxu0 0
  %2179 = vmatpush1.bf16.msra.mxu0 0
  %2180 = vmatprep.subr.bf16.mxu0 0
  %2181 = vmatpush1.bf16.msra.mxu0 0
  %2182 = vmatprep.mubr.bf16.mxu0 0
  %2183 = vmatmul.mubr.bf16.gmra.mrb[0].mxu0 %v2148
  %v2184 = vpop.f32.mrb[0].mxu0
  %v2185 = vadd.f32 %v2133, %v2184
  %v2186 = vpop.f32.mrb[0].mxu0
  %v2187 = vpop.f32.mrb[0].mxu0
  %v2188 = vadd.f32 %v2133, %v2187
  %v2189 = vpop.f32.mrb[0].mxu0
  %2190 = vdwg.mxu0
  %v2191 = vmul.f32 %v2185, 0.5
  %v2192 = vmul.f32 %v2188, 0.5
  %v2193 = vmul.f32 %v2185, %v2185
  %v2194 = vmul.f32 %v2188, %v2188
  %v2195 = vmul.f32 %v2193, %v2185
  %v2196 = vmul.f32 %v2194, %v2188
  %v2197 = vmul.f32 %v2195, 0.044715
  %v2198 = vmul.f32 %v2196, 0.044715
  %v2199 = vadd.f32 %v2185, %v2197
  %v2200 = vadd.f32 %v2188, %v2198
  %v2201 = vmul.f32 %v2199, 0.7978846
  %v2202 = vmul.f32 %v2200, 0.7978846
  %v2203 = vtanh.pop %v2201
  %v2204 = vtanh.pop %v2202
  %v2205 = vadd.f32 %v2203, 1.0
  %v2206 = vadd.f32 %v2204, 1.0
  %v2207 = vmul.f32 %v2191, %v2205
  %v2208 = vmul.f32 %v2192, %v2206
  %v2209 = vpack.c.bf16 %v2208, %v2207
  %v2211 = vlaneseq
  %v2212 = vshrl.u32 %v2211, 7
  %v2213 = vsub.s32 0, %v2212
  %v2214 = vrot.slane %v888, %v2213
  %v2224 = vunpack.c.l.b16 %v880
  %v2225 = vunpack.c.l.b16 %v881
  %v2226 = vunpack.c.l.b16 %v882
  %v2227 = vunpack.c.l.b16 %v883
  %v2228 = vunpack.c.l.b16 %v884
  %v2229 = vunpack.c.l.b16 %v885
  %v2230 = vunpack.c.l.b16 %v886
  %v2231 = vunpack.c.l.b16 %v887
  %v2232 = vpack.c.b16 %v2225, %v2224
  %v2233 = vpack.c.b16 %v2227, %v2226
  %v2234 = vpack.c.b16 %v2229, %v2228
  %v2235 = vpack.c.b16 %v2231, %v2230
  %v2241 = vsel %vm806, %v2209, 0
  %2243 = vmatprep.subr.bf16.mxu0 0
  %2244 = vmatpush1.bf16.msra.mxu0 %v2232
  %2245 = vmatprep.subr.bf16.mxu0 0
  %2246 = vmatpush1.bf16.msra.mxu0 %v2233
  %2247 = vmatprep.subr.bf16.mxu0 0
  %2248 = vmatpush1.bf16.msra.mxu0 %v2234
  %2249 = vmatprep.subr.bf16.mxu0 0
  %2250 = vmatpush1.bf16.msra.mxu0 %v2235
  %2251 = vmatprep.subr.bf16.mxu0 0
  %2252 = vmatpush1.bf16.msra.mxu0 0
  %2253 = vmatprep.subr.bf16.mxu0 0
  %2254 = vmatpush1.bf16.msra.mxu0 0
  %2255 = vmatprep.subr.bf16.mxu0 0
  %2256 = vmatpush1.bf16.msra.mxu0 0
  %2257 = vmatprep.subr.bf16.mxu0 0
  %2258 = vmatpush1.bf16.msra.mxu0 0
  %2259 = vmatprep.subr.bf16.mxu0 0
  %2260 = vmatpush1.bf16.msra.mxu0 0
  %2261 = vmatprep.subr.bf16.mxu0 0
  %2262 = vmatpush1.bf16.msra.mxu0 0
  %2263 = vmatprep.subr.bf16.mxu0 0
  %2264 = vmatpush1.bf16.msra.mxu0 0
  %2265 = vmatprep.subr.bf16.mxu0 0
  %2266 = vmatpush1.bf16.msra.mxu0 0
  %2267 = vmatprep.subr.bf16.mxu0 0
  %2268 = vmatpush1.bf16.msra.mxu0 0
  %2269 = vmatprep.subr.bf16.mxu0 0
  %2270 = vmatpush1.bf16.msra.mxu0 0
  %2271 = vmatprep.subr.bf16.mxu0 0
  %2272 = vmatpush1.bf16.msra.mxu0 0
  %2273 = vmatprep.subr.bf16.mxu0 0
  %2274 = vmatpush1.bf16.msra.mxu0 0
  %2275 = vmatprep.mubr.bf16.mxu0 0
  %2276 = vmatmul.mubr.bf16.gmra.mrb[0].mxu0 %v2241
  %v2277 = vpop.f32.mrb[0].mxu0
  %v2278 = vadd.f32 %v2214, %v2277
  %v2279 = vpop.f32.mrb[0].mxu0
  %v2280 = vpop.f32.mrb[0].mxu0
  %v2281 = vadd.f32 %v2214, %v2280
  %v2282 = vpop.f32.mrb[0].mxu0
  %2283 = vdwg.mxu0
  %v2284 = vadd.f32 %v2278, %v2084
  %v2285 = vadd.f32 %v2281, %v2085
  %s2286 = scalar_lea.vmem %s33, 16
  %v2287 = vld [vmem:[%s2286] sm:$0xf]
  %v2288 = vld [vmem:[%s2286 + $0x4] sm:$0xf]
  %v2289 = vld [vmem:[%s2286 + $0x8] sm:$0xf]
  %v2290 = vld [vmem:[%s2286 + $0xc] sm:$0xf]
  %s2291 = scalar_lea.vmem %s35, 1
  %v2292 = vld [vmem:[%s2291] sm:$0x1]
  %s2293 = scalar_lea.vmem %s37, 16
  %v2294 = vld [vmem:[%s2293] sm:$0xf]
  %v2295 = vld [vmem:[%s2293 + $0x4] sm:$0xf]
  %v2296 = vld [vmem:[%s2293 + $0x8] sm:$0xf]
  %v2297 = vld [vmem:[%s2293 + $0xc] sm:$0xf]
  %s2298 = scalar_lea.vmem %s39, 1
  %v2299 = vld [vmem:[%s2298] sm:$0x1]
  %s2300 = scalar_lea.vmem %s41, 16
  %v2301 = vld [vmem:[%s2300] sm:$0xf]
  %v2302 = vld [vmem:[%s2300 + $0x4] sm:$0xf]
  %v2303 = vld [vmem:[%s2300 + $0x8] sm:$0xf]
  %v2304 = vld [vmem:[%s2300 + $0xc] sm:$0xf]
  %s2305 = scalar_lea.vmem %s43, 1
  %v2306 = vld [vmem:[%s2305] sm:$0x1]
  %s2307 = scalar_lea.vmem %s45, 16
  %v2308 = vld [vmem:[%s2307] sm:$0xf]
  %v2309 = vld [vmem:[%s2307 + $0x4] sm:$0xf]
  %v2310 = vld [vmem:[%s2307 + $0x8] sm:$0xf]
  %v2311 = vld [vmem:[%s2307 + $0xc] sm:$0xf]
  %s2312 = scalar_lea.vmem %s47, 1
  %v2313 = vld [vmem:[%s2312] sm:$0x1]
  %s2314 = scalar_lea.vmem %s49, 1
  %v2315 = vld [vmem:[%s2314] sm:$0x1]
  %s2316 = scalar_lea.vmem %s51, 1
  %v2317 = vld [vmem:[%s2316] sm:$0x1]
  %s2318 = scalar_lea.vmem %s53, 16
  %v2319 = vld [vmem:[%s2318] sm:$0xf]
  %v2320 = vld [vmem:[%s2318 + $0x4] sm:$0xf]
  %v2321 = vld [vmem:[%s2318 + $0x8] sm:$0xf]
  %v2322 = vld [vmem:[%s2318 + $0xc] sm:$0xf]
  %s2323 = scalar_lea.vmem %s55, 1
  %v2324 = vld [vmem:[%s2323] sm:$0x1]
  %s2325 = scalar_lea.vmem %s57, 32
  %v2326 = vld [vmem:[%s2325] sm:$0xf]
  %v2327 = vld [vmem:[%s2325 + $0x4] sm:$0xf]
  %v2328 = vld [vmem:[%s2325 + $0x8] sm:$0xf]
  %v2329 = vld [vmem:[%s2325 + $0xc] sm:$0xf]
  %v2330 = vld [vmem:[%s2325 + $0x10] sm:$0xf]
  %v2331 = vld [vmem:[%s2325 + $0x14] sm:$0xf]
  %v2332 = vld [vmem:[%s2325 + $0x18] sm:$0xf]
  %v2333 = vld [vmem:[%s2325 + $0x1c] sm:$0xf]
  %s2334 = scalar_lea.vmem %s59, 1
  %v2335 = vld [vmem:[%s2334] sm:$0x1]
  %v2336 = vpack.c.bf16 %v2285, %v2284
  %v2338 = vlaneseq
  %v2339 = vshrl.u32 %v2338, 7
  %v2340 = vsub.s32 0, %v2339
  %v2341 = vrot.slane %v2292, %v2340
  %v2347 = vunpack.c.l.b16 %v2287
  %v2348 = vunpack.c.l.b16 %v2288
  %v2349 = vunpack.c.l.b16 %v2289
  %v2350 = vunpack.c.l.b16 %v2290
  %v2351 = vpack.c.b16 %v2348, %v2347
  %v2352 = vpack.c.b16 %v2350, %v2349
  %v2356 = vsel %vm190, %v2336, 0
  %2358 = vmatprep.subr.bf16.mxu0 0
  %2359 = vmatpush1.bf16.msra.mxu0 %v2351
  %2360 = vmatprep.subr.bf16.mxu0 0
  %2361 = vmatpush1.bf16.msra.mxu0 %v2352
  %2362 = vmatprep.subr.bf16.mxu0 0
  %2363 = vmatpush1.bf16.msra.mxu0 0
  %2364 = vmatprep.subr.bf16.mxu0 0
  %2365 = vmatpush1.bf16.msra.mxu0 0
  %2366 = vmatprep.subr.bf16.mxu0 0
  %2367 = vmatpush1.bf16.msra.mxu0 0
  %2368 = vmatprep.subr.bf16.mxu0 0
  %2369 = vmatpush1.bf16.msra.mxu0 0
  %2370 = vmatprep.subr.bf16.mxu0 0
  %2371 = vmatpush1.bf16.msra.mxu0 0
  %2372 = vmatprep.subr.bf16.mxu0 0
  %2373 = vmatpush1.bf16.msra.mxu0 0
  %2374 = vmatprep.subr.bf16.mxu0 0
  %2375 = vmatpush1.bf16.msra.mxu0 0
  %2376 = vmatprep.subr.bf16.mxu0 0
  %2377 = vmatpush1.bf16.msra.mxu0 0
  %2378 = vmatprep.subr.bf16.mxu0 0
  %2379 = vmatpush1.bf16.msra.mxu0 0
  %2380 = vmatprep.subr.bf16.mxu0 0
  %2381 = vmatpush1.bf16.msra.mxu0 0
  %2382 = vmatprep.subr.bf16.mxu0 0
  %2383 = vmatpush1.bf16.msra.mxu0 0
  %2384 = vmatprep.subr.bf16.mxu0 0
  %2385 = vmatpush1.bf16.msra.mxu0 0
  %2386 = vmatprep.subr.bf16.mxu0 0
  %2387 = vmatpush1.bf16.msra.mxu0 0
  %2388 = vmatprep.subr.bf16.mxu0 0
  %2389 = vmatpush1.bf16.msra.mxu0 0
  %2390 = vmatprep.mubr.bf16.mxu0 0
  %2391 = vmatmul.mubr.bf16.gmra.mrb[0].mxu0 %v2356
  %v2392 = vpop.f32.mrb[0].mxu0
  %v2393 = vadd.f32 %v2341, %v2392
  %v2394 = vpop.f32.mrb[0].mxu0
  %v2395 = vpop.f32.mrb[0].mxu0
  %v2396 = vadd.f32 %v2341, %v2395
  %v2397 = vpop.f32.mrb[0].mxu0
  %2398 = vdwg.mxu0
  %v2399 = vmul.f32 %v2393, 0.35355338
  %v2400 = vmul.f32 %v2396, 0.35355338
  %v2402 = vlaneseq
  %v2403 = vshrl.u32 %v2402, 7
  %v2404 = vsub.s32 0, %v2403
  %v2405 = vrot.slane %v2299, %v2404
  %v2411 = vunpack.c.l.b16 %v2294
  %v2412 = vunpack.c.l.b16 %v2295
  %v2413 = vunpack.c.l.b16 %v2296
  %v2414 = vunpack.c.l.b16 %v2297
  %v2415 = vpack.c.b16 %v2412, %v2411
  %v2416 = vpack.c.b16 %v2414, %v2413
  %2419 = vmatprep.subr.bf16.mxu0 0
  %2420 = vmatpush1.bf16.msra.mxu0 %v2415
  %2421 = vmatprep.subr.bf16.mxu0 0
  %2422 = vmatpush1.bf16.msra.mxu0 %v2416
  %2423 = vmatprep.subr.bf16.mxu0 0
  %2424 = vmatpush1.bf16.msra.mxu0 0
  %2425 = vmatprep.subr.bf16.mxu0 0
  %2426 = vmatpush1.bf16.msra.mxu0 0
  %2427 = vmatprep.subr.bf16.mxu0 0
  %2428 = vmatpush1.bf16.msra.mxu0 0
  %2429 = vmatprep.subr.bf16.mxu0 0
  %2430 = vmatpush1.bf16.msra.mxu0 0
  %2431 = vmatprep.subr.bf16.mxu0 0
  %2432 = vmatpush1.bf16.msra.mxu0 0
  %2433 = vmatprep.subr.bf16.mxu0 0
  %2434 = vmatpush1.bf16.msra.mxu0 0
  %2435 = vmatprep.subr.bf16.mxu0 0
  %2436 = vmatpush1.bf16.msra.mxu0 0
  %2437 = vmatprep.subr.bf16.mxu0 0
  %2438 = vmatpush1.bf16.msra.mxu0 0
  %2439 = vmatprep.subr.bf16.mxu0 0
  %2440 = vmatpush1.bf16.msra.mxu0 0
  %2441 = vmatprep.subr.bf16.mxu0 0
  %2442 = vmatpush1.bf16.msra.mxu0 0
  %2443 = vmatprep.subr.bf16.mxu0 0
  %2444 = vmatpush1.bf16.msra.mxu0 0
  %2445 = vmatprep.subr.bf16.mxu0 0
  %2446 = vmatpush1.bf16.msra.mxu0 0
  %2447 = vmatprep.subr.bf16.mxu0 0
  %2448 = vmatpush1.bf16.msra.mxu0 0
  %2449 = vmatprep.subr.bf16.mxu0 0
  %2450 = vmatpush1.bf16.msra.mxu0 0
  %2451 = vmatprep.mubr.bf16.mxu0 0
  %2452 = vmatmul.mubr.bf16.gmra.mrb[0].mxu0 %v2356
  %v2453 = vpop.f32.mrb[0].mxu0
  %v2454 = vadd.f32 %v2405, %v2453
  %v2455 = vpop.f32.mrb[0].mxu0
  %v2456 = vpop.f32.mrb[0].mxu0
  %v2457 = vadd.f32 %v2405, %v2456
  %v2458 = vpop.f32.mrb[0].mxu0
  %2459 = vdwg.mxu0
  %v2461 = vlaneseq
  %v2462 = vshrl.u32 %v2461, 7
  %v2463 = vsub.s32 0, %v2462
  %v2464 = vrot.slane %v2306, %v2463
  %v2470 = vunpack.c.l.b16 %v2301
  %v2471 = vunpack.c.l.b16 %v2302
  %v2472 = vunpack.c.l.b16 %v2303
  %v2473 = vunpack.c.l.b16 %v2304
  %v2474 = vpack.c.b16 %v2471, %v2470
  %v2475 = vpack.c.b16 %v2473, %v2472
  %2478 = vmatprep.subr.bf16.mxu0 0
  %2479 = vmatpush1.bf16.msra.mxu0 %v2474
  %2480 = vmatprep.subr.bf16.mxu0 0
  %2481 = vmatpush1.bf16.msra.mxu0 %v2475
  %2482 = vmatprep.subr.bf16.mxu0 0
  %2483 = vmatpush1.bf16.msra.mxu0 0
  %2484 = vmatprep.subr.bf16.mxu0 0
  %2485 = vmatpush1.bf16.msra.mxu0 0
  %2486 = vmatprep.subr.bf16.mxu0 0
  %2487 = vmatpush1.bf16.msra.mxu0 0
  %2488 = vmatprep.subr.bf16.mxu0 0
  %2489 = vmatpush1.bf16.msra.mxu0 0
  %2490 = vmatprep.subr.bf16.mxu0 0
  %2491 = vmatpush1.bf16.msra.mxu0 0
  %2492 = vmatprep.subr.bf16.mxu0 0
  %2493 = vmatpush1.bf16.msra.mxu0 0
  %2494 = vmatprep.subr.bf16.mxu0 0
  %2495 = vmatpush1.bf16.msra.mxu0 0
  %2496 = vmatprep.subr.bf16.mxu0 0
  %2497 = vmatpush1.bf16.msra.mxu0 0
  %2498 = vmatprep.subr.bf16.mxu0 0
  %2499 = vmatpush1.bf16.msra.mxu0 0
  %2500 = vmatprep.subr.bf16.mxu0 0
  %2501 = vmatpush1.bf16.msra.mxu0 0
  %2502 = vmatprep.subr.bf16.mxu0 0
  %2503 = vmatpush1.bf16.msra.mxu0 0
  %2504 = vmatprep.subr.bf16.mxu0 0
  %2505 = vmatpush1.bf16.msra.mxu0 0
  %2506 = vmatprep.subr.bf16.mxu0 0
  %2507 = vmatpush1.bf16.msra.mxu0 0
  %2508 = vmatprep.subr.bf16.mxu0 0
  %2509 = vmatpush1.bf16.msra.mxu0 0
  %2510 = vmatprep.mubr.bf16.mxu0 0
  %2511 = vmatmul.mubr.bf16.gmra.mrb[0].mxu0 %v2356
  %v2512 = vpop.f32.mrb[0].mxu0
  %v2513 = vadd.f32 %v2464, %v2512
  %v2514 = vpop.f32.mrb[0].mxu0
  %v2515 = vpop.f32.mrb[0].mxu0
  %v2516 = vadd.f32 %v2464, %v2515
  %v2517 = vpop.f32.mrb[0].mxu0
  %2518 = vdwg.mxu0
  %2520 = vrot.lane.b32.xlu0 %v2399, 120
  %v2521 = vpop.permute.xlu0 %2520
  %2523 = vrot.lane.b32.xlu0 %v2399, 112
  %v2524 = vpop.permute.xlu0 %2523
  %2526 = vrot.lane.b32.xlu0 %v2399, 104
  %v2527 = vpop.permute.xlu0 %2526
  %2530 = vrot.lane.b32.xlu0 %v2400, 120
  %v2531 = vpop.permute.xlu0 %2530
  %2533 = vrot.lane.b32.xlu0 %v2400, 112
  %v2534 = vpop.permute.xlu0 %2533
  %2536 = vrot.lane.b32.xlu0 %v2400, 104
  %v2537 = vpop.permute.xlu0 %2536
  %v2539 = vpack.c.bf16 %v2399, %v2399
  %v2540 = vpack.c.bf16 %v2521, %v2521
  %v2541 = vpack.c.bf16 %v2524, %v2524
  %v2542 = vpack.c.bf16 %v2527, %v2527
  %v2543 = vpack.c.bf16 %v2400, %v2400
  %v2544 = vpack.c.bf16 %v2531, %v2531
  %v2545 = vpack.c.bf16 %v2534, %v2534
  %v2546 = vpack.c.bf16 %v2537, %v2537
  %2548 = vrot.lane.b32.xlu0 %v2454, 120
  %v2549 = vpop.permute.xlu0 %2548
  %2551 = vrot.lane.b32.xlu0 %v2454, 112
  %v2552 = vpop.permute.xlu0 %2551
  %2554 = vrot.lane.b32.xlu0 %v2454, 104
  %v2555 = vpop.permute.xlu0 %2554
  %2558 = vrot.lane.b32.xlu0 %v2457, 120
  %v2559 = vpop.permute.xlu0 %2558
  %2561 = vrot.lane.b32.xlu0 %v2457, 112
  %v2562 = vpop.permute.xlu0 %2561
  %2564 = vrot.lane.b32.xlu0 %v2457, 104
  %v2565 = vpop.permute.xlu0 %2564
  %v2567 = vpack.c.bf16 %v2454, %v2454
  %v2568 = vpack.c.bf16 %v2549, %v2549
  %v2569 = vpack.c.bf16 %v2552, %v2552
  %v2570 = vpack.c.bf16 %v2555, %v2555
  %v2571 = vpack.c.bf16 %v2457, %v2457
  %v2572 = vpack.c.bf16 %v2559, %v2559
  %v2573 = vpack.c.bf16 %v2562, %v2562
  %v2574 = vpack.c.bf16 %v2565, %v2565
  %2576 = vrot.lane.b32.xlu0 %v2513, 120
  %v2577 = vpop.permute.xlu0 %2576
  %2579 = vrot.lane.b32.xlu0 %v2513, 112
  %v2580 = vpop.permute.xlu0 %2579
  %2582 = vrot.lane.b32.xlu0 %v2513, 104
  %v2583 = vpop.permute.xlu0 %2582
  %2586 = vrot.lane.b32.xlu0 %v2516, 120
  %v2587 = vpop.permute.xlu0 %2586
  %2589 = vrot.lane.b32.xlu0 %v2516, 112
  %v2590 = vpop.permute.xlu0 %2589
  %2592 = vrot.lane.b32.xlu0 %v2516, 104
  %v2593 = vpop.permute.xlu0 %2592
  %v2595 = vpack.c.bf16 %v2513, %v2513
  %v2596 = vpack.c.bf16 %v2577, %v2577
  %v2597 = vpack.c.bf16 %v2580, %v2580
  %v2598 = vpack.c.bf16 %v2583, %v2583
  %v2599 = vpack.c.bf16 %v2516, %v2516
  %v2600 = vpack.c.bf16 %v2587, %v2587
  %v2601 = vpack.c.bf16 %v2590, %v2590
  %v2602 = vpack.c.bf16 %v2593, %v2593
  %v2604 = vsel %vm1156, %v2539, 0
  %v2607 = vsel %vm1156, %v2567, 0
  %2609 = vmatprep.subr.bf16.mxu0 0
  %2610 = vmatpush1.bf16.xpose.msra.mxu0 %v2607
  %2611 = vmatprep.subr.bf16.mxu0 0
  %2612 = vmatpush1.bf16.xpose.msra.mxu0 0
  %2613 = vmatprep.subr.bf16.mxu0 0
  %2614 = vmatpush1.bf16.xpose.msra.mxu0 0
  %2615 = vmatprep.subr.bf16.mxu0 0
  %2616 = vmatpush1.bf16.xpose.msra.mxu0 0
  %2617 = vmatprep.subr.bf16.mxu0 0
  %2618 = vmatpush1.bf16.xpose.msra.mxu0 0
  %2619 = vmatprep.subr.bf16.mxu0 0
  %2620 = vmatpush1.bf16.xpose.msra.mxu0 0
  %2621 = vmatprep.subr.bf16.mxu0 0
  %2622 = vmatpush1.bf16.xpose.msra.mxu0 0
  %2623 = vmatprep.subr.bf16.mxu0 0
  %2624 = vmatpush1.bf16.xpose.msra.mxu0 0
  %2625 = vmatprep.subr.bf16.mxu0 0
  %2626 = vmatpush1.bf16.xpose.msra.mxu0 0
  %2627 = vmatprep.subr.bf16.mxu0 0
  %2628 = vmatpush1.bf16.xpose.msra.mxu0 0
  %2629 = vmatprep.subr.bf16.mxu0 0
  %2630 = vmatpush1.bf16.xpose.msra.mxu0 0
  %2631 = vmatprep.subr.bf16.mxu0 0
  %2632 = vmatpush1.bf16.xpose.msra.mxu0 0
  %2633 = vmatprep.subr.bf16.mxu0 0
  %2634 = vmatpush1.bf16.xpose.msra.mxu0 0
  %2635 = vmatprep.subr.bf16.mxu0 0
  %2636 = vmatpush1.bf16.xpose.msra.mxu0 0
  %2637 = vmatprep.subr.bf16.mxu0 0
  %2638 = vmatpush1.bf16.xpose.msra.mxu0 0
  %2639 = vmatprep.subr.bf16.mxu0 0
  %2640 = vmatpush1.bf16.xpose.msra.mxu0 0
  %2641 = vmatprep.mubr.bf16.mxu0 0
  %2642 = vmatmul.mubr.bf16.gmra.mrb[0].mxu0 %v2604
  %v2643 = vpop.f32.mrb[0].mxu0
  %v2644 = vadd.f32 0.0, %v2643
  %v2645 = vpop.f32.mrb[0].mxu0
  %v2646 = vpop.f32.mrb[0].mxu0
  %v2647 = vpop.f32.mrb[0].mxu0
  %2648 = vdwg.mxu0
  %v2650 = vsel %vm1156, %v2540, 0
  %v2653 = vsel %vm1156, %v2568, 0
  %2655 = vmatprep.subr.bf16.mxu0 0
  %2656 = vmatpush1.bf16.xpose.msra.mxu0 %v2653
  %2657 = vmatprep.subr.bf16.mxu0 0
  %2658 = vmatpush1.bf16.xpose.msra.mxu0 0
  %2659 = vmatprep.subr.bf16.mxu0 0
  %2660 = vmatpush1.bf16.xpose.msra.mxu0 0
  %2661 = vmatprep.subr.bf16.mxu0 0
  %2662 = vmatpush1.bf16.xpose.msra.mxu0 0
  %2663 = vmatprep.subr.bf16.mxu0 0
  %2664 = vmatpush1.bf16.xpose.msra.mxu0 0
  %2665 = vmatprep.subr.bf16.mxu0 0
  %2666 = vmatpush1.bf16.xpose.msra.mxu0 0
  %2667 = vmatprep.subr.bf16.mxu0 0
  %2668 = vmatpush1.bf16.xpose.msra.mxu0 0
  %2669 = vmatprep.subr.bf16.mxu0 0
  %2670 = vmatpush1.bf16.xpose.msra.mxu0 0
  %2671 = vmatprep.subr.bf16.mxu0 0
  %2672 = vmatpush1.bf16.xpose.msra.mxu0 0
  %2673 = vmatprep.subr.bf16.mxu0 0
  %2674 = vmatpush1.bf16.xpose.msra.mxu0 0
  %2675 = vmatprep.subr.bf16.mxu0 0
  %2676 = vmatpush1.bf16.xpose.msra.mxu0 0
  %2677 = vmatprep.subr.bf16.mxu0 0
  %2678 = vmatpush1.bf16.xpose.msra.mxu0 0
  %2679 = vmatprep.subr.bf16.mxu0 0
  %2680 = vmatpush1.bf16.xpose.msra.mxu0 0
  %2681 = vmatprep.subr.bf16.mxu0 0
  %2682 = vmatpush1.bf16.xpose.msra.mxu0 0
  %2683 = vmatprep.subr.bf16.mxu0 0
  %2684 = vmatpush1.bf16.xpose.msra.mxu0 0
  %2685 = vmatprep.subr.bf16.mxu0 0
  %2686 = vmatpush1.bf16.xpose.msra.mxu0 0
  %2687 = vmatprep.mubr.bf16.mxu0 0
  %2688 = vmatmul.mubr.bf16.gmra.mrb[0].mxu0 %v2650
  %v2689 = vpop.f32.mrb[0].mxu0
  %v2690 = vadd.f32 0.0, %v2689
  %v2691 = vpop.f32.mrb[0].mxu0
  %v2692 = vpop.f32.mrb[0].mxu0
  %v2693 = vpop.f32.mrb[0].mxu0
  %2694 = vdwg.mxu0
  %v2696 = vsel %vm1156, %v2541, 0
  %v2699 = vsel %vm1156, %v2569, 0
  %2701 = vmatprep.subr.bf16.mxu0 0
  %2702 = vmatpush1.bf16.xpose.msra.mxu0 %v2699
  %2703 = vmatprep.subr.bf16.mxu0 0
  %2704 = vmatpush1.bf16.xpose.msra.mxu0 0
  %2705 = vmatprep.subr.bf16.mxu0 0
  %2706 = vmatpush1.bf16.xpose.msra.mxu0 0
  %2707 = vmatprep.subr.bf16.mxu0 0
  %2708 = vmatpush1.bf16.xpose.msra.mxu0 0
  %2709 = vmatprep.subr.bf16.mxu0 0
  %2710 = vmatpush1.bf16.xpose.msra.mxu0 0
  %2711 = vmatprep.subr.bf16.mxu0 0
  %2712 = vmatpush1.bf16.xpose.msra.mxu0 0
  %2713 = vmatprep.subr.bf16.mxu0 0
  %2714 = vmatpush1.bf16.xpose.msra.mxu0 0
  %2715 = vmatprep.subr.bf16.mxu0 0
  %2716 = vmatpush1.bf16.xpose.msra.mxu0 0
  %2717 = vmatprep.subr.bf16.mxu0 0
  %2718 = vmatpush1.bf16.xpose.msra.mxu0 0
  %2719 = vmatprep.subr.bf16.mxu0 0
  %2720 = vmatpush1.bf16.xpose.msra.mxu0 0
  %2721 = vmatprep.subr.bf16.mxu0 0
  %2722 = vmatpush1.bf16.xpose.msra.mxu0 0
  %2723 = vmatprep.subr.bf16.mxu0 0
  %2724 = vmatpush1.bf16.xpose.msra.mxu0 0
  %2725 = vmatprep.subr.bf16.mxu0 0
  %2726 = vmatpush1.bf16.xpose.msra.mxu0 0
  %2727 = vmatprep.subr.bf16.mxu0 0
  %2728 = vmatpush1.bf16.xpose.msra.mxu0 0
  %2729 = vmatprep.subr.bf16.mxu0 0
  %2730 = vmatpush1.bf16.xpose.msra.mxu0 0
  %2731 = vmatprep.subr.bf16.mxu0 0
  %2732 = vmatpush1.bf16.xpose.msra.mxu0 0
  %2733 = vmatprep.mubr.bf16.mxu0 0
  %2734 = vmatmul.mubr.bf16.gmra.mrb[0].mxu0 %v2696
  %v2735 = vpop.f32.mrb[0].mxu0
  %v2736 = vadd.f32 0.0, %v2735
  %v2737 = vpop.f32.mrb[0].mxu0
  %v2738 = vpop.f32.mrb[0].mxu0
  %v2739 = vpop.f32.mrb[0].mxu0
  %2740 = vdwg.mxu0
  %v2742 = vsel %vm1156, %v2542, 0
  %v2745 = vsel %vm1156, %v2570, 0
  %2747 = vmatprep.subr.bf16.mxu0 0
  %2748 = vmatpush1.bf16.xpose.msra.mxu0 %v2745
  %2749 = vmatprep.subr.bf16.mxu0 0
  %2750 = vmatpush1.bf16.xpose.msra.mxu0 0
  %2751 = vmatprep.subr.bf16.mxu0 0
  %2752 = vmatpush1.bf16.xpose.msra.mxu0 0
  %2753 = vmatprep.subr.bf16.mxu0 0
  %2754 = vmatpush1.bf16.xpose.msra.mxu0 0
  %2755 = vmatprep.subr.bf16.mxu0 0
  %2756 = vmatpush1.bf16.xpose.msra.mxu0 0
  %2757 = vmatprep.subr.bf16.mxu0 0
  %2758 = vmatpush1.bf16.xpose.msra.mxu0 0
  %2759 = vmatprep.subr.bf16.mxu0 0
  %2760 = vmatpush1.bf16.xpose.msra.mxu0 0
  %2761 = vmatprep.subr.bf16.mxu0 0
  %2762 = vmatpush1.bf16.xpose.msra.mxu0 0
  %2763 = vmatprep.subr.bf16.mxu0 0
  %2764 = vmatpush1.bf16.xpose.msra.mxu0 0
  %2765 = vmatprep.subr.bf16.mxu0 0
  %2766 = vmatpush1.bf16.xpose.msra.mxu0 0
  %2767 = vmatprep.subr.bf16.mxu0 0
  %2768 = vmatpush1.bf16.xpose.msra.mxu0 0
  %2769 = vmatprep.subr.bf16.mxu0 0
  %2770 = vmatpush1.bf16.xpose.msra.mxu0 0
  %2771 = vmatprep.subr.bf16.mxu0 0
  %2772 = vmatpush1.bf16.xpose.msra.mxu0 0
  %2773 = vmatprep.subr.bf16.mxu0 0
  %2774 = vmatpush1.bf16.xpose.msra.mxu0 0
  %2775 = vmatprep.subr.bf16.mxu0 0
  %2776 = vmatpush1.bf16.xpose.msra.mxu0 0
  %2777 = vmatprep.subr.bf16.mxu0 0
  %2778 = vmatpush1.bf16.xpose.msra.mxu0 0
  %2779 = vmatprep.mubr.bf16.mxu0 0
  %2780 = vmatmul.mubr.bf16.gmra.mrb[0].mxu0 %v2742
  %v2781 = vpop.f32.mrb[0].mxu0
  %v2782 = vadd.f32 0.0, %v2781
  %v2783 = vpop.f32.mrb[0].mxu0
  %v2784 = vpop.f32.mrb[0].mxu0
  %v2785 = vpop.f32.mrb[0].mxu0
  %2786 = vdwg.mxu0
  %v2788 = vsel %vm1156, %v2543, 0
  %v2791 = vsel %vm1156, %v2571, 0
  %2793 = vmatprep.subr.bf16.mxu0 0
  %2794 = vmatpush1.bf16.xpose.msra.mxu0 %v2791
  %2795 = vmatprep.subr.bf16.mxu0 0
  %2796 = vmatpush1.bf16.xpose.msra.mxu0 0
  %2797 = vmatprep.subr.bf16.mxu0 0
  %2798 = vmatpush1.bf16.xpose.msra.mxu0 0
  %2799 = vmatprep.subr.bf16.mxu0 0
  %2800 = vmatpush1.bf16.xpose.msra.mxu0 0
  %2801 = vmatprep.subr.bf16.mxu0 0
  %2802 = vmatpush1.bf16.xpose.msra.mxu0 0
  %2803 = vmatprep.subr.bf16.mxu0 0
  %2804 = vmatpush1.bf16.xpose.msra.mxu0 0
  %2805 = vmatprep.subr.bf16.mxu0 0
  %2806 = vmatpush1.bf16.xpose.msra.mxu0 0
  %2807 = vmatprep.subr.bf16.mxu0 0
  %2808 = vmatpush1.bf16.xpose.msra.mxu0 0
  %2809 = vmatprep.subr.bf16.mxu0 0
  %2810 = vmatpush1.bf16.xpose.msra.mxu0 0
  %2811 = vmatprep.subr.bf16.mxu0 0
  %2812 = vmatpush1.bf16.xpose.msra.mxu0 0
  %2813 = vmatprep.subr.bf16.mxu0 0
  %2814 = vmatpush1.bf16.xpose.msra.mxu0 0
  %2815 = vmatprep.subr.bf16.mxu0 0
  %2816 = vmatpush1.bf16.xpose.msra.mxu0 0
  %2817 = vmatprep.subr.bf16.mxu0 0
  %2818 = vmatpush1.bf16.xpose.msra.mxu0 0
  %2819 = vmatprep.subr.bf16.mxu0 0
  %2820 = vmatpush1.bf16.xpose.msra.mxu0 0
  %2821 = vmatprep.subr.bf16.mxu0 0
  %2822 = vmatpush1.bf16.xpose.msra.mxu0 0
  %2823 = vmatprep.subr.bf16.mxu0 0
  %2824 = vmatpush1.bf16.xpose.msra.mxu0 0
  %2825 = vmatprep.mubr.bf16.mxu0 0
  %2826 = vmatmul.mubr.bf16.gmra.mrb[0].mxu0 %v2788
  %v2827 = vpop.f32.mrb[0].mxu0
  %v2828 = vadd.f32 0.0, %v2827
  %v2829 = vpop.f32.mrb[0].mxu0
  %v2830 = vpop.f32.mrb[0].mxu0
  %v2831 = vpop.f32.mrb[0].mxu0
  %2832 = vdwg.mxu0
  %v2834 = vsel %vm1156, %v2544, 0
  %v2837 = vsel %vm1156, %v2572, 0
  %2839 = vmatprep.subr.bf16.mxu0 0
  %2840 = vmatpush1.bf16.xpose.msra.mxu0 %v2837
  %2841 = vmatprep.subr.bf16.mxu0 0
  %2842 = vmatpush1.bf16.xpose.msra.mxu0 0
  %2843 = vmatprep.subr.bf16.mxu0 0
  %2844 = vmatpush1.bf16.xpose.msra.mxu0 0
  %2845 = vmatprep.subr.bf16.mxu0 0
  %2846 = vmatpush1.bf16.xpose.msra.mxu0 0
  %2847 = vmatprep.subr.bf16.mxu0 0
  %2848 = vmatpush1.bf16.xpose.msra.mxu0 0
  %2849 = vmatprep.subr.bf16.mxu0 0
  %2850 = vmatpush1.bf16.xpose.msra.mxu0 0
  %2851 = vmatprep.subr.bf16.mxu0 0
  %2852 = vmatpush1.bf16.xpose.msra.mxu0 0
  %2853 = vmatprep.subr.bf16.mxu0 0
  %2854 = vmatpush1.bf16.xpose.msra.mxu0 0
  %2855 = vmatprep.subr.bf16.mxu0 0
  %2856 = vmatpush1.bf16.xpose.msra.mxu0 0
  %2857 = vmatprep.subr.bf16.mxu0 0
  %2858 = vmatpush1.bf16.xpose.msra.mxu0 0
  %2859 = vmatprep.subr.bf16.mxu0 0
  %2860 = vmatpush1.bf16.xpose.msra.mxu0 0
  %2861 = vmatprep.subr.bf16.mxu0 0
  %2862 = vmatpush1.bf16.xpose.msra.mxu0 0
  %2863 = vmatprep.subr.bf16.mxu0 0
  %2864 = vmatpush1.bf16.xpose.msra.mxu0 0
  %2865 = vmatprep.subr.bf16.mxu0 0
  %2866 = vmatpush1.bf16.xpose.msra.mxu0 0
  %2867 = vmatprep.subr.bf16.mxu0 0
  %2868 = vmatpush1.bf16.xpose.msra.mxu0 0
  %2869 = vmatprep.subr.bf16.mxu0 0
  %2870 = vmatpush1.bf16.xpose.msra.mxu0 0
  %2871 = vmatprep.mubr.bf16.mxu0 0
  %2872 = vmatmul.mubr.bf16.gmra.mrb[0].mxu0 %v2834
  %v2873 = vpop.f32.mrb[0].mxu0
  %v2874 = vadd.f32 0.0, %v2873
  %v2875 = vpop.f32.mrb[0].mxu0
  %v2876 = vpop.f32.mrb[0].mxu0
  %v2877 = vpop.f32.mrb[0].mxu0
  %2878 = vdwg.mxu0
  %v2880 = vsel %vm1156, %v2545, 0
  %v2883 = vsel %vm1156, %v2573, 0
  %2885 = vmatprep.subr.bf16.mxu0 0
  %2886 = vmatpush1.bf16.xpose.msra.mxu0 %v2883
  %2887 = vmatprep.subr.bf16.mxu0 0
  %2888 = vmatpush1.bf16.xpose.msra.mxu0 0
  %2889 = vmatprep.subr.bf16.mxu0 0
  %2890 = vmatpush1.bf16.xpose.msra.mxu0 0
  %2891 = vmatprep.subr.bf16.mxu0 0
  %2892 = vmatpush1.bf16.xpose.msra.mxu0 0
  %2893 = vmatprep.subr.bf16.mxu0 0
  %2894 = vmatpush1.bf16.xpose.msra.mxu0 0
  %2895 = vmatprep.subr.bf16.mxu0 0
  %2896 = vmatpush1.bf16.xpose.msra.mxu0 0
  %2897 = vmatprep.subr.bf16.mxu0 0
  %2898 = vmatpush1.bf16.xpose.msra.mxu0 0
  %2899 = vmatprep.subr.bf16.mxu0 0
  %2900 = vmatpush1.bf16.xpose.msra.mxu0 0
  %2901 = vmatprep.subr.bf16.mxu0 0
  %2902 = vmatpush1.bf16.xpose.msra.mxu0 0
  %2903 = vmatprep.subr.bf16.mxu0 0
  %2904 = vmatpush1.bf16.xpose.msra.mxu0 0
  %2905 = vmatprep.subr.bf16.mxu0 0
  %2906 = vmatpush1.bf16.xpose.msra.mxu0 0
  %2907 = vmatprep.subr.bf16.mxu0 0
  %2908 = vmatpush1.bf16.xpose.msra.mxu0 0
  %2909 = vmatprep.subr.bf16.mxu0 0
  %2910 = vmatpush1.bf16.xpose.msra.mxu0 0
  %2911 = vmatprep.subr.bf16.mxu0 0
  %2912 = vmatpush1.bf16.xpose.msra.mxu0 0
  %2913 = vmatprep.subr.bf16.mxu0 0
  %2914 = vmatpush1.bf16.xpose.msra.mxu0 0
  %2915 = vmatprep.subr.bf16.mxu0 0
  %2916 = vmatpush1.bf16.xpose.msra.mxu0 0
  %2917 = vmatprep.mubr.bf16.mxu0 0
  %2918 = vmatmul.mubr.bf16.gmra.mrb[0].mxu0 %v2880
  %v2919 = vpop.f32.mrb[0].mxu0
  %v2920 = vadd.f32 0.0, %v2919
  %v2921 = vpop.f32.mrb[0].mxu0
  %v2922 = vpop.f32.mrb[0].mxu0
  %v2923 = vpop.f32.mrb[0].mxu0
  %2924 = vdwg.mxu0
  %v2926 = vsel %vm1156, %v2546, 0
  %v2929 = vsel %vm1156, %v2574, 0
  %2931 = vmatprep.subr.bf16.mxu0 0
  %2932 = vmatpush1.bf16.xpose.msra.mxu0 %v2929
  %2933 = vmatprep.subr.bf16.mxu0 0
  %2934 = vmatpush1.bf16.xpose.msra.mxu0 0
  %2935 = vmatprep.subr.bf16.mxu0 0
  %2936 = vmatpush1.bf16.xpose.msra.mxu0 0
  %2937 = vmatprep.subr.bf16.mxu0 0
  %2938 = vmatpush1.bf16.xpose.msra.mxu0 0
  %2939 = vmatprep.subr.bf16.mxu0 0
  %2940 = vmatpush1.bf16.xpose.msra.mxu0 0
  %2941 = vmatprep.subr.bf16.mxu0 0
  %2942 = vmatpush1.bf16.xpose.msra.mxu0 0
  %2943 = vmatprep.subr.bf16.mxu0 0
  %2944 = vmatpush1.bf16.xpose.msra.mxu0 0
  %2945 = vmatprep.subr.bf16.mxu0 0
  %2946 = vmatpush1.bf16.xpose.msra.mxu0 0
  %2947 = vmatprep.subr.bf16.mxu0 0
  %2948 = vmatpush1.bf16.xpose.msra.mxu0 0
  %2949 = vmatprep.subr.bf16.mxu0 0
  %2950 = vmatpush1.bf16.xpose.msra.mxu0 0
  %2951 = vmatprep.subr.bf16.mxu0 0
  %2952 = vmatpush1.bf16.xpose.msra.mxu0 0
  %2953 = vmatprep.subr.bf16.mxu0 0
  %2954 = vmatpush1.bf16.xpose.msra.mxu0 0
  %2955 = vmatprep.subr.bf16.mxu0 0
  %2956 = vmatpush1.bf16.xpose.msra.mxu0 0
  %2957 = vmatprep.subr.bf16.mxu0 0
  %2958 = vmatpush1.bf16.xpose.msra.mxu0 0
  %2959 = vmatprep.subr.bf16.mxu0 0
  %2960 = vmatpush1.bf16.xpose.msra.mxu0 0
  %2961 = vmatprep.subr.bf16.mxu0 0
  %2962 = vmatpush1.bf16.xpose.msra.mxu0 0
  %2963 = vmatprep.mubr.bf16.mxu0 0
  %2964 = vmatmul.mubr.bf16.gmra.mrb[0].mxu0 %v2926
  %v2965 = vpop.f32.mrb[0].mxu0
  %v2966 = vadd.f32 0.0, %v2965
  %v2967 = vpop.f32.mrb[0].mxu0
  %v2968 = vpop.f32.mrb[0].mxu0
  %v2969 = vpop.f32.mrb[0].mxu0
  %2970 = vdwg.mxu0
  %v2971 = vsel %vm1156, %v2644, -inf
  %2972 = vmax.xlane.f32.xlu0 %v2971
  %v2973 = vpop.xlane.xlu0 %2972
  %v2974 = vsel %vm1156, %v2690, -inf
  %2975 = vmax.xlane.f32.xlu0 %v2974
  %v2976 = vpop.xlane.xlu0 %2975
  %v2977 = vsel %vm1156, %v2736, -inf
  %2978 = vmax.xlane.f32.xlu0 %v2977
  %v2979 = vpop.xlane.xlu0 %2978
  %v2980 = vsel %vm1156, %v2782, -inf
  %2981 = vmax.xlane.f32.xlu0 %v2980
  %v2982 = vpop.xlane.xlu0 %2981
  %v2983 = vsel %vm1156, %v2828, -inf
  %2984 = vmax.xlane.f32.xlu0 %v2983
  %v2985 = vpop.xlane.xlu0 %2984
  %v2986 = vsel %vm1156, %v2874, -inf
  %2987 = vmax.xlane.f32.xlu0 %v2986
  %v2988 = vpop.xlane.xlu0 %2987
  %v2989 = vsel %vm1156, %v2920, -inf
  %2990 = vmax.xlane.f32.xlu0 %v2989
  %v2991 = vpop.xlane.xlu0 %2990
  %v2992 = vsel %vm1156, %v2966, -inf
  %2993 = vmax.xlane.f32.xlu0 %v2992
  %v2994 = vpop.xlane.xlu0 %2993
  %v2995 = vsub.f32 %v2644, %v2973
  %v2996 = vsub.f32 %v2690, %v2976
  %v2997 = vsub.f32 %v2736, %v2979
  %v2998 = vsub.f32 %v2782, %v2982
  %v2999 = vsub.f32 %v2828, %v2985
  %v3000 = vsub.f32 %v2874, %v2988
  %v3001 = vsub.f32 %v2920, %v2991
  %v3002 = vsub.f32 %v2966, %v2994
  %v3003 = vmul.f32 %v2995, 1.442695
  %v3004 = vpow.pop %v3003
  %v3005 = vmul.f32 %v2996, 1.442695
  %v3006 = vpow.pop %v3005
  %v3007 = vmul.f32 %v2997, 1.442695
  %v3008 = vpow.pop %v3007
  %v3009 = vmul.f32 %v2998, 1.442695
  %v3010 = vpow.pop %v3009
  %v3011 = vmul.f32 %v2999, 1.442695
  %v3012 = vpow.pop %v3011
  %v3013 = vmul.f32 %v3000, 1.442695
  %v3014 = vpow.pop %v3013
  %v3015 = vmul.f32 %v3001, 1.442695
  %v3016 = vpow.pop %v3015
  %v3017 = vmul.f32 %v3002, 1.442695
  %v3018 = vpow.pop %v3017
  %v3019 = vpack.c.bf16 %v3004, %v3004
  %v3020 = vpack.c.bf16 %v3006, %v3006
  %v3021 = vpack.c.bf16 %v3008, %v3008
  %v3022 = vpack.c.bf16 %v3010, %v3010
  %v3023 = vpack.c.bf16 %v3012, %v3012
  %v3024 = vpack.c.bf16 %v3014, %v3014
  %v3025 = vpack.c.bf16 %v3016, %v3016
  %v3026 = vpack.c.bf16 %v3018, %v3018
  %v3028 = vsel %vm1156, %v3019, 0
  %v3031 = vsel %vm1584, %v2595, 0
  %3033 = vmatprep.subr.bf16.mxu0 0
  %3034 = vmatpush1.bf16.msra.mxu0 %v3031
  %3035 = vmatprep.subr.bf16.mxu0 0
  %3036 = vmatpush1.bf16.msra.mxu0 0
  %3037 = vmatprep.subr.bf16.mxu0 0
  %3038 = vmatpush1.bf16.msra.mxu0 0
  %3039 = vmatprep.subr.bf16.mxu0 0
  %3040 = vmatpush1.bf16.msra.mxu0 0
  %3041 = vmatprep.subr.bf16.mxu0 0
  %3042 = vmatpush1.bf16.msra.mxu0 0
  %3043 = vmatprep.subr.bf16.mxu0 0
  %3044 = vmatpush1.bf16.msra.mxu0 0
  %3045 = vmatprep.subr.bf16.mxu0 0
  %3046 = vmatpush1.bf16.msra.mxu0 0
  %3047 = vmatprep.subr.bf16.mxu0 0
  %3048 = vmatpush1.bf16.msra.mxu0 0
  %3049 = vmatprep.subr.bf16.mxu0 0
  %3050 = vmatpush1.bf16.msra.mxu0 0
  %3051 = vmatprep.subr.bf16.mxu0 0
  %3052 = vmatpush1.bf16.msra.mxu0 0
  %3053 = vmatprep.subr.bf16.mxu0 0
  %3054 = vmatpush1.bf16.msra.mxu0 0
  %3055 = vmatprep.subr.bf16.mxu0 0
  %3056 = vmatpush1.bf16.msra.mxu0 0
  %3057 = vmatprep.subr.bf16.mxu0 0
  %3058 = vmatpush1.bf16.msra.mxu0 0
  %3059 = vmatprep.subr.bf16.mxu0 0
  %3060 = vmatpush1.bf16.msra.mxu0 0
  %3061 = vmatprep.subr.bf16.mxu0 0
  %3062 = vmatpush1.bf16.msra.mxu0 0
  %3063 = vmatprep.subr.bf16.mxu0 0
  %3064 = vmatpush1.bf16.msra.mxu0 0
  %3065 = vmatprep.mubr.bf16.mxu0 0
  %3066 = vmatmul.mubr.bf16.gmra.mrb[0].mxu0 %v3028
  %v3067 = vpop.f32.mrb[0].mxu0
  %v3068 = vadd.f32 0.0, %v3067
  %v3069 = vpop.f32.mrb[0].mxu0
  %v3070 = vpop.f32.mrb[0].mxu0
  %v3071 = vpop.f32.mrb[0].mxu0
  %3072 = vdwg.mxu0
  %v3074 = vsel %vm1156, %v3020, 0
  %v3077 = vsel %vm1584, %v2596, 0
  %3079 = vmatprep.subr.bf16.mxu0 0
  %3080 = vmatpush1.bf16.msra.mxu0 %v3077
  %3081 = vmatprep.subr.bf16.mxu0 0
  %3082 = vmatpush1.bf16.msra.mxu0 0
  %3083 = vmatprep.subr.bf16.mxu0 0
  %3084 = vmatpush1.bf16.msra.mxu0 0
  %3085 = vmatprep.subr.bf16.mxu0 0
  %3086 = vmatpush1.bf16.msra.mxu0 0
  %3087 = vmatprep.subr.bf16.mxu0 0
  %3088 = vmatpush1.bf16.msra.mxu0 0
  %3089 = vmatprep.subr.bf16.mxu0 0
  %3090 = vmatpush1.bf16.msra.mxu0 0
  %3091 = vmatprep.subr.bf16.mxu0 0
  %3092 = vmatpush1.bf16.msra.mxu0 0
  %3093 = vmatprep.subr.bf16.mxu0 0
  %3094 = vmatpush1.bf16.msra.mxu0 0
  %3095 = vmatprep.subr.bf16.mxu0 0
  %3096 = vmatpush1.bf16.msra.mxu0 0
  %3097 = vmatprep.subr.bf16.mxu0 0
  %3098 = vmatpush1.bf16.msra.mxu0 0
  %3099 = vmatprep.subr.bf16.mxu0 0
  %3100 = vmatpush1.bf16.msra.mxu0 0
  %3101 = vmatprep.subr.bf16.mxu0 0
  %3102 = vmatpush1.bf16.msra.mxu0 0
  %3103 = vmatprep.subr.bf16.mxu0 0
  %3104 = vmatpush1.bf16.msra.mxu0 0
  %3105 = vmatprep.subr.bf16.mxu0 0
  %3106 = vmatpush1.bf16.msra.mxu0 0
  %3107 = vmatprep.subr.bf16.mxu0 0
  %3108 = vmatpush1.bf16.msra.mxu0 0
  %3109 = vmatprep.subr.bf16.mxu0 0
  %3110 = vmatpush1.bf16.msra.mxu0 0
  %3111 = vmatprep.mubr.bf16.mxu0 0
  %3112 = vmatmul.mubr.bf16.gmra.mrb[0].mxu0 %v3074
  %v3113 = vpop.f32.mrb[0].mxu0
  %v3114 = vadd.f32 0.0, %v3113
  %v3115 = vpop.f32.mrb[0].mxu0
  %v3116 = vpop.f32.mrb[0].mxu0
  %v3117 = vpop.f32.mrb[0].mxu0
  %3118 = vdwg.mxu0
  %v3120 = vsel %vm1156, %v3021, 0
  %v3123 = vsel %vm1584, %v2597, 0
  %3125 = vmatprep.subr.bf16.mxu0 0
  %3126 = vmatpush1.bf16.msra.mxu0 %v3123
  %3127 = vmatprep.subr.bf16.mxu0 0
  %3128 = vmatpush1.bf16.msra.mxu0 0
  %3129 = vmatprep.subr.bf16.mxu0 0
  %3130 = vmatpush1.bf16.msra.mxu0 0
  %3131 = vmatprep.subr.bf16.mxu0 0
  %3132 = vmatpush1.bf16.msra.mxu0 0
  %3133 = vmatprep.subr.bf16.mxu0 0
  %3134 = vmatpush1.bf16.msra.mxu0 0
  %3135 = vmatprep.subr.bf16.mxu0 0
  %3136 = vmatpush1.bf16.msra.mxu0 0
  %3137 = vmatprep.subr.bf16.mxu0 0
  %3138 = vmatpush1.bf16.msra.mxu0 0
  %3139 = vmatprep.subr.bf16.mxu0 0
  %3140 = vmatpush1.bf16.msra.mxu0 0
  %3141 = vmatprep.subr.bf16.mxu0 0
  %3142 = vmatpush1.bf16.msra.mxu0 0
  %3143 = vmatprep.subr.bf16.mxu0 0
  %3144 = vmatpush1.bf16.msra.mxu0 0
  %3145 = vmatprep.subr.bf16.mxu0 0
  %3146 = vmatpush1.bf16.msra.mxu0 0
  %3147 = vmatprep.subr.bf16.mxu0 0
  %3148 = vmatpush1.bf16.msra.mxu0 0
  %3149 = vmatprep.subr.bf16.mxu0 0
  %3150 = vmatpush1.bf16.msra.mxu0 0
  %3151 = vmatprep.subr.bf16.mxu0 0
  %3152 = vmatpush1.bf16.msra.mxu0 0
  %3153 = vmatprep.subr.bf16.mxu0 0
  %3154 = vmatpush1.bf16.msra.mxu0 0
  %3155 = vmatprep.subr.bf16.mxu0 0
  %3156 = vmatpush1.bf16.msra.mxu0 0
  %3157 = vmatprep.mubr.bf16.mxu0 0
  %3158 = vmatmul.mubr.bf16.gmra.mrb[0].mxu0 %v3120
  %v3159 = vpop.f32.mrb[0].mxu0
  %v3160 = vadd.f32 0.0, %v3159
  %v3161 = vpop.f32.mrb[0].mxu0
  %v3162 = vpop.f32.mrb[0].mxu0
  %v3163 = vpop.f32.mrb[0].mxu0
  %3164 = vdwg.mxu0
  %v3166 = vsel %vm1156, %v3022, 0
  %v3169 = vsel %vm1584, %v2598, 0
  %3171 = vmatprep.subr.bf16.mxu0 0
  %3172 = vmatpush1.bf16.msra.mxu0 %v3169
  %3173 = vmatprep.subr.bf16.mxu0 0
  %3174 = vmatpush1.bf16.msra.mxu0 0
  %3175 = vmatprep.subr.bf16.mxu0 0
  %3176 = vmatpush1.bf16.msra.mxu0 0
  %3177 = vmatprep.subr.bf16.mxu0 0
  %3178 = vmatpush1.bf16.msra.mxu0 0
  %3179 = vmatprep.subr.bf16.mxu0 0
  %3180 = vmatpush1.bf16.msra.mxu0 0
  %3181 = vmatprep.subr.bf16.mxu0 0
  %3182 = vmatpush1.bf16.msra.mxu0 0
  %3183 = vmatprep.subr.bf16.mxu0 0
  %3184 = vmatpush1.bf16.msra.mxu0 0
  %3185 = vmatprep.subr.bf16.mxu0 0
  %3186 = vmatpush1.bf16.msra.mxu0 0
  %3187 = vmatprep.subr.bf16.mxu0 0
  %3188 = vmatpush1.bf16.msra.mxu0 0
  %3189 = vmatprep.subr.bf16.mxu0 0
  %3190 = vmatpush1.bf16.msra.mxu0 0
  %3191 = vmatprep.subr.bf16.mxu0 0
  %3192 = vmatpush1.bf16.msra.mxu0 0
  %3193 = vmatprep.subr.bf16.mxu0 0
  %3194 = vmatpush1.bf16.msra.mxu0 0
  %3195 = vmatprep.subr.bf16.mxu0 0
  %3196 = vmatpush1.bf16.msra.mxu0 0
  %3197 = vmatprep.subr.bf16.mxu0 0
  %3198 = vmatpush1.bf16.msra.mxu0 0
  %3199 = vmatprep.subr.bf16.mxu0 0
  %3200 = vmatpush1.bf16.msra.mxu0 0
  %3201 = vmatprep.subr.bf16.mxu0 0
  %3202 = vmatpush1.bf16.msra.mxu0 0
  %3203 = vmatprep.mubr.bf16.mxu0 0
  %3204 = vmatmul.mubr.bf16.gmra.mrb[0].mxu0 %v3166
  %v3205 = vpop.f32.mrb[0].mxu0
  %v3206 = vadd.f32 0.0, %v3205
  %v3207 = vpop.f32.mrb[0].mxu0
  %v3208 = vpop.f32.mrb[0].mxu0
  %v3209 = vpop.f32.mrb[0].mxu0
  %3210 = vdwg.mxu0
  %v3212 = vsel %vm1156, %v3023, 0
  %v3215 = vsel %vm1584, %v2599, 0
  %3217 = vmatprep.subr.bf16.mxu0 0
  %3218 = vmatpush1.bf16.msra.mxu0 %v3215
  %3219 = vmatprep.subr.bf16.mxu0 0
  %3220 = vmatpush1.bf16.msra.mxu0 0
  %3221 = vmatprep.subr.bf16.mxu0 0
  %3222 = vmatpush1.bf16.msra.mxu0 0
  %3223 = vmatprep.subr.bf16.mxu0 0
  %3224 = vmatpush1.bf16.msra.mxu0 0
  %3225 = vmatprep.subr.bf16.mxu0 0
  %3226 = vmatpush1.bf16.msra.mxu0 0
  %3227 = vmatprep.subr.bf16.mxu0 0
  %3228 = vmatpush1.bf16.msra.mxu0 0
  %3229 = vmatprep.subr.bf16.mxu0 0
  %3230 = vmatpush1.bf16.msra.mxu0 0
  %3231 = vmatprep.subr.bf16.mxu0 0
  %3232 = vmatpush1.bf16.msra.mxu0 0
  %3233 = vmatprep.subr.bf16.mxu0 0
  %3234 = vmatpush1.bf16.msra.mxu0 0
  %3235 = vmatprep.subr.bf16.mxu0 0
  %3236 = vmatpush1.bf16.msra.mxu0 0
  %3237 = vmatprep.subr.bf16.mxu0 0
  %3238 = vmatpush1.bf16.msra.mxu0 0
  %3239 = vmatprep.subr.bf16.mxu0 0
  %3240 = vmatpush1.bf16.msra.mxu0 0
  %3241 = vmatprep.subr.bf16.mxu0 0
  %3242 = vmatpush1.bf16.msra.mxu0 0
  %3243 = vmatprep.subr.bf16.mxu0 0
  %3244 = vmatpush1.bf16.msra.mxu0 0
  %3245 = vmatprep.subr.bf16.mxu0 0
  %3246 = vmatpush1.bf16.msra.mxu0 0
  %3247 = vmatprep.subr.bf16.mxu0 0
  %3248 = vmatpush1.bf16.msra.mxu0 0
  %3249 = vmatprep.mubr.bf16.mxu0 0
  %3250 = vmatmul.mubr.bf16.gmra.mrb[0].mxu0 %v3212
  %v3251 = vpop.f32.mrb[0].mxu0
  %v3252 = vadd.f32 0.0, %v3251
  %v3253 = vpop.f32.mrb[0].mxu0
  %v3254 = vpop.f32.mrb[0].mxu0
  %v3255 = vpop.f32.mrb[0].mxu0
  %3256 = vdwg.mxu0
  %v3258 = vsel %vm1156, %v3024, 0
  %v3261 = vsel %vm1584, %v2600, 0
  %3263 = vmatprep.subr.bf16.mxu0 0
  %3264 = vmatpush1.bf16.msra.mxu0 %v3261
  %3265 = vmatprep.subr.bf16.mxu0 0
  %3266 = vmatpush1.bf16.msra.mxu0 0
  %3267 = vmatprep.subr.bf16.mxu0 0
  %3268 = vmatpush1.bf16.msra.mxu0 0
  %3269 = vmatprep.subr.bf16.mxu0 0
  %3270 = vmatpush1.bf16.msra.mxu0 0
  %3271 = vmatprep.subr.bf16.mxu0 0
  %3272 = vmatpush1.bf16.msra.mxu0 0
  %3273 = vmatprep.subr.bf16.mxu0 0
  %3274 = vmatpush1.bf16.msra.mxu0 0
  %3275 = vmatprep.subr.bf16.mxu0 0
  %3276 = vmatpush1.bf16.msra.mxu0 0
  %3277 = vmatprep.subr.bf16.mxu0 0
  %3278 = vmatpush1.bf16.msra.mxu0 0
  %3279 = vmatprep.subr.bf16.mxu0 0
  %3280 = vmatpush1.bf16.msra.mxu0 0
  %3281 = vmatprep.subr.bf16.mxu0 0
  %3282 = vmatpush1.bf16.msra.mxu0 0
  %3283 = vmatprep.subr.bf16.mxu0 0
  %3284 = vmatpush1.bf16.msra.mxu0 0
  %3285 = vmatprep.subr.bf16.mxu0 0
  %3286 = vmatpush1.bf16.msra.mxu0 0
  %3287 = vmatprep.subr.bf16.mxu0 0
  %3288 = vmatpush1.bf16.msra.mxu0 0
  %3289 = vmatprep.subr.bf16.mxu0 0
  %3290 = vmatpush1.bf16.msra.mxu0 0
  %3291 = vmatprep.subr.bf16.mxu0 0
  %3292 = vmatpush1.bf16.msra.mxu0 0
  %3293 = vmatprep.subr.bf16.mxu0 0
  %3294 = vmatpush1.bf16.msra.mxu0 0
  %3295 = vmatprep.mubr.bf16.mxu0 0
  %3296 = vmatmul.mubr.bf16.gmra.mrb[0].mxu0 %v3258
  %v3297 = vpop.f32.mrb[0].mxu0
  %v3298 = vadd.f32 0.0, %v3297
  %v3299 = vpop.f32.mrb[0].mxu0
  %v3300 = vpop.f32.mrb[0].mxu0
  %v3301 = vpop.f32.mrb[0].mxu0
  %3302 = vdwg.mxu0
  %v3304 = vsel %vm1156, %v3025, 0
  %v3307 = vsel %vm1584, %v2601, 0
  %3309 = vmatprep.subr.bf16.mxu0 0
  %3310 = vmatpush1.bf16.msra.mxu0 %v3307
  %3311 = vmatprep.subr.bf16.mxu0 0
  %3312 = vmatpush1.bf16.msra.mxu0 0
  %3313 = vmatprep.subr.bf16.mxu0 0
  %3314 = vmatpush1.bf16.msra.mxu0 0
  %3315 = vmatprep.subr.bf16.mxu0 0
  %3316 = vmatpush1.bf16.msra.mxu0 0
  %3317 = vmatprep.subr.bf16.mxu0 0
  %3318 = vmatpush1.bf16.msra.mxu0 0
  %3319 = vmatprep.subr.bf16.mxu0 0
  %3320 = vmatpush1.bf16.msra.mxu0 0
  %3321 = vmatprep.subr.bf16.mxu0 0
  %3322 = vmatpush1.bf16.msra.mxu0 0
  %3323 = vmatprep.subr.bf16.mxu0 0
  %3324 = vmatpush1.bf16.msra.mxu0 0
  %3325 = vmatprep.subr.bf16.mxu0 0
  %3326 = vmatpush1.bf16.msra.mxu0 0
  %3327 = vmatprep.subr.bf16.mxu0 0
  %3328 = vmatpush1.bf16.msra.mxu0 0
  %3329 = vmatprep.subr.bf16.mxu0 0
  %3330 = vmatpush1.bf16.msra.mxu0 0
  %3331 = vmatprep.subr.bf16.mxu0 0
  %3332 = vmatpush1.bf16.msra.mxu0 0
  %3333 = vmatprep.subr.bf16.mxu0 0
  %3334 = vmatpush1.bf16.msra.mxu0 0
  %3335 = vmatprep.subr.bf16.mxu0 0
  %3336 = vmatpush1.bf16.msra.mxu0 0
  %3337 = vmatprep.subr.bf16.mxu0 0
  %3338 = vmatpush1.bf16.msra.mxu0 0
  %3339 = vmatprep.subr.bf16.mxu0 0
  %3340 = vmatpush1.bf16.msra.mxu0 0
  %3341 = vmatprep.mubr.bf16.mxu0 0
  %3342 = vmatmul.mubr.bf16.gmra.mrb[0].mxu0 %v3304
  %v3343 = vpop.f32.mrb[0].mxu0
  %v3344 = vadd.f32 0.0, %v3343
  %v3345 = vpop.f32.mrb[0].mxu0
  %v3346 = vpop.f32.mrb[0].mxu0
  %v3347 = vpop.f32.mrb[0].mxu0
  %3348 = vdwg.mxu0
  %v3350 = vsel %vm1156, %v3026, 0
  %v3353 = vsel %vm1584, %v2602, 0
  %3355 = vmatprep.subr.bf16.mxu0 0
  %3356 = vmatpush1.bf16.msra.mxu0 %v3353
  %3357 = vmatprep.subr.bf16.mxu0 0
  %3358 = vmatpush1.bf16.msra.mxu0 0
  %3359 = vmatprep.subr.bf16.mxu0 0
  %3360 = vmatpush1.bf16.msra.mxu0 0
  %3361 = vmatprep.subr.bf16.mxu0 0
  %3362 = vmatpush1.bf16.msra.mxu0 0
  %3363 = vmatprep.subr.bf16.mxu0 0
  %3364 = vmatpush1.bf16.msra.mxu0 0
  %3365 = vmatprep.subr.bf16.mxu0 0
  %3366 = vmatpush1.bf16.msra.mxu0 0
  %3367 = vmatprep.subr.bf16.mxu0 0
  %3368 = vmatpush1.bf16.msra.mxu0 0
  %3369 = vmatprep.subr.bf16.mxu0 0
  %3370 = vmatpush1.bf16.msra.mxu0 0
  %3371 = vmatprep.subr.bf16.mxu0 0
  %3372 = vmatpush1.bf16.msra.mxu0 0
  %3373 = vmatprep.subr.bf16.mxu0 0
  %3374 = vmatpush1.bf16.msra.mxu0 0
  %3375 = vmatprep.subr.bf16.mxu0 0
  %3376 = vmatpush1.bf16.msra.mxu0 0
  %3377 = vmatprep.subr.bf16.mxu0 0
  %3378 = vmatpush1.bf16.msra.mxu0 0
  %3379 = vmatprep.subr.bf16.mxu0 0
  %3380 = vmatpush1.bf16.msra.mxu0 0
  %3381 = vmatprep.subr.bf16.mxu0 0
  %3382 = vmatpush1.bf16.msra.mxu0 0
  %3383 = vmatprep.subr.bf16.mxu0 0
  %3384 = vmatpush1.bf16.msra.mxu0 0
  %3385 = vmatprep.subr.bf16.mxu0 0
  %3386 = vmatpush1.bf16.msra.mxu0 0
  %3387 = vmatprep.mubr.bf16.mxu0 0
  %3388 = vmatmul.mubr.bf16.gmra.mrb[0].mxu0 %v3350
  %v3389 = vpop.f32.mrb[0].mxu0
  %v3390 = vadd.f32 0.0, %v3389
  %v3391 = vpop.f32.mrb[0].mxu0
  %v3392 = vpop.f32.mrb[0].mxu0
  %v3393 = vpop.f32.mrb[0].mxu0
  %3394 = vdwg.mxu0
  %v3395 = vsel %vm1156, %v3004, 0.0
  %3396 = vadd.xlane.f32.xlu0 %v3395
  %v3397 = vpop.xlane.xlu0 %3396
  %v3398 = vsel %vm1156, %v3006, 0.0
  %3399 = vadd.xlane.f32.xlu0 %v3398
  %v3400 = vpop.xlane.xlu0 %3399
  %v3401 = vsel %vm1156, %v3008, 0.0
  %3402 = vadd.xlane.f32.xlu0 %v3401
  %v3403 = vpop.xlane.xlu0 %3402
  %v3404 = vsel %vm1156, %v3010, 0.0
  %3405 = vadd.xlane.f32.xlu0 %v3404
  %v3406 = vpop.xlane.xlu0 %3405
  %v3407 = vsel %vm1156, %v3012, 0.0
  %3408 = vadd.xlane.f32.xlu0 %v3407
  %v3409 = vpop.xlane.xlu0 %3408
  %v3410 = vsel %vm1156, %v3014, 0.0
  %3411 = vadd.xlane.f32.xlu0 %v3410
  %v3412 = vpop.xlane.xlu0 %3411
  %v3413 = vsel %vm1156, %v3016, 0.0
  %3414 = vadd.xlane.f32.xlu0 %v3413
  %v3415 = vpop.xlane.xlu0 %3414
  %v3416 = vsel %vm1156, %v3018, 0.0
  %3417 = vadd.xlane.f32.xlu0 %v3416
  %v3418 = vpop.xlane.xlu0 %3417
  %v3419 = vrcp.pop %v3397
  %v3420 = vrcp.pop %v3400
  %v3421 = vrcp.pop %v3403
  %v3422 = vrcp.pop %v3406
  %v3423 = vrcp.pop %v3409
  %v3424 = vrcp.pop %v3412
  %v3425 = vrcp.pop %v3415
  %v3426 = vrcp.pop %v3418
  %v3427 = vmul.f32 %v3068, %v3419
  %v3428 = vmul.f32 %v3114, %v3420
  %v3429 = vmul.f32 %v3160, %v3421
  %v3430 = vmul.f32 %v3206, %v3422
  %v3431 = vmul.f32 %v3252, %v3423
  %v3432 = vmul.f32 %v3298, %v3424
  %v3433 = vmul.f32 %v3344, %v3425
  %v3434 = vmul.f32 %v3390, %v3426
  %3436 = vrot.lane.b32.xlu0 %v3428, 8
  %v3437 = vpop.permute.xlu0 %3436
  %3440 = vrot.lane.b32.xlu0 %v3429, 16
  %v3441 = vpop.permute.xlu0 %3440
  %3444 = vrot.lane.b32.xlu0 %v3430, 24
  %v3445 = vpop.permute.xlu0 %3444
  %v3447 = vsel %vm1156, %v3427, %v3437
  %v3448 = vsel %vm475, %v3447, %v3441
  %v3449 = vsel %vm2004, %v3448, %v3445
  %3451 = vrot.lane.b32.xlu0 %v3432, 8
  %v3452 = vpop.permute.xlu0 %3451
  %3455 = vrot.lane.b32.xlu0 %v3433, 16
  %v3456 = vpop.permute.xlu0 %3455
  %3459 = vrot.lane.b32.xlu0 %v3434, 24
  %v3460 = vpop.permute.xlu0 %3459
  %v3462 = vsel %vm1156, %v3431, %v3452
  %v3463 = vsel %vm475, %v3462, %v3456
  %v3464 = vsel %vm2004, %v3463, %v3460
  %v3465 = vpack.c.bf16 %v3464, %v3449
  %v3467 = vlaneseq
  %v3468 = vshrl.u32 %v3467, 7
  %v3469 = vsub.s32 0, %v3468
  %v3470 = vrot.slane %v2313, %v3469
  %v3476 = vunpack.c.l.b16 %v2308
  %v3477 = vunpack.c.l.b16 %v2309
  %v3478 = vunpack.c.l.b16 %v2310
  %v3479 = vunpack.c.l.b16 %v2311
  %v3480 = vpack.c.b16 %v3477, %v3476
  %v3481 = vpack.c.b16 %v3479, %v3478
  %v3485 = vsel %vm190, %v3465, 0
  %3487 = vmatprep.subr.bf16.mxu0 0
  %3488 = vmatpush1.bf16.msra.mxu0 %v3480
  %3489 = vmatprep.subr.bf16.mxu0 0
  %3490 = vmatpush1.bf16.msra.mxu0 %v3481
  %3491 = vmatprep.subr.bf16.mxu0 0
  %3492 = vmatpush1.bf16.msra.mxu0 0
  %3493 = vmatprep.subr.bf16.mxu0 0
  %3494 = vmatpush1.bf16.msra.mxu0 0
  %3495 = vmatprep.subr.bf16.mxu0 0
  %3496 = vmatpush1.bf16.msra.mxu0 0
  %3497 = vmatprep.subr.bf16.mxu0 0
  %3498 = vmatpush1.bf16.msra.mxu0 0
  %3499 = vmatprep.subr.bf16.mxu0 0
  %3500 = vmatpush1.bf16.msra.mxu0 0
  %3501 = vmatprep.subr.bf16.mxu0 0
  %3502 = vmatpush1.bf16.msra.mxu0 0
  %3503 = vmatprep.subr.bf16.mxu0 0
  %3504 = vmatpush1.bf16.msra.mxu0 0
  %3505 = vmatprep.subr.bf16.mxu0 0
  %3506 = vmatpush1.bf16.msra.mxu0 0
  %3507 = vmatprep.subr.bf16.mxu0 0
  %3508 = vmatpush1.bf16.msra.mxu0 0
  %3509 = vmatprep.subr.bf16.mxu0 0
  %3510 = vmatpush1.bf16.msra.mxu0 0
  %3511 = vmatprep.subr.bf16.mxu0 0
  %3512 = vmatpush1.bf16.msra.mxu0 0
  %3513 = vmatprep.subr.bf16.mxu0 0
  %3514 = vmatpush1.bf16.msra.mxu0 0
  %3515 = vmatprep.subr.bf16.mxu0 0
  %3516 = vmatpush1.bf16.msra.mxu0 0
  %3517 = vmatprep.subr.bf16.mxu0 0
  %3518 = vmatpush1.bf16.msra.mxu0 0
  %3519 = vmatprep.mubr.bf16.mxu0 0
  %3520 = vmatmul.mubr.bf16.gmra.mrb[0].mxu0 %v3485
  %v3521 = vpop.f32.mrb[0].mxu0
  %v3522 = vadd.f32 %v3470, %v3521
  %v3523 = vpop.f32.mrb[0].mxu0
  %v3524 = vpop.f32.mrb[0].mxu0
  %v3525 = vadd.f32 %v3470, %v3524
  %v3526 = vpop.f32.mrb[0].mxu0
  %3527 = vdwg.mxu0
  %v3528 = vadd.f32 %v3522, %v2284
  %v3529 = vadd.f32 %v3525, %v2285
  %v3530 = vsel %vm190, %v3528, 0.0
  %3531 = vadd.xlane.f32.xlu0 %v3530
  %v3532 = vpop.xlane.xlu0 %3531
  %v3533 = vsel %vm190, %v3529, 0.0
  %3534 = vadd.xlane.f32.xlu0 %v3533
  %v3535 = vpop.xlane.xlu0 %3534
  %v3536 = vmul.f32 %v3532, %v657
  %v3537 = vmul.f32 %v3535, %v657
  %v3538 = vsub.f32 %v3528, %v3536
  %v3539 = vsub.f32 %v3529, %v3537
  %v3540 = vmul.f32 %v3538, %v3538
  %v3541 = vmul.f32 %v3539, %v3539
  %v3542 = vsel %vm190, %v3540, 0.0
  %3543 = vadd.xlane.f32.xlu0 %v3542
  %v3544 = vpop.xlane.xlu0 %3543
  %v3545 = vsel %vm190, %v3541, 0.0
  %3546 = vadd.xlane.f32.xlu0 %v3545
  %v3547 = vpop.xlane.xlu0 %3546
  %v3548 = vmul.f32 %v3544, %v657
  %v3549 = vmul.f32 %v3547, %v657
  %v3550 = vadd.f32 %v3548, 1e-05
  %v3551 = vadd.f32 %v3549, 1e-05
  %v3552 = vrsqrt.pop %v3550
  %v3553 = vrsqrt.pop %v3551
  %v3554 = vmul.f32 %v3538, %v3552
  %v3555 = vmul.f32 %v3539, %v3553
  %v3557 = vlaneseq
  %v3558 = vshrl.u32 %v3557, 7
  %v3559 = vsub.s32 0, %v3558
  %v3560 = vrot.slane %v2315, %v3559
  %v3562 = vmul.f32 %v3554, %v3560
  %v3563 = vmul.f32 %v3555, %v3560
  %v3565 = vlaneseq
  %v3566 = vshrl.u32 %v3565, 7
  %v3567 = vsub.s32 0, %v3566
  %v3568 = vrot.slane %v2317, %v3567
  %v3570 = vadd.f32 %v3562, %v3568
  %v3571 = vadd.f32 %v3563, %v3568
  %v3572 = vpack.c.bf16 %v3571, %v3570
  %v3574 = vlaneseq
  %v3575 = vshrl.u32 %v3574, 7
  %v3576 = vsub.s32 0, %v3575
  %v3577 = vrot.slane %v2324, %v3576
  %v3583 = vunpack.c.l.b16 %v2319
  %v3584 = vunpack.c.l.b16 %v2320
  %v3585 = vunpack.c.l.b16 %v2321
  %v3586 = vunpack.c.l.b16 %v2322
  %v3587 = vpack.c.b16 %v3584, %v3583
  %v3588 = vpack.c.b16 %v3586, %v3585
  %v3592 = vsel %vm190, %v3572, 0
  %3594 = vmatprep.subr.bf16.mxu0 0
  %3595 = vmatpush1.bf16.msra.mxu0 %v3587
  %3596 = vmatprep.subr.bf16.mxu0 0
  %3597 = vmatpush1.bf16.msra.mxu0 %v3588
  %3598 = vmatprep.subr.bf16.mxu0 0
  %3599 = vmatpush1.bf16.msra.mxu0 0
  %3600 = vmatprep.subr.bf16.mxu0 0
  %3601 = vmatpush1.bf16.msra.mxu0 0
  %3602 = vmatprep.subr.bf16.mxu0 0
  %3603 = vmatpush1.bf16.msra.mxu0 0
  %3604 = vmatprep.subr.bf16.mxu0 0
  %3605 = vmatpush1.bf16.msra.mxu0 0
  %3606 = vmatprep.subr.bf16.mxu0 0
  %3607 = vmatpush1.bf16.msra.mxu0 0
  %3608 = vmatprep.subr.bf16.mxu0 0
  %3609 = vmatpush1.bf16.msra.mxu0 0
  %3610 = vmatprep.subr.bf16.mxu0 0
  %3611 = vmatpush1.bf16.msra.mxu0 0
  %3612 = vmatprep.subr.bf16.mxu0 0
  %3613 = vmatpush1.bf16.msra.mxu0 0
  %3614 = vmatprep.subr.bf16.mxu0 0
  %3615 = vmatpush1.bf16.msra.mxu0 0
  %3616 = vmatprep.subr.bf16.mxu0 0
  %3617 = vmatpush1.bf16.msra.mxu0 0
  %3618 = vmatprep.subr.bf16.mxu0 0
  %3619 = vmatpush1.bf16.msra.mxu0 0
  %3620 = vmatprep.subr.bf16.mxu0 0
  %3621 = vmatpush1.bf16.msra.mxu0 0
  %3622 = vmatprep.subr.bf16.mxu0 0
  %3623 = vmatpush1.bf16.msra.mxu0 0
  %3624 = vmatprep.subr.bf16.mxu0 0
  %3625 = vmatpush1.bf16.msra.mxu0 0
  %3626 = vmatprep.mubr.bf16.mxu0 0
  %3627 = vmatmul.mubr.bf16.gmra.mrb[0].mxu0 %v3592
  %v3628 = vpop.f32.mrb[0].mxu0
  %v3629 = vadd.f32 %v3577, %v3628
  %v3630 = vpop.f32.mrb[0].mxu0
  %v3631 = vpop.f32.mrb[0].mxu0
  %v3632 = vadd.f32 %v3577, %v3631
  %v3633 = vpop.f32.mrb[0].mxu0
  %3634 = vdwg.mxu0
  %v3635 = vmul.f32 %v3629, 0.5
  %v3636 = vmul.f32 %v3632, 0.5
  %v3637 = vmul.f32 %v3629, %v3629
  %v3638 = vmul.f32 %v3632, %v3632
  %v3639 = vmul.f32 %v3637, %v3629
  %v3640 = vmul.f32 %v3638, %v3632
  %v3641 = vmul.f32 %v3639, 0.044715
  %v3642 = vmul.f32 %v3640, 0.044715
  %v3643 = vadd.f32 %v3629, %v3641
  %v3644 = vadd.f32 %v3632, %v3642
  %v3645 = vmul.f32 %v3643, 0.7978846
  %v3646 = vmul.f32 %v3644, 0.7978846
  %v3647 = vtanh.pop %v3645
  %v3648 = vtanh.pop %v3646
  %v3649 = vadd.f32 %v3647, 1.0
  %v3650 = vadd.f32 %v3648, 1.0
  %v3651 = vmul.f32 %v3635, %v3649
  %v3652 = vmul.f32 %v3636, %v3650
  %v3653 = vpack.c.bf16 %v3652, %v3651
  %v3655 = vlaneseq
  %v3656 = vshrl.u32 %v3655, 7
  %v3657 = vsub.s32 0, %v3656
  %v3658 = vrot.slane %v2335, %v3657
  %v3668 = vunpack.c.l.b16 %v2326
  %v3669 = vunpack.c.l.b16 %v2327
  %v3670 = vunpack.c.l.b16 %v2328
  %v3671 = vunpack.c.l.b16 %v2329
  %v3672 = vunpack.c.l.b16 %v2330
  %v3673 = vunpack.c.l.b16 %v2331
  %v3674 = vunpack.c.l.b16 %v2332
  %v3675 = vunpack.c.l.b16 %v2333
  %v3676 = vpack.c.b16 %v3669, %v3668
  %v3677 = vpack.c.b16 %v3671, %v3670
  %v3678 = vpack.c.b16 %v3673, %v3672
  %v3679 = vpack.c.b16 %v3675, %v3674
  %v3685 = vsel %vm806, %v3653, 0
  %3687 = vmatprep.subr.bf16.mxu0 0
  %3688 = vmatpush1.bf16.msra.mxu0 %v3676
  %3689 = vmatprep.subr.bf16.mxu0 0
  %3690 = vmatpush1.bf16.msra.mxu0 %v3677
  %3691 = vmatprep.subr.bf16.mxu0 0
  %3692 = vmatpush1.bf16.msra.mxu0 %v3678
  %3693 = vmatprep.subr.bf16.mxu0 0
  %3694 = vmatpush1.bf16.msra.mxu0 %v3679
  %3695 = vmatprep.subr.bf16.mxu0 0
  %3696 = vmatpush1.bf16.msra.mxu0 0
  %3697 = vmatprep.subr.bf16.mxu0 0
  %3698 = vmatpush1.bf16.msra.mxu0 0
  %3699 = vmatprep.subr.bf16.mxu0 0
  %3700 = vmatpush1.bf16.msra.mxu0 0
  %3701 = vmatprep.subr.bf16.mxu0 0
  %3702 = vmatpush1.bf16.msra.mxu0 0
  %3703 = vmatprep.subr.bf16.mxu0 0
  %3704 = vmatpush1.bf16.msra.mxu0 0
  %3705 = vmatprep.subr.bf16.mxu0 0
  %3706 = vmatpush1.bf16.msra.mxu0 0
  %3707 = vmatprep.subr.bf16.mxu0 0
  %3708 = vmatpush1.bf16.msra.mxu0 0
  %3709 = vmatprep.subr.bf16.mxu0 0
  %3710 = vmatpush1.bf16.msra.mxu0 0
  %3711 = vmatprep.subr.bf16.mxu0 0
  %3712 = vmatpush1.bf16.msra.mxu0 0
  %3713 = vmatprep.subr.bf16.mxu0 0
  %3714 = vmatpush1.bf16.msra.mxu0 0
  %3715 = vmatprep.subr.bf16.mxu0 0
  %3716 = vmatpush1.bf16.msra.mxu0 0
  %3717 = vmatprep.subr.bf16.mxu0 0
  %3718 = vmatpush1.bf16.msra.mxu0 0
  %3719 = vmatprep.mubr.bf16.mxu0 0
  %3720 = vmatmul.mubr.bf16.gmra.mrb[0].mxu0 %v3685
  %v3721 = vpop.f32.mrb[0].mxu0
  %v3722 = vadd.f32 %v3658, %v3721
  %v3723 = vpop.f32.mrb[0].mxu0
  %v3724 = vpop.f32.mrb[0].mxu0
  %v3725 = vadd.f32 %v3658, %v3724
  %v3726 = vpop.f32.mrb[0].mxu0
  %3727 = vdwg.mxu0
  %v3728 = vadd.f32 %v3722, %v3528
  %v3729 = vadd.f32 %v3725, %v3529
  %3730 = vst.msk [vmem:[%s61] sm:$0xff] %vm190, %v3728
  %3731 = vst.msk [vmem:[%s61 + $0x8] sm:$0xff] %vm190, %v3729
  // Predicated region
  $region122: #{perceiver_block_forward.1} parent=0 // pred_check
    _
  $region123: #{perceiver_block_forward.1} parent=0 // pred_check_branch
    %3733 = sbr.rel (0) target = $region125
  $region124: #{perceiver_block_forward.1} parent=0 // pred_region
    _
  $region125: #{perceiver_block_forward.1} parent=0 // pred_fallthru
    _
  // Predicated region
  $region126: #{perceiver_block_forward.1} parent=0 // pred_check
    _
  $region127: #{perceiver_block_forward.1} parent=0 // pred_check_branch
    %3735 = sbr.rel (0) target = $region129
  $region128: #{perceiver_block_forward.1} parent=0 // pred_region
    _
  $region129: #{perceiver_block_forward.1} parent=0 // pred_fallthru
    _

</llo_original>
